<compile_context>
chip_gen: v7x
topology: tpu7x:2x2x1
jax: 0.10.0
libtpu: 0.0.40
codegen_flags: <defaults>
</compile_context>

<pallas_src>
import jax
import jax.numpy as jnp
import numpy as np
from jax import lax
from jax.experimental import pallas as pl
from jax.experimental.pallas import tpu as pltpu


# ----------------------------------------------------------------------------- kernel ---
def _conv_gap_kernel(x_ref, w1_ref, b1_ref, w2_ref, b2_ref, wp_ref, bf_ref,
                     out_ref, xp1_ref, xp2_ref):
    f32 = jnp.float32
    Hp2, Bt, K1 = xp1_ref.shape          # (H+2, Bt, W*Cin)
    H = Hp2 - 2
    N1 = w1_ref.shape[-1]                # W*C1
    N2 = w2_ref.shape[-1]                # W*C2
    HB = H * Bt

    # ---- conv1: 3x3, padding 1 ----------------------------------------------------------
    # Zero only the two H-halo rows (the interior is fully overwritten below).  The zero
    # padding along W is baked into the banded weights, so no W halo is materialised.
    xp1_ref[0, :, :] = jnp.zeros((Bt, K1), f32)
    xp1_ref[H + 1, :, :] = jnp.zeros((Bt, K1), f32)
    xp1_ref[1:H + 1, :, :] = x_ref[...]

    # One banded matmul per kernel row dy; the MXU accumulates over the (W*Cin)-deep
    # contraction, so there is no per-tap VMEM accumulator read-modify-write.
    acc1 = jnp.dot(xp1_ref[0:H, :, :].reshape(HB, K1), w1_ref[0],
                   preferred_element_type=f32)
    acc1 = acc1 + jnp.dot(xp1_ref[1:H + 1, :, :].reshape(HB, K1), w1_ref[1],
                          preferred_element_type=f32)
    acc1 = acc1 + jnp.dot(xp1_ref[2:H + 2, :, :].reshape(HB, K1), w1_ref[2],
                          preferred_element_type=f32)
    y1 = jnp.maximum(acc1 + b1_ref[...], 0.0)            # (H*Bt, W*C1), lane-dense

    # ---- conv2: 3x3, padding 1 ----------------------------------------------------------
    xp2_ref[0, :, :] = jnp.zeros((Bt, N1), f32)
    xp2_ref[H + 1, :, :] = jnp.zeros((Bt, N1), f32)
    xp2_ref[1:H + 1, :, :] = y1.reshape(H, Bt, N1)

    acc2 = jnp.dot(xp2_ref[0:H, :, :].reshape(HB, N1), w2_ref[0],
                   preferred_element_type=f32)
    acc2 = acc2 + jnp.dot(xp2_ref[1:H + 1, :, :].reshape(HB, N1), w2_ref[1],
                          preferred_element_type=f32)
    acc2 = acc2 + jnp.dot(xp2_ref[2:H + 2, :, :].reshape(HB, N1), w2_ref[2],
                          preferred_element_type=f32)
    y2 = jnp.maximum(acc2 + b2_ref[...], 0.0)            # (H*Bt, W*C2), lane-dense

    # ---- global average pool + FC, folded into a single matmul ---------------------------
    # pooled @ W_fc == (sum_{h,w} y2 / (H*W)) @ W_fc == (sum_h rows) @ P
    # with P[w*C2 + c, o] = W_fc[c, o] / (H*W) precomputed host-side.
    rows = jnp.sum(y2.reshape(H, Bt, N2), axis=0)        # (Bt, W*C2)
    out_ref[...] = (jnp.dot(rows, wp_ref[...], preferred_element_type=f32)
                    + bf_ref[...])                        # (Bt, 128) lane-dense store


# ------------------------------------------------------------------------ weight packing -
def _banded_conv_weights(w_khkwcico, width):
    """(3,3,Cin,Cout) padding-1 conv kernel -> (3, width*Cin, width*Cout) band matrices.

    band[kh, w_in*Cin + ci, w_out*Cout + co] = w[kh, kw, ci, co] with kw = w_in - w_out + 1
    (zero outside 0..2).  This folds the stride-1 kw taps AND the zero padding along W into
    an ordinary matmul over the lane-flattened (W*Cin) axis.
    """
    w = np.asarray(w_khkwcico, np.float32)
    kh_n, kw_n, cin, cout = w.shape
    band = np.zeros((kh_n, width * cin, width * cout), np.float32)
    for kh in range(kh_n):
        for w_out in range(width):
            for kw in range(kw_n):
                w_in = w_out + kw - 1
                if 0 <= w_in < width:
                    band[kh,
                         w_in * cin:(w_in + 1) * cin,
                         w_out * cout:(w_out + 1) * cout] = w[kh, kw]
    return jnp.asarray(band)


def pack_params(params, *, height, width):
    """One-time repack of the PyTorch-style weights into the kernel's banded layout."""
    c2, out_dim = params["wf"].shape
    return {
        "w1b": _banded_conv_weights(params["w1"], width),
        "b1t": jnp.tile(params["b1"].reshape(1, -1), (1, width)),
        "w2b": _banded_conv_weights(params["w2"], width),
        "b2t": jnp.tile(params["b2"].reshape(1, -1), (1, width)),
        # Global-avg-pool folded into the FC weights; rows are (w, c2)-major, /= H*W exact.
        "wp": jnp.tile(params["wf"], (width, 1)) / float(height * width),
        "bf": params["bf"].reshape(1, out_dim),
    }


# ----------------------------------------------------------------------------- wrapper ---
def _round_up(x, m):
    return ((x + m - 1) // m) * m


def _default_block_b(batch):
    # 2 TensorCores per chip (v7x; v4/v5p megacore) want >= 2 "parallel" grid steps;
    # single-TC chips (v5e / v6e) prefer one big block (less fixed per-step overhead).
    try:
        kind = jax.devices()[0].device_kind.lower()
    except Exception:
        kind = ""
    two_tc = any(tag in kind for tag in ("v7", "7x", "v4", "v5p"))
    if two_tc and batch >= 16:
        return batch // 2
    return batch


def conv_gap_forward(x_nchw, packed, *, block_b=None):
    B, Cin, H, W = x_nchw.shape
    K1 = W * Cin
    N1 = packed["w1b"].shape[-1]     # W*C1
    N2 = packed["w2b"].shape[-1]     # W*C2
    out_dim = packed["bf"].shape[-1]

    if block_b is None:
        block_b = _default_block_b(B)
    Bt = _round_up(max(1, min(block_b, B)), 8)       # sublane-aligned batch block
    Bp = _round_up(B, Bt)

    x = x_nchw
    if Bp != B:
        x = jnp.concatenate([x, jnp.zeros((Bp - B, Cin, H, W), x.dtype)], axis=0)

    # NCHW -> (H, B, W*Cin): lane dim is W*Cin (dense), sublanes are the batch block.
    # allow_input_fusion below lets XLA fuse this relayout into the pallas_call operand.
    x3d = jnp.transpose(x, (2, 0, 3, 1)).reshape(H, Bp, K1)

    weights = [packed["w1b"], packed["b1t"], packed["w2b"], packed["b2t"],
               packed["wp"], packed["bf"]]

    def _full_spec(arr):
        zero = (0,) * arr.ndim
        return pl.BlockSpec(arr.shape, lambda i, z=zero: z)

    in_specs = [pl.BlockSpec((H, Bt, K1), lambda i: (0, i, 0))]
    in_specs += [_full_spec(w) for w in weights]
    out_spec = pl.BlockSpec((Bt, out_dim), lambda i: (i, 0))

    flops = 2 * H * Bp * 3 * (K1 * N1 + N1 * N2) + 2 * Bp * N2 * out_dim
    bytes_accessed = 4 * (int(x3d.size) + sum(int(w.size) for w in weights)
                          + Bp * out_dim)

    out = pl.pallas_call(
        _conv_gap_kernel,
        out_shape=jax.ShapeDtypeStruct((Bp, out_dim), jnp.float32),
        grid=(Bp // Bt,),
        in_specs=in_specs,
        out_specs=out_spec,
        scratch_shapes=[
            pltpu.VMEM((H + 2, Bt, K1), jnp.float32),   # H-padded input rows
            pltpu.VMEM((H + 2, Bt, N1), jnp.float32),   # H-padded conv1 output rows
        ],
        compiler_params=pltpu.CompilerParams(
            dimension_semantics=("parallel",),
            allow_input_fusion=[True] + [False] * len(weights)),
        cost_estimate=pl.CostEstimate(flops=flops, transcendentals=0,
                                      bytes_accessed=bytes_accessed),
    )(x3d, *weights)
    return out[:B]


# --------------------------------------------------------------------------- reference ---
def _reference(x_nchw, p):
    """Pure-JAX reference (eval semantics, global AVG pool)."""
    w1 = jnp.transpose(p["w1"], (3, 2, 0, 1))   # (C1, Cin, 3, 3)
    w2 = jnp.transpose(p["w2"], (3, 2, 0, 1))   # (C2, C1, 3, 3)
    y = lax.conv_general_dilated(x_nchw, w1, (1, 1), ((1, 1), (1, 1)),
                                 dimension_numbers=("NCHW", "OIHW", "NCHW"))
    y = jax.nn.relu(y + p["b1"].reshape(1, -1, 1, 1))
    y = lax.conv_general_dilated(y, w2, (1, 1), ((1, 1), (1, 1)),
                                 dimension_numbers=("NCHW", "OIHW", "NCHW"))
    y = jax.nn.relu(y + p["b2"].reshape(1, -1, 1, 1))
    pooled = jnp.mean(y, axis=(2, 3))           # (B, C2)
    return pooled @ p["wf"] + p["bf"]


def _init_params(key, *, in_channels=5, c1=16, c2=32, out_dim=128):
    keys = jax.random.split(key, 6)
    f32 = jnp.float32

    def nrm(k, shape, scale):
        return jax.random.normal(k, shape, dtype=f32) * scale

    return {
        "w1": nrm(keys[0], (3, 3, in_channels, c1), 1.0 / np.sqrt(9 * in_channels)),
        "b1": nrm(keys[1], (1, c1), 0.05),
        "w2": nrm(keys[2], (3, 3, c1, c2), 1.0 / np.sqrt(9 * c1)),
        "b2": nrm(keys[3], (1, c2), 0.05),
        "wf": nrm(keys[4], (c2, out_dim), 1.0 / np.sqrt(c2)),
        "bf": nrm(keys[5], (1, out_dim), 0.05),
    }


if __name__ == "__main__":
    # Small shapes consistent with the module: input_channels=5, output_size=128.
    B, Cin, H, W = 16, 5, 16, 16
    out_dim = 128

    key = jax.random.PRNGKey(0)
    kx, kp = jax.random.split(key)
    x = jax.random.normal(kx, (B, Cin, H, W), dtype=jnp.float32)
    params = _init_params(kp, in_channels=Cin, c1=16, c2=32, out_dim=out_dim)
    packed = pack_params(params, height=H, width=W)      # one-time weight repack

    out = jax.block_until_ready(conv_gap_forward(x, packed))
    ref = jax.block_until_ready(_reference(x, params))

    assert out.shape == (B, out_dim), out.shape
    np.testing.assert_allclose(np.asarray(out), np.asarray(ref),
                               rtol=1e-4, atol=1e-4)
    print("KERNEL_OK")
</pallas_src>

<mosaic_0001>
module attributes {stable_mosaic.version = 11 : i64} {
  func.func @_conv_gap_kernel(%arg0: i32, %arg1: memref<16x16x80xf32, #tpu.memory_space<vmem>>, %arg2: memref<3x80x256xf32, #tpu.memory_space<vmem>>, %arg3: memref<1x256xf32, #tpu.memory_space<vmem>>, %arg4: memref<3x256x512xf32, #tpu.memory_space<vmem>>, %arg5: memref<1x512xf32, #tpu.memory_space<vmem>>, %arg6: memref<512x128xf32, #tpu.memory_space<vmem>>, %arg7: memref<1x128xf32, #tpu.memory_space<vmem>>, %arg8: memref<16x128xf32, #tpu.memory_space<vmem>>, %arg9: memref<18x16x80xf32, #tpu.memory_space<vmem>>, %arg10: memref<18x16x256xf32, #tpu.memory_space<vmem>>) attributes {dimension_semantics = [#tpu.dimension_semantics<parallel>], iteration_bounds = array<i64: 1>, scalar_prefetch = 0 : i64, scratch_operands = 2 : i64, tpu.core_type = #tpu.core_type<tc>, window_params = [{transform_indices = @transform_0, window_bounds = array<i64: 16, 16, 80>}, {pipeline_mode = #tpu.pipeline_mode<synchronous>, transform_indices = @transform_1, window_bounds = array<i64: 3, 80, 256>}, {pipeline_mode = #tpu.pipeline_mode<synchronous>, transform_indices = @transform_2, window_bounds = array<i64: 1, 256>}, {pipeline_mode = #tpu.pipeline_mode<synchronous>, transform_indices = @transform_3, window_bounds = array<i64: 3, 256, 512>}, {pipeline_mode = #tpu.pipeline_mode<synchronous>, transform_indices = @transform_4, window_bounds = array<i64: 1, 512>}, {pipeline_mode = #tpu.pipeline_mode<synchronous>, transform_indices = @transform_5, window_bounds = array<i64: 512, 128>}, {pipeline_mode = #tpu.pipeline_mode<synchronous>, transform_indices = @transform_6, window_bounds = array<i64: 1, 128>}, {transform_indices = @transform_7, window_bounds = array<i64: 16, 128>}]} {
    %cst = arith.constant 0.000000e+00 : f32
    %0 = vector.broadcast %cst : f32 to vector<16x80xf32>
    %c0 = arith.constant 0 : index
    %c0_0 = arith.constant 0 : index
    %c0_1 = arith.constant 0 : index
    %1 = vector.load %arg9[%c0, %c0_0, %c0_1] : memref<18x16x80xf32, #tpu.memory_space<vmem>>, vector<1x16x80xf32>
    %2 = vector.shape_cast %1 : vector<1x16x80xf32> to vector<16x80xf32>
    %3 = vector.shape_cast %0 : vector<16x80xf32> to vector<1x16x80xf32>
    tpu.vector_store %arg9[%c0, %c0_0, %c0_1], %3 {strides = array<i32>} : memref<18x16x80xf32, #tpu.memory_space<vmem>>, vector<1x16x80xf32>,
    %cst_2 = arith.constant 0.000000e+00 : f32
    %4 = vector.broadcast %cst_2 : f32 to vector<16x80xf32>
    %c17 = arith.constant 17 : index
    %c0_3 = arith.constant 0 : index
    %c0_4 = arith.constant 0 : index
    %5 = vector.load %arg9[%c17, %c0_3, %c0_4] : memref<18x16x80xf32, #tpu.memory_space<vmem>>, vector<1x16x80xf32>
    %6 = vector.shape_cast %5 : vector<1x16x80xf32> to vector<16x80xf32>
    %7 = vector.shape_cast %4 : vector<16x80xf32> to vector<1x16x80xf32>
    tpu.vector_store %arg9[%c17, %c0_3, %c0_4], %7 {strides = array<i32>} : memref<18x16x80xf32, #tpu.memory_space<vmem>>, vector<1x16x80xf32>,
    %c0_5 = arith.constant 0 : index
    %c0_6 = arith.constant 0 : index
    %c0_7 = arith.constant 0 : index
    %8 = vector.load %arg1[%c0_5, %c0_6, %c0_7] : memref<16x16x80xf32, #tpu.memory_space<vmem>>, vector<16x16x80xf32>
    %c1 = arith.constant 1 : index
    %c0_8 = arith.constant 0 : index
    %c0_9 = arith.constant 0 : index
    %9 = vector.load %arg9[%c1, %c0_8, %c0_9] : memref<18x16x80xf32, #tpu.memory_space<vmem>>, vector<16x16x80xf32>
    tpu.vector_store %arg9[%c1, %c0_8, %c0_9], %8 {strides = array<i32>} : memref<18x16x80xf32, #tpu.memory_space<vmem>>, vector<16x16x80xf32>,
    %c0_10 = arith.constant 0 : index
    %c0_11 = arith.constant 0 : index
    %c0_12 = arith.constant 0 : index
    %10 = vector.load %arg9[%c0_10, %c0_11, %c0_12] : memref<18x16x80xf32, #tpu.memory_space<vmem>>, vector<16x16x80xf32>
    %11 = vector.shape_cast %10 : vector<16x16x80xf32> to vector<256x80xf32>
    %c0_13 = arith.constant 0 : index
    %c0_14 = arith.constant 0 : index
    %c0_15 = arith.constant 0 : index
    %12 = vector.load %arg2[%c0_13, %c0_14, %c0_15] : memref<3x80x256xf32, #tpu.memory_space<vmem>>, vector<1x80x256xf32>
    %13 = vector.shape_cast %12 : vector<1x80x256xf32> to vector<80x256xf32>
    %cst_16 = arith.constant dense<0.000000e+00> : vector<256x256xf32>
    %14 = tpu.matmul %11, %13, %cst_16 {dimension_numbers = #tpu.dot_dimension_numbers<[1], [0], [0], [1], [0, 0, 1, 1], [], []>} : vector<256x80xf32>, vector<80x256xf32>, vector<256x256xf32> -> vector<256x256xf32>
    %c1_17 = arith.constant 1 : index
    %c0_18 = arith.constant 0 : index
    %c0_19 = arith.constant 0 : index
    %15 = vector.load %arg9[%c1_17, %c0_18, %c0_19] : memref<18x16x80xf32, #tpu.memory_space<vmem>>, vector<16x16x80xf32>
    %16 = vector.shape_cast %15 : vector<16x16x80xf32> to vector<256x80xf32>
    %c1_20 = arith.constant 1 : index
    %c0_21 = arith.constant 0 : index
    %c0_22 = arith.constant 0 : index
    %17 = vector.load %arg2[%c1_20, %c0_21, %c0_22] : memref<3x80x256xf32, #tpu.memory_space<vmem>>, vector<1x80x256xf32>
    %18 = vector.shape_cast %17 : vector<1x80x256xf32> to vector<80x256xf32>
    %cst_23 = arith.constant dense<0.000000e+00> : vector<256x256xf32>
    %19 = tpu.matmul %16, %18, %cst_23 {dimension_numbers = #tpu.dot_dimension_numbers<[1], [0], [0], [1], [0, 0, 1, 1], [], []>} : vector<256x80xf32>, vector<80x256xf32>, vector<256x256xf32> -> vector<256x256xf32>
    %20 = arith.addf %14, %19 : vector<256x256xf32>
    %c2 = arith.constant 2 : index
    %c0_24 = arith.constant 0 : index
    %c0_25 = arith.constant 0 : index
    %21 = vector.load %arg9[%c2, %c0_24, %c0_25] : memref<18x16x80xf32, #tpu.memory_space<vmem>>, vector<16x16x80xf32>
    %22 = vector.shape_cast %21 : vector<16x16x80xf32> to vector<256x80xf32>
    %c2_26 = arith.constant 2 : index
    %c0_27 = arith.constant 0 : index
    %c0_28 = arith.constant 0 : index
    %23 = vector.load %arg2[%c2_26, %c0_27, %c0_28] : memref<3x80x256xf32, #tpu.memory_space<vmem>>, vector<1x80x256xf32>
    %24 = vector.shape_cast %23 : vector<1x80x256xf32> to vector<80x256xf32>
    %cst_29 = arith.constant dense<0.000000e+00> : vector<256x256xf32>
    %25 = tpu.matmul %22, %24, %cst_29 {dimension_numbers = #tpu.dot_dimension_numbers<[1], [0], [0], [1], [0, 0, 1, 1], [], []>} : vector<256x80xf32>, vector<80x256xf32>, vector<256x256xf32> -> vector<256x256xf32>
    %26 = arith.addf %20, %25 : vector<256x256xf32>
    %c0_30 = arith.constant 0 : index
    %c0_31 = arith.constant 0 : index
    %27 = vector.load %arg3[%c0_30, %c0_31] : memref<1x256xf32, #tpu.memory_space<vmem>>, vector<1x256xf32>
    %28 = vector.broadcast %27 : vector<1x256xf32> to vector<256x256xf32>
    %29 = arith.addf %26, %28 : vector<256x256xf32>
    %cst_32 = arith.constant 0.000000e+00 : f32
    %30 = vector.broadcast %cst_32 : f32 to vector<256x256xf32>
    %31 = arith.maximumf %29, %30 : vector<256x256xf32>
    %cst_33 = arith.constant 0.000000e+00 : f32
    %32 = vector.broadcast %cst_33 : f32 to vector<16x256xf32>
    %c0_34 = arith.constant 0 : index
    %c0_35 = arith.constant 0 : index
    %c0_36 = arith.constant 0 : index
    %33 = vector.load %arg10[%c0_34, %c0_35, %c0_36] : memref<18x16x256xf32, #tpu.memory_space<vmem>>, vector<1x16x256xf32>
    %34 = vector.shape_cast %33 : vector<1x16x256xf32> to vector<16x256xf32>
    %35 = vector.shape_cast %32 : vector<16x256xf32> to vector<1x16x256xf32>
    tpu.vector_store %arg10[%c0_34, %c0_35, %c0_36], %35 {strides = array<i32>} : memref<18x16x256xf32, #tpu.memory_space<vmem>>, vector<1x16x256xf32>,
    %cst_37 = arith.constant 0.000000e+00 : f32
    %36 = vector.broadcast %cst_37 : f32 to vector<16x256xf32>
    %c17_38 = arith.constant 17 : index
    %c0_39 = arith.constant 0 : index
    %c0_40 = arith.constant 0 : index
    %37 = vector.load %arg10[%c17_38, %c0_39, %c0_40] : memref<18x16x256xf32, #tpu.memory_space<vmem>>, vector<1x16x256xf32>
    %38 = vector.shape_cast %37 : vector<1x16x256xf32> to vector<16x256xf32>
    %39 = vector.shape_cast %36 : vector<16x256xf32> to vector<1x16x256xf32>
    tpu.vector_store %arg10[%c17_38, %c0_39, %c0_40], %39 {strides = array<i32>} : memref<18x16x256xf32, #tpu.memory_space<vmem>>, vector<1x16x256xf32>,
    %40 = vector.shape_cast %31 : vector<256x256xf32> to vector<16x16x256xf32>
    %c1_41 = arith.constant 1 : index
    %c0_42 = arith.constant 0 : index
    %c0_43 = arith.constant 0 : index
    %41 = vector.load %arg10[%c1_41, %c0_42, %c0_43] : memref<18x16x256xf32, #tpu.memory_space<vmem>>, vector<16x16x256xf32>
    tpu.vector_store %arg10[%c1_41, %c0_42, %c0_43], %40 {strides = array<i32>} : memref<18x16x256xf32, #tpu.memory_space<vmem>>, vector<16x16x256xf32>,
    %c0_44 = arith.constant 0 : index
    %c0_45 = arith.constant 0 : index
    %c0_46 = arith.constant 0 : index
    %42 = vector.load %arg10[%c0_44, %c0_45, %c0_46] : memref<18x16x256xf32, #tpu.memory_space<vmem>>, vector<16x16x256xf32>
    %43 = vector.shape_cast %42 : vector<16x16x256xf32> to vector<256x256xf32>
    %c0_47 = arith.constant 0 : index
    %c0_48 = arith.constant 0 : index
    %c0_49 = arith.constant 0 : index
    %44 = vector.load %arg4[%c0_47, %c0_48, %c0_49] : memref<3x256x512xf32, #tpu.memory_space<vmem>>, vector<1x256x512xf32>
    %45 = vector.shape_cast %44 : vector<1x256x512xf32> to vector<256x512xf32>
    %cst_50 = arith.constant dense<0.000000e+00> : vector<256x512xf32>
    %46 = tpu.matmul %43, %45, %cst_50 {dimension_numbers = #tpu.dot_dimension_numbers<[1], [0], [0], [1], [0, 0, 1, 1], [], []>} : vector<256x256xf32>, vector<256x512xf32>, vector<256x512xf32> -> vector<256x512xf32>
    %c1_51 = arith.constant 1 : index
    %c0_52 = arith.constant 0 : index
    %c0_53 = arith.constant 0 : index
    %47 = vector.load %arg10[%c1_51, %c0_52, %c0_53] : memref<18x16x256xf32, #tpu.memory_space<vmem>>, vector<16x16x256xf32>
    %48 = vector.shape_cast %47 : vector<16x16x256xf32> to vector<256x256xf32>
    %c1_54 = arith.constant 1 : index
    %c0_55 = arith.constant 0 : index
    %c0_56 = arith.constant 0 : index
    %49 = vector.load %arg4[%c1_54, %c0_55, %c0_56] : memref<3x256x512xf32, #tpu.memory_space<vmem>>, vector<1x256x512xf32>
    %50 = vector.shape_cast %49 : vector<1x256x512xf32> to vector<256x512xf32>
    %cst_57 = arith.constant dense<0.000000e+00> : vector<256x512xf32>
    %51 = tpu.matmul %48, %50, %cst_57 {dimension_numbers = #tpu.dot_dimension_numbers<[1], [0], [0], [1], [0, 0, 1, 1], [], []>} : vector<256x256xf32>, vector<256x512xf32>, vector<256x512xf32> -> vector<256x512xf32>
    %52 = arith.addf %46, %51 : vector<256x512xf32>
    %c2_58 = arith.constant 2 : index
    %c0_59 = arith.constant 0 : index
    %c0_60 = arith.constant 0 : index
    %53 = vector.load %arg10[%c2_58, %c0_59, %c0_60] : memref<18x16x256xf32, #tpu.memory_space<vmem>>, vector<16x16x256xf32>
    %54 = vector.shape_cast %53 : vector<16x16x256xf32> to vector<256x256xf32>
    %c2_61 = arith.constant 2 : index
    %c0_62 = arith.constant 0 : index
    %c0_63 = arith.constant 0 : index
    %55 = vector.load %arg4[%c2_61, %c0_62, %c0_63] : memref<3x256x512xf32, #tpu.memory_space<vmem>>, vector<1x256x512xf32>
    %56 = vector.shape_cast %55 : vector<1x256x512xf32> to vector<256x512xf32>
    %cst_64 = arith.constant dense<0.000000e+00> : vector<256x512xf32>
    %57 = tpu.matmul %54, %56, %cst_64 {dimension_numbers = #tpu.dot_dimension_numbers<[1], [0], [0], [1], [0, 0, 1, 1], [], []>} : vector<256x256xf32>, vector<256x512xf32>, vector<256x512xf32> -> vector<256x512xf32>
    %58 = arith.addf %52, %57 : vector<256x512xf32>
    %c0_65 = arith.constant 0 : index
    %c0_66 = arith.constant 0 : index
    %59 = vector.load %arg5[%c0_65, %c0_66] : memref<1x512xf32, #tpu.memory_space<vmem>>, vector<1x512xf32>
    %60 = vector.broadcast %59 : vector<1x512xf32> to vector<256x512xf32>
    %61 = arith.addf %58, %60 : vector<256x512xf32>
    %cst_67 = arith.constant 0.000000e+00 : f32
    %62 = vector.broadcast %cst_67 : f32 to vector<256x512xf32>
    %63 = arith.maximumf %61, %62 : vector<256x512xf32>
    %64 = vector.shape_cast %63 : vector<256x512xf32> to vector<16x16x512xf32>
    %cst_68 = arith.constant dense<0.000000e+00> : vector<16x512xf32>
    %65 = vector.multi_reduction <add>, %64, %cst_68 [0] : vector<16x16x512xf32> to vector<16x512xf32>
    %c0_69 = arith.constant 0 : index
    %c0_70 = arith.constant 0 : index
    %66 = vector.load %arg6[%c0_69, %c0_70] : memref<512x128xf32, #tpu.memory_space<vmem>>, vector<512x128xf32>
    %cst_71 = arith.constant dense<0.000000e+00> : vector<16x128xf32>
    %67 = tpu.matmul %65, %66, %cst_71 {dimension_numbers = #tpu.dot_dimension_numbers<[1], [0], [0], [1], [0, 0, 1, 1], [], []>} : vector<16x512xf32>, vector<512x128xf32>, vector<16x128xf32> -> vector<16x128xf32>
    %c0_72 = arith.constant 0 : index
    %c0_73 = arith.constant 0 : index
    %68 = vector.load %arg7[%c0_72, %c0_73] : memref<1x128xf32, #tpu.memory_space<vmem>>, vector<1x128xf32>
    %69 = vector.broadcast %68 : vector<1x128xf32> to vector<16x128xf32>
    %70 = arith.addf %67, %69 : vector<16x128xf32>
    %c0_74 = arith.constant 0 : index
    %c0_75 = arith.constant 0 : index
    %71 = vector.load %arg8[%c0_74, %c0_75] : memref<16x128xf32, #tpu.memory_space<vmem>>, vector<16x128xf32>
    tpu.vector_store %arg8[%c0_74, %c0_75], %70 {strides = array<i32>} : memref<16x128xf32, #tpu.memory_space<vmem>>, vector<16x128xf32>,
    return
  }
  func.func @transform_0(%arg0: i32) -> (i32, i32, i32) {
    %c0_i32 = arith.constant 0 : i32
    %c0_i32_0 = arith.constant 0 : i32
    %c0_i32_1 = arith.constant 0 : i32
    return %c0_i32, %arg0, %c0_i32_0 : i32, i32, i32
  }
  func.func @transform_1(%arg0: i32) -> (i32, i32, i32) {
    %c0_i32 = arith.constant 0 : i32
    %c0_i32_0 = arith.constant 0 : i32
    %c0_i32_1 = arith.constant 0 : i32
    %c0_i32_2 = arith.constant 0 : i32
    return %c0_i32, %c0_i32_0, %c0_i32_1 : i32, i32, i32
  }
  func.func @transform_2(%arg0: i32) -> (i32, i32) {
    %c0_i32 = arith.constant 0 : i32
    %c0_i32_0 = arith.constant 0 : i32
    %c0_i32_1 = arith.constant 0 : i32
    return %c0_i32, %c0_i32_0 : i32, i32
  }
  func.func @transform_3(%arg0: i32) -> (i32, i32, i32) {
    %c0_i32 = arith.constant 0 : i32
    %c0_i32_0 = arith.constant 0 : i32
    %c0_i32_1 = arith.constant 0 : i32
    %c0_i32_2 = arith.constant 0 : i32
    return %c0_i32, %c0_i32_0, %c0_i32_1 : i32, i32, i32
  }
  func.func @transform_4(%arg0: i32) -> (i32, i32) {
    %c0_i32 = arith.constant 0 : i32
    %c0_i32_0 = arith.constant 0 : i32
    %c0_i32_1 = arith.constant 0 : i32
    return %c0_i32, %c0_i32_0 : i32, i32
  }
  func.func @transform_5(%arg0: i32) -> (i32, i32) {
    %c0_i32 = arith.constant 0 : i32
    %c0_i32_0 = arith.constant 0 : i32
    %c0_i32_1 = arith.constant 0 : i32
    return %c0_i32, %c0_i32_0 : i32, i32
  }
  func.func @transform_6(%arg0: i32) -> (i32, i32) {
    %c0_i32 = arith.constant 0 : i32
    %c0_i32_0 = arith.constant 0 : i32
    %c0_i32_1 = arith.constant 0 : i32
    return %c0_i32, %c0_i32_0 : i32, i32
  }
  func.func @transform_7(%arg0: i32) -> (i32, i32) {
    %c0_i32 = arith.constant 0 : i32
    %c0_i32_0 = arith.constant 0 : i32
    return %arg0, %c0_i32 : i32, i32
  }
}

</mosaic_0001>

<llo_original>
// kernel: tpu_custom_call.1
$region0: #{tpu_custom_call.1}
  #allocation0 [shape = 'u32[]', space=smem, size = 0x4, offset = 0x4, fixed_abs, tag = 'smem constant byte address 0x4 - core index']
  #allocation1 [shape = 'u32[144,128]{1,0:T(1,128)}', space=vmem, size = 0x12000, scoped, tag = 'internal scratch']
  #allocation2 [shape = 'f32[18,16,80]{2,1,0:T(8,128)}', space=vmem, size = 0x24000, scoped, tag = 'scratch operand']
  #allocation3 [shape = 'f32[18,16,256]{2,1,0:T(8,128)}', space=vmem, size = 0x48000, scoped, tag = 'scratch operand']
  %s0 = inlined_call_operand.hbm [shape: f32[16,16,80], index: 0, kind: input, shape index: {}]
  %s1 = inlined_call_operand.hbm [shape: f32[3,80,256], index: 1, kind: input, shape index: {}]
  %s2 = inlined_call_operand.hbm [shape: f32[1,256], index: 2, kind: input, shape index: {}]
  %s3 = inlined_call_operand.hbm [shape: f32[3,256,512], index: 3, kind: input, shape index: {}]
  %s4 = inlined_call_operand.hbm [shape: f32[1,512], index: 4, kind: input, shape index: {}]
  %s5 = inlined_call_operand.hbm [shape: f32[512,128], index: 5, kind: input, shape index: {}]
  %s6 = inlined_call_operand.hbm [shape: f32[1,128], index: 6, kind: input, shape index: {}]
  %s7 = inlined_call_operand.hbm [shape: f32[16,128], index: 7, kind: output, shape index: {}]
  %s8 = sld [smem:[#allocation0]]
  $region66: #{tpu_custom_call.1} parent=0
    _
  %s10 = ssub.s32 1, %s8
  %s11 = scalar_select 0, %s10, %s8
  $region1: #{tpu_custom_call.1} parent=0
    #allocation4 [shape = 'u8[131072]{0}', space=vmem, size = 0x20000, scoped, tag = 'input window, operand 0, single buffered']
    #allocation5 [shape = 's32[1]{0}', space=sflag, size = 0x4, scoped, tag = 'scoped memory for tpu_custom_call.1']
    #allocation6 [shape = 's32[1]{0}', space=sflag, size = 0x4, scoped, tag = 'scoped memory for tpu_custom_call.1']
    #allocation7 [shape = 'u8[245760]{0}', space=vmem, size = 0x3c000, scoped, tag = 'input window, operand 1, single buffered']
    #allocation8 [shape = 's32[1]{0}', space=sflag, size = 0x4, scoped, tag = 'scoped memory for tpu_custom_call.1']
    #allocation9 [shape = 'u8[1024]{0}', space=vmem, size = 0x400, scoped, tag = 'input window, operand 2, single buffered']
    #allocation10 [shape = 'u8[1572864]{0}', space=vmem, size = 0x180000, scoped, tag = 'input window, operand 3, single buffered']
    #allocation11 [shape = 's32[1]{0}', space=sflag, size = 0x4, scoped, tag = 'scoped memory for tpu_custom_call.1']
    #allocation12 [shape = 'u8[2048]{0}', space=vmem, size = 0x800, scoped, tag = 'input window, operand 4, single buffered']
    #allocation13 [shape = 'u8[262144]{0}', space=vmem, size = 0x40000, scoped, tag = 'input window, operand 5, single buffered']
    #allocation14 [shape = 's32[1]{0}', space=sflag, size = 0x4, scoped, tag = 'scoped memory for tpu_custom_call.1']
    #allocation15 [shape = 'u8[512]{0}', space=vmem, size = 0x400, scoped, tag = 'input window, operand 6, single buffered']
    #allocation16 [shape = 'u8[8192]{0}', space=vmem, size = 0x2000, scoped, tag = 'output window, operand 0, single buffered']
    %12 = vsyncpa [#allocation5], 0
    %13 = vsyncpa [#allocation8], 0
    %14 = vsyncpa [#allocation11], 0
    %15 = vsyncpa [#allocation14], 0
    %16 = vsyncpa [#allocation6], 0
    // Predicated region
    $region2: #{tpu_custom_call.1} parent=1 // pred_check
      _
    $region3: #{tpu_custom_call.1} parent=1 // pred_check_branch
      %18 = sbr.rel (0) target = $region5
    $region4: #{tpu_custom_call.1} parent=1 // pred_region
      %s20 = ssub.s32 4096, 4096
      %21 = vsyncadd [#allocation5], %s20
      %s22 = sshll.u32 [#allocation4], 4
      %s23 = int_to_ptr.vmem [resolvable:$true] %s22
      %28 = dma.hbm_to_vmem [thread:$0]  %s0, 4096, %s23, [#allocation5], 128, 128, 8
    $region5: #{tpu_custom_call.1} parent=1 // pred_fallthru
      _
    // Predicated region
    $region6: #{tpu_custom_call.1} parent=1 // pred_check
      _
    $region7: #{tpu_custom_call.1} parent=1 // pred_check_branch
      %30 = sbr.rel (0) target = $region9
    $region8: #{tpu_custom_call.1} parent=1 // pred_region
      %s32 = ssub.s32 7680, 7680
      %33 = vsyncadd [#allocation8], %s32
      %s34 = sshll.u32 [#allocation7], 4
      %s35 = int_to_ptr.vmem [resolvable:$true] %s34
      %40 = dma.hbm_to_vmem [thread:$0]  %s1, 7680, %s35, [#allocation8], 256, 256, 16
    $region9: #{tpu_custom_call.1} parent=1 // pred_fallthru
      _
    // Predicated region
    $region10: #{tpu_custom_call.1} parent=1 // pred_check
      _
    $region11: #{tpu_custom_call.1} parent=1 // pred_check_branch
      %42 = sbr.rel (0) target = $region13
    $region12: #{tpu_custom_call.1} parent=1 // pred_region
      %s44 = ssub.s32 32, 32
      %45 = vsyncadd [#allocation8], %s44
      %s47 = sshll.u32 [#allocation9], 4
      %s48 = int_to_ptr.vmem [resolvable:$true] %s47
      %50 = dma.hbm_to_vmem [thread:$0]  %s2, 32, %s48, [#allocation8]
    $region13: #{tpu_custom_call.1} parent=1 // pred_fallthru
      _
    // Predicated region
    $region14: #{tpu_custom_call.1} parent=1 // pred_check
      _
    $region15: #{tpu_custom_call.1} parent=1 // pred_check_branch
      %52 = sbr.rel (0) target = $region17
    $region16: #{tpu_custom_call.1} parent=1 // pred_region
      %s54 = ssub.s32 49152, 49152
      %55 = vsyncadd [#allocation11], %s54
      %s56 = sshll.u32 [#allocation10], 4
      %s57 = int_to_ptr.vmem [resolvable:$true] %s56
      %62 = dma.hbm_to_vmem [thread:$0]  %s3, 49152, %s57, [#allocation11], 512, 512, 32
    $region17: #{tpu_custom_call.1} parent=1 // pred_fallthru
      _
    // Predicated region
    $region18: #{tpu_custom_call.1} parent=1 // pred_check
      _
    $region19: #{tpu_custom_call.1} parent=1 // pred_check_branch
      %64 = sbr.rel (0) target = $region21
    $region20: #{tpu_custom_call.1} parent=1 // pred_region
      %s66 = ssub.s32 64, 64
      %67 = vsyncadd [#allocation11], %s66
      %s69 = sshll.u32 [#allocation12], 4
      %s70 = int_to_ptr.vmem [resolvable:$true] %s69
      %72 = dma.hbm_to_vmem [thread:$0]  %s4, 64, %s70, [#allocation11]
    $region21: #{tpu_custom_call.1} parent=1 // pred_fallthru
      _
    // Predicated region
    $region22: #{tpu_custom_call.1} parent=1 // pred_check
      _
    $region23: #{tpu_custom_call.1} parent=1 // pred_check_branch
      %74 = sbr.rel (0) target = $region25
    $region24: #{tpu_custom_call.1} parent=1 // pred_region
      %s76 = ssub.s32 8192, 8192
      %77 = vsyncadd [#allocation14], %s76
      %s78 = sshll.u32 [#allocation13], 4
      %s79 = int_to_ptr.vmem [resolvable:$true] %s78
      %84 = dma.hbm_to_vmem [thread:$0]  %s5, 8192, %s79, [#allocation14], 128, 128, 8
    $region25: #{tpu_custom_call.1} parent=1 // pred_fallthru
      _
    // Predicated region
    $region26: #{tpu_custom_call.1} parent=1 // pred_check
      _
    $region27: #{tpu_custom_call.1} parent=1 // pred_check_branch
      %86 = sbr.rel (0) target = $region29
    $region28: #{tpu_custom_call.1} parent=1 // pred_region
      %s88 = ssub.s32 16, 16
      %89 = vsyncadd [#allocation14], %s88
      %s91 = sshll.u32 [#allocation15], 4
      %s92 = int_to_ptr.vmem [resolvable:$true] %s91
      %94 = dma.hbm_to_vmem [thread:$0]  %s6, 16, %s92, [#allocation14]
    $region29: #{tpu_custom_call.1} parent=1 // pred_fallthru
      _
    // Predicated region
    $region30: #{tpu_custom_call.1} parent=1 // pred_check
      _
    $region31: #{tpu_custom_call.1} parent=1 // pred_check_branch
      %96 = sbr.rel (0) target = $region33
    $region32: #{tpu_custom_call.1} parent=1 // pred_region
      %97 = dma.done [#allocation5], 4096
    $region33: #{tpu_custom_call.1} parent=1 // pred_fallthru
      _
    // Predicated region
    $region34: #{tpu_custom_call.1} parent=1 // pred_check
      _
    $region35: #{tpu_custom_call.1} parent=1 // pred_check_branch
      %99 = sbr.rel (0) target = $region37
    $region36: #{tpu_custom_call.1} parent=1 // pred_region
      %100 = dma.done [#allocation8], 7680
    $region37: #{tpu_custom_call.1} parent=1 // pred_fallthru
      _
    // Predicated region
    $region38: #{tpu_custom_call.1} parent=1 // pred_check
      _
    $region39: #{tpu_custom_call.1} parent=1 // pred_check_branch
      %102 = sbr.rel (0) target = $region41
    $region40: #{tpu_custom_call.1} parent=1 // pred_region
      %103 = dma.done [#allocation8], 32
    $region41: #{tpu_custom_call.1} parent=1 // pred_fallthru
      _
    // Predicated region
    $region42: #{tpu_custom_call.1} parent=1 // pred_check
      _
    $region43: #{tpu_custom_call.1} parent=1 // pred_check_branch
      %105 = sbr.rel (0) target = $region45
    $region44: #{tpu_custom_call.1} parent=1 // pred_region
      %106 = dma.done [#allocation11], 49152
    $region45: #{tpu_custom_call.1} parent=1 // pred_fallthru
      _
    // Predicated region
    $region46: #{tpu_custom_call.1} parent=1 // pred_check
      _
    $region47: #{tpu_custom_call.1} parent=1 // pred_check_branch
      %108 = sbr.rel (0) target = $region49
    $region48: #{tpu_custom_call.1} parent=1 // pred_region
      %109 = dma.done [#allocation11], 64
    $region49: #{tpu_custom_call.1} parent=1 // pred_fallthru
      _
    // Predicated region
    $region50: #{tpu_custom_call.1} parent=1 // pred_check
      _
    $region51: #{tpu_custom_call.1} parent=1 // pred_check_branch
      %111 = sbr.rel (0) target = $region53
    $region52: #{tpu_custom_call.1} parent=1 // pred_region
      %112 = dma.done [#allocation14], 8192
    $region53: #{tpu_custom_call.1} parent=1 // pred_fallthru
      _
    // Predicated region
    $region54: #{tpu_custom_call.1} parent=1 // pred_check
      _
    $region55: #{tpu_custom_call.1} parent=1 // pred_check_branch
      %114 = sbr.rel (0) target = $region57
    $region56: #{tpu_custom_call.1} parent=1 // pred_region
      %115 = dma.done [#allocation14], 16
    $region57: #{tpu_custom_call.1} parent=1 // pred_fallthru
      _
    %vm116 = vcmask 654336
    %117 = vst.msk [vmem:[#allocation2] sm:$0xff] %vm116, 0.0
    %118 = vst.msk [vmem:[#allocation2 + $0x8] sm:$0xff] %vm116, 0.0
    %s119 = scalar_lea.vmem [#allocation2], 272
    %120 = vst.msk [vmem:[%s119] sm:$0xff] %vm116, 0.0
    %121 = vst.msk [vmem:[%s119 + $0x8] sm:$0xff] %vm116, 0.0
    %v122 = vld [vmem:[#allocation4] sm:$0xff]
    %v123 = vld [vmem:[#allocation4 + $0x8] sm:$0xff]
    %v124 = vld [vmem:[#allocation4 + $0x10] sm:$0xff]
    %v125 = vld [vmem:[#allocation4 + $0x18] sm:$0xff]
    %v126 = vld [vmem:[#allocation4 + $0x20] sm:$0xff]
    %v127 = vld [vmem:[#allocation4 + $0x28] sm:$0xff]
    %v128 = vld [vmem:[#allocation4 + $0x30] sm:$0xff]
    %v129 = vld [vmem:[#allocation4 + $0x38] sm:$0xff]
    %v130 = vld [vmem:[#allocation4 + $0x40] sm:$0xff]
    %v131 = vld [vmem:[#allocation4 + $0x48] sm:$0xff]
    %v132 = vld [vmem:[#allocation4 + $0x50] sm:$0xff]
    %v133 = vld [vmem:[#allocation4 + $0x58] sm:$0xff]
    %v134 = vld [vmem:[#allocation4 + $0x60] sm:$0xff]
    %v135 = vld [vmem:[#allocation4 + $0x68] sm:$0xff]
    %v136 = vld [vmem:[#allocation4 + $0x70] sm:$0xff]
    %v137 = vld [vmem:[#allocation4 + $0x78] sm:$0xff]
    %v138 = vld [vmem:[#allocation4 + $0x80] sm:$0xff]
    %v139 = vld [vmem:[#allocation4 + $0x88] sm:$0xff]
    %v140 = vld [vmem:[#allocation4 + $0x90] sm:$0xff]
    %v141 = vld [vmem:[#allocation4 + $0x98] sm:$0xff]
    %v142 = vld [vmem:[#allocation4 + $0xa0] sm:$0xff]
    %v143 = vld [vmem:[#allocation4 + $0xa8] sm:$0xff]
    %v144 = vld [vmem:[#allocation4 + $0xb0] sm:$0xff]
    %v145 = vld [vmem:[#allocation4 + $0xb8] sm:$0xff]
    %v146 = vld [vmem:[#allocation4 + $0xc0] sm:$0xff]
    %v147 = vld [vmem:[#allocation4 + $0xc8] sm:$0xff]
    %v148 = vld [vmem:[#allocation4 + $0xd0] sm:$0xff]
    %v149 = vld [vmem:[#allocation4 + $0xd8] sm:$0xff]
    %v150 = vld [vmem:[#allocation4 + $0xe0] sm:$0xff]
    %v151 = vld [vmem:[#allocation4 + $0xe8] sm:$0xff]
    %v152 = vld [vmem:[#allocation4 + $0xf0] sm:$0xff]
    %v153 = vld [vmem:[#allocation4 + $0xf8] sm:$0xff]
    %s154 = scalar_lea.vmem [#allocation2], 16
    %155 = vst.msk [vmem:[%s154] sm:$0xff] %vm116, %v122
    %156 = vst.msk [vmem:[%s154 + $0x8] sm:$0xff] %vm116, %v123
    %157 = vst.msk [vmem:[%s154 + $0x10] sm:$0xff] %vm116, %v124
    %158 = vst.msk [vmem:[%s154 + $0x18] sm:$0xff] %vm116, %v125
    %159 = vst.msk [vmem:[%s154 + $0x20] sm:$0xff] %vm116, %v126
    %160 = vst.msk [vmem:[%s154 + $0x28] sm:$0xff] %vm116, %v127
    %161 = vst.msk [vmem:[%s154 + $0x30] sm:$0xff] %vm116, %v128
    %162 = vst.msk [vmem:[%s154 + $0x38] sm:$0xff] %vm116, %v129
    %163 = vst.msk [vmem:[%s154 + $0x40] sm:$0xff] %vm116, %v130
    %164 = vst.msk [vmem:[%s154 + $0x48] sm:$0xff] %vm116, %v131
    %165 = vst.msk [vmem:[%s154 + $0x50] sm:$0xff] %vm116, %v132
    %166 = vst.msk [vmem:[%s154 + $0x58] sm:$0xff] %vm116, %v133
    %167 = vst.msk [vmem:[%s154 + $0x60] sm:$0xff] %vm116, %v134
    %168 = vst.msk [vmem:[%s154 + $0x68] sm:$0xff] %vm116, %v135
    %169 = vst.msk [vmem:[%s154 + $0x70] sm:$0xff] %vm116, %v136
    %170 = vst.msk [vmem:[%s154 + $0x78] sm:$0xff] %vm116, %v137
    %171 = vst.msk [vmem:[%s154 + $0x80] sm:$0xff] %vm116, %v138
    %172 = vst.msk [vmem:[%s154 + $0x88] sm:$0xff] %vm116, %v139
    %173 = vst.msk [vmem:[%s154 + $0x90] sm:$0xff] %vm116, %v140
    %174 = vst.msk [vmem:[%s154 + $0x98] sm:$0xff] %vm116, %v141
    %175 = vst.msk [vmem:[%s154 + $0xa0] sm:$0xff] %vm116, %v142
    %176 = vst.msk [vmem:[%s154 + $0xa8] sm:$0xff] %vm116, %v143
    %177 = vst.msk [vmem:[%s154 + $0xb0] sm:$0xff] %vm116, %v144
    %178 = vst.msk [vmem:[%s154 + $0xb8] sm:$0xff] %vm116, %v145
    %179 = vst.msk [vmem:[%s154 + $0xc0] sm:$0xff] %vm116, %v146
    %180 = vst.msk [vmem:[%s154 + $0xc8] sm:$0xff] %vm116, %v147
    %181 = vst.msk [vmem:[%s154 + $0xd0] sm:$0xff] %vm116, %v148
    %182 = vst.msk [vmem:[%s154 + $0xd8] sm:$0xff] %vm116, %v149
    %183 = vst.msk [vmem:[%s154 + $0xe0] sm:$0xff] %vm116, %v150
    %184 = vst.msk [vmem:[%s154 + $0xe8] sm:$0xff] %vm116, %v151
    %185 = vst.msk [vmem:[%s154 + $0xf0] sm:$0xff] %vm116, %v152
    %186 = vst.msk [vmem:[%s154 + $0xf8] sm:$0xff] %vm116, %v153
    %v187 = vld [vmem:[#allocation2] sm:$0xff]
    %v188 = vld [vmem:[#allocation2 + $0x8] sm:$0xff]
    %v189 = vld [vmem:[#allocation2 + $0x10] sm:$0xff]
    %v190 = vld [vmem:[#allocation2 + $0x18] sm:$0xff]
    %v191 = vld [vmem:[#allocation2 + $0x20] sm:$0xff]
    %v192 = vld [vmem:[#allocation2 + $0x28] sm:$0xff]
    %v193 = vld [vmem:[#allocation2 + $0x30] sm:$0xff]
    %v194 = vld [vmem:[#allocation2 + $0x38] sm:$0xff]
    %v195 = vld [vmem:[#allocation2 + $0x40] sm:$0xff]
    %v196 = vld [vmem:[#allocation2 + $0x48] sm:$0xff]
    %v197 = vld [vmem:[#allocation2 + $0x50] sm:$0xff]
    %v198 = vld [vmem:[#allocation2 + $0x58] sm:$0xff]
    %v199 = vld [vmem:[#allocation2 + $0x60] sm:$0xff]
    %v200 = vld [vmem:[#allocation2 + $0x68] sm:$0xff]
    %v201 = vld [vmem:[#allocation2 + $0x70] sm:$0xff]
    %v202 = vld [vmem:[#allocation2 + $0x78] sm:$0xff]
    %v203 = vld [vmem:[#allocation2 + $0x80] sm:$0xff]
    %v204 = vld [vmem:[#allocation2 + $0x88] sm:$0xff]
    %v205 = vld [vmem:[#allocation2 + $0x90] sm:$0xff]
    %v206 = vld [vmem:[#allocation2 + $0x98] sm:$0xff]
    %v207 = vld [vmem:[#allocation2 + $0xa0] sm:$0xff]
    %v208 = vld [vmem:[#allocation2 + $0xa8] sm:$0xff]
    %v209 = vld [vmem:[#allocation2 + $0xb0] sm:$0xff]
    %v210 = vld [vmem:[#allocation2 + $0xb8] sm:$0xff]
    %v211 = vld [vmem:[#allocation2 + $0xc0] sm:$0xff]
    %v212 = vld [vmem:[#allocation2 + $0xc8] sm:$0xff]
    %v213 = vld [vmem:[#allocation2 + $0xd0] sm:$0xff]
    %v214 = vld [vmem:[#allocation2 + $0xd8] sm:$0xff]
    %v215 = vld [vmem:[#allocation2 + $0xe0] sm:$0xff]
    %v216 = vld [vmem:[#allocation2 + $0xe8] sm:$0xff]
    %v217 = vld [vmem:[#allocation2 + $0xf0] sm:$0xff]
    %v218 = vld [vmem:[#allocation2 + $0xf8] sm:$0xff]
    %v219 = vld [vmem:[#allocation7] sm:$0xff]
    %v220 = vld [vmem:[#allocation7 + $0x8] sm:$0xff]
    %v221 = vld [vmem:[#allocation7 + $0x10] sm:$0xff]
    %v222 = vld [vmem:[#allocation7 + $0x18] sm:$0xff]
    %v223 = vld [vmem:[#allocation7 + $0x20] sm:$0xff]
    %v224 = vld [vmem:[#allocation7 + $0x28] sm:$0xff]
    %v225 = vld [vmem:[#allocation7 + $0x30] sm:$0xff]
    %v226 = vld [vmem:[#allocation7 + $0x38] sm:$0xff]
    %v227 = vld [vmem:[#allocation7 + $0x40] sm:$0xff]
    %v228 = vld [vmem:[#allocation7 + $0x48] sm:$0xff]
    %v229 = vld [vmem:[#allocation7 + $0x50] sm:$0xff]
    %v230 = vld [vmem:[#allocation7 + $0x58] sm:$0xff]
    %v231 = vld [vmem:[#allocation7 + $0x60] sm:$0xff]
    %v232 = vld [vmem:[#allocation7 + $0x68] sm:$0xff]
    %v233 = vld [vmem:[#allocation7 + $0x70] sm:$0xff]
    %v234 = vld [vmem:[#allocation7 + $0x78] sm:$0xff]
    %v235 = vld [vmem:[#allocation7 + $0x80] sm:$0xff]
    %v236 = vld [vmem:[#allocation7 + $0x88] sm:$0xff]
    %v237 = vld [vmem:[#allocation7 + $0x90] sm:$0xff]
    %v238 = vld [vmem:[#allocation7 + $0x98] sm:$0xff]
    %v239 = vld [vmem:[%s154] sm:$0xff]
    %v240 = vld [vmem:[%s154 + $0x8] sm:$0xff]
    %v241 = vld [vmem:[%s154 + $0x10] sm:$0xff]
    %v242 = vld [vmem:[%s154 + $0x18] sm:$0xff]
    %v243 = vld [vmem:[%s154 + $0x20] sm:$0xff]
    %v244 = vld [vmem:[%s154 + $0x28] sm:$0xff]
    %v245 = vld [vmem:[%s154 + $0x30] sm:$0xff]
    %v246 = vld [vmem:[%s154 + $0x38] sm:$0xff]
    %v247 = vld [vmem:[%s154 + $0x40] sm:$0xff]
    %v248 = vld [vmem:[%s154 + $0x48] sm:$0xff]
    %v249 = vld [vmem:[%s154 + $0x50] sm:$0xff]
    %v250 = vld [vmem:[%s154 + $0x58] sm:$0xff]
    %v251 = vld [vmem:[%s154 + $0x60] sm:$0xff]
    %v252 = vld [vmem:[%s154 + $0x68] sm:$0xff]
    %v253 = vld [vmem:[%s154 + $0x70] sm:$0xff]
    %v254 = vld [vmem:[%s154 + $0x78] sm:$0xff]
    %v255 = vld [vmem:[%s154 + $0x80] sm:$0xff]
    %v256 = vld [vmem:[%s154 + $0x88] sm:$0xff]
    %v257 = vld [vmem:[%s154 + $0x90] sm:$0xff]
    %v258 = vld [vmem:[%s154 + $0x98] sm:$0xff]
    %v259 = vld [vmem:[%s154 + $0xa0] sm:$0xff]
    %v260 = vld [vmem:[%s154 + $0xa8] sm:$0xff]
    %v261 = vld [vmem:[%s154 + $0xb0] sm:$0xff]
    %v262 = vld [vmem:[%s154 + $0xb8] sm:$0xff]
    %v263 = vld [vmem:[%s154 + $0xc0] sm:$0xff]
    %v264 = vld [vmem:[%s154 + $0xc8] sm:$0xff]
    %v265 = vld [vmem:[%s154 + $0xd0] sm:$0xff]
    %v266 = vld [vmem:[%s154 + $0xd8] sm:$0xff]
    %v267 = vld [vmem:[%s154 + $0xe0] sm:$0xff]
    %v268 = vld [vmem:[%s154 + $0xe8] sm:$0xff]
    %v269 = vld [vmem:[%s154 + $0xf0] sm:$0xff]
    %v270 = vld [vmem:[%s154 + $0xf8] sm:$0xff]
    %s271 = scalar_lea.vmem [#allocation7], 160
    %v272 = vld [vmem:[%s271] sm:$0xff]
    %v273 = vld [vmem:[%s271 + $0x8] sm:$0xff]
    %v274 = vld [vmem:[%s271 + $0x10] sm:$0xff]
    %v275 = vld [vmem:[%s271 + $0x18] sm:$0xff]
    %v276 = vld [vmem:[%s271 + $0x20] sm:$0xff]
    %v277 = vld [vmem:[%s271 + $0x28] sm:$0xff]
    %v278 = vld [vmem:[%s271 + $0x30] sm:$0xff]
    %v279 = vld [vmem:[%s271 + $0x38] sm:$0xff]
    %v280 = vld [vmem:[%s271 + $0x40] sm:$0xff]
    %v281 = vld [vmem:[%s271 + $0x48] sm:$0xff]
    %v282 = vld [vmem:[%s271 + $0x50] sm:$0xff]
    %v283 = vld [vmem:[%s271 + $0x58] sm:$0xff]
    %v284 = vld [vmem:[%s271 + $0x60] sm:$0xff]
    %v285 = vld [vmem:[%s271 + $0x68] sm:$0xff]
    %v286 = vld [vmem:[%s271 + $0x70] sm:$0xff]
    %v287 = vld [vmem:[%s271 + $0x78] sm:$0xff]
    %v288 = vld [vmem:[%s271 + $0x80] sm:$0xff]
    %v289 = vld [vmem:[%s271 + $0x88] sm:$0xff]
    %v290 = vld [vmem:[%s271 + $0x90] sm:$0xff]
    %v291 = vld [vmem:[%s271 + $0x98] sm:$0xff]
    %v293 = vsel %vm116, %v239, 0
    %v296 = vsel %vm116, %v240, 0
    %v299 = vsel %vm116, %v241, 0
    %v302 = vsel %vm116, %v242, 0
    %v305 = vsel %vm116, %v243, 0
    %v308 = vsel %vm116, %v244, 0
    %v311 = vsel %vm116, %v245, 0
    %v314 = vsel %vm116, %v246, 0
    %v317 = vsel %vm116, %v247, 0
    %v320 = vsel %vm116, %v248, 0
    %v323 = vsel %vm116, %v249, 0
    %v326 = vsel %vm116, %v250, 0
    %v329 = vsel %vm116, %v251, 0
    %v332 = vsel %vm116, %v252, 0
    %v335 = vsel %vm116, %v253, 0
    %v338 = vsel %vm116, %v254, 0
    %v341 = vsel %vm116, %v255, 0
    %v344 = vsel %vm116, %v256, 0
    %v347 = vsel %vm116, %v257, 0
    %v350 = vsel %vm116, %v258, 0
    %v353 = vsel %vm116, %v259, 0
    %v356 = vsel %vm116, %v260, 0
    %v359 = vsel %vm116, %v261, 0
    %v362 = vsel %vm116, %v262, 0
    %v365 = vsel %vm116, %v263, 0
    %v368 = vsel %vm116, %v264, 0
    %v371 = vsel %vm116, %v265, 0
    %v374 = vsel %vm116, %v266, 0
    %v377 = vsel %vm116, %v267, 0
    %v380 = vsel %vm116, %v268, 0
    %v383 = vsel %vm116, %v269, 0
    %v386 = vsel %vm116, %v270, 0
    %388 = vmatprep.subr.mxu0 %v273
    %389 = vmatpush1.msra.mxu0 %v272
    %390 = vmatprep.subr.mxu0 %v275
    %391 = vmatpush1.msra.mxu0 %v274
    %392 = vmatprep.subr.mxu0 %v277
    %393 = vmatpush1.msra.mxu0 %v276
    %394 = vmatprep.subr.mxu0 %v279
    %395 = vmatpush1.msra.mxu0 %v278
    %396 = vmatprep.subr.mxu0 %v281
    %397 = vmatpush1.msra.mxu0 %v280
    %398 = vmatprep.subr.mxu0 %v283
    %399 = vmatpush1.msra.mxu0 %v282
    %400 = vmatprep.subr.mxu0 %v285
    %401 = vmatpush1.msra.mxu0 %v284
    %402 = vmatprep.subr.mxu0 %v287
    %403 = vmatpush1.msra.mxu0 %v286
    %404 = vmatprep.subr.mxu0 %v289
    %405 = vmatpush1.msra.mxu0 %v288
    %406 = vmatprep.subr.mxu0 %v291
    %407 = vmatpush1.msra.mxu0 %v290
    %408 = vmatprep.subr.mxu0 0.0
    %409 = vmatpush1.msra.mxu0 0.0
    %410 = vmatprep.subr.mxu0 0.0
    %411 = vmatpush1.msra.mxu0 0.0
    %412 = vmatprep.subr.mxu0 0.0
    %413 = vmatpush1.msra.mxu0 0.0
    %414 = vmatprep.subr.mxu0 0.0
    %415 = vmatpush1.msra.mxu0 0.0
    %416 = vmatprep.subr.mxu0 0.0
    %417 = vmatpush1.msra.mxu0 0.0
    %418 = vmatprep.subr.mxu0 0.0
    %419 = vmatpush1.msra.mxu0 0.0
    %420 = vmatprep.subr.mxu0 0.0
    %421 = vmatpush1.msra.mxu0 0.0
    %422 = vmatprep.subr.mxu0 0.0
    %423 = vmatpush1.msra.mxu0 0.0
    %424 = vmatprep.subr.mxu0 0.0
    %425 = vmatpush1.msra.mxu0 0.0
    %426 = vmatprep.subr.mxu0 0.0
    %427 = vmatpush1.msra.mxu0 0.0
    %428 = vmatprep.subr.mxu0 0.0
    %429 = vmatpush1.msra.mxu0 0.0
    %430 = vmatprep.subr.mxu0 0.0
    %431 = vmatpush1.msra.mxu0 0.0
    %432 = vmatprep.subr.mxu0 0.0
    %433 = vmatpush1.msra.mxu0 0.0
    %434 = vmatprep.subr.mxu0 0.0
    %435 = vmatpush1.msra.mxu0 0.0
    %436 = vmatprep.subr.mxu0 0.0
    %437 = vmatpush1.msra.mxu0 0.0
    %438 = vmatprep.subr.mxu0 0.0
    %439 = vmatpush1.msra.mxu0 0.0
    %440 = vmatprep.subr.mxu0 0.0
    %441 = vmatpush1.msra.mxu0 0.0
    %442 = vmatprep.subr.mxu0 0.0
    %443 = vmatpush1.msra.mxu0 0.0
    %444 = vmatprep.subr.mxu0 0.0
    %445 = vmatpush1.msra.mxu0 0.0
    %446 = vmatprep.subr.mxu0 0.0
    %447 = vmatpush1.msra.mxu0 0.0
    %448 = vmatprep.subr.mxu0 0.0
    %449 = vmatpush1.msra.mxu0 0.0
    %450 = vmatprep.subr.mxu0 0.0
    %451 = vmatpush1.msra.mxu0 0.0
    %452 = vmatprep.mubr.f32.mxu0 0.0
    %453 = vmatmul.mubr.f32.gmra.mrb[0].mxu0 %v293
    %v454 = vpop.f32.mrb[0].mxu0
    %v455 = vadd.f32 0.0, %v454
    %v456 = vpop.f32.mrb[0].mxu0
    %v457 = vadd.f32 0.0, %v456
    %458 = vmatprep.mubr.f32.mxu0 0.0
    %459 = vmatmul.mubr.f32.gmra.mrb[0].mxu0 %v296
    %v460 = vpop.f32.mrb[0].mxu0
    %v461 = vadd.f32 0.0, %v460
    %v462 = vpop.f32.mrb[0].mxu0
    %v463 = vadd.f32 0.0, %v462
    %464 = vmatprep.mubr.f32.mxu0 0.0
    %465 = vmatmul.mubr.f32.gmra.mrb[0].mxu0 %v299
    %v466 = vpop.f32.mrb[0].mxu0
    %v467 = vadd.f32 0.0, %v466
    %v468 = vpop.f32.mrb[0].mxu0
    %v469 = vadd.f32 0.0, %v468
    %470 = vmatprep.mubr.f32.mxu0 0.0
    %471 = vmatmul.mubr.f32.gmra.mrb[0].mxu0 %v302
    %v472 = vpop.f32.mrb[0].mxu0
    %v473 = vadd.f32 0.0, %v472
    %v474 = vpop.f32.mrb[0].mxu0
    %v475 = vadd.f32 0.0, %v474
    %476 = vmatprep.mubr.f32.mxu0 0.0
    %477 = vmatmul.mubr.f32.gmra.mrb[0].mxu0 %v305
    %v478 = vpop.f32.mrb[0].mxu0
    %v479 = vadd.f32 0.0, %v478
    %v480 = vpop.f32.mrb[0].mxu0
    %v481 = vadd.f32 0.0, %v480
    %482 = vmatprep.mubr.f32.mxu0 0.0
    %483 = vmatmul.mubr.f32.gmra.mrb[0].mxu0 %v308
    %v484 = vpop.f32.mrb[0].mxu0
    %v485 = vadd.f32 0.0, %v484
    %v486 = vpop.f32.mrb[0].mxu0
    %v487 = vadd.f32 0.0, %v486
    %488 = vmatprep.mubr.f32.mxu0 0.0
    %489 = vmatmul.mubr.f32.gmra.mrb[0].mxu0 %v311
    %v490 = vpop.f32.mrb[0].mxu0
    %v491 = vadd.f32 0.0, %v490
    %v492 = vpop.f32.mrb[0].mxu0
    %v493 = vadd.f32 0.0, %v492
    %494 = vmatprep.mubr.f32.mxu0 0.0
    %495 = vmatmul.mubr.f32.gmra.mrb[0].mxu0 %v314
    %v496 = vpop.f32.mrb[0].mxu0
    %v497 = vadd.f32 0.0, %v496
    %v498 = vpop.f32.mrb[0].mxu0
    %v499 = vadd.f32 0.0, %v498
    %500 = vmatprep.mubr.f32.mxu0 0.0
    %501 = vmatmul.mubr.f32.gmra.mrb[0].mxu0 %v317
    %v502 = vpop.f32.mrb[0].mxu0
    %v503 = vadd.f32 0.0, %v502
    %v504 = vpop.f32.mrb[0].mxu0
    %v505 = vadd.f32 0.0, %v504
    %506 = vmatprep.mubr.f32.mxu0 0.0
    %507 = vmatmul.mubr.f32.gmra.mrb[0].mxu0 %v320
    %v508 = vpop.f32.mrb[0].mxu0
    %v509 = vadd.f32 0.0, %v508
    %v510 = vpop.f32.mrb[0].mxu0
    %v511 = vadd.f32 0.0, %v510
    %512 = vmatprep.mubr.f32.mxu0 0.0
    %513 = vmatmul.mubr.f32.gmra.mrb[0].mxu0 %v323
    %v514 = vpop.f32.mrb[0].mxu0
    %v515 = vadd.f32 0.0, %v514
    %v516 = vpop.f32.mrb[0].mxu0
    %v517 = vadd.f32 0.0, %v516
    %518 = vmatprep.mubr.f32.mxu0 0.0
    %519 = vmatmul.mubr.f32.gmra.mrb[0].mxu0 %v326
    %v520 = vpop.f32.mrb[0].mxu0
    %v521 = vadd.f32 0.0, %v520
    %v522 = vpop.f32.mrb[0].mxu0
    %v523 = vadd.f32 0.0, %v522
    %524 = vmatprep.mubr.f32.mxu0 0.0
    %525 = vmatmul.mubr.f32.gmra.mrb[0].mxu0 %v329
    %v526 = vpop.f32.mrb[0].mxu0
    %v527 = vadd.f32 0.0, %v526
    %v528 = vpop.f32.mrb[0].mxu0
    %v529 = vadd.f32 0.0, %v528
    %530 = vmatprep.mubr.f32.mxu0 0.0
    %531 = vmatmul.mubr.f32.gmra.mrb[0].mxu0 %v332
    %v532 = vpop.f32.mrb[0].mxu0
    %v533 = vadd.f32 0.0, %v532
    %v534 = vpop.f32.mrb[0].mxu0
    %v535 = vadd.f32 0.0, %v534
    %536 = vmatprep.mubr.f32.mxu0 0.0
    %537 = vmatmul.mubr.f32.gmra.mrb[0].mxu0 %v335
    %v538 = vpop.f32.mrb[0].mxu0
    %v539 = vadd.f32 0.0, %v538
    %v540 = vpop.f32.mrb[0].mxu0
    %v541 = vadd.f32 0.0, %v540
    %542 = vmatprep.mubr.f32.mxu0 0.0
    %543 = vmatmul.mubr.f32.gmra.mrb[0].mxu0 %v338
    %v544 = vpop.f32.mrb[0].mxu0
    %v545 = vadd.f32 0.0, %v544
    %v546 = vpop.f32.mrb[0].mxu0
    %v547 = vadd.f32 0.0, %v546
    %548 = vmatprep.mubr.f32.mxu0 0.0
    %549 = vmatmul.mubr.f32.gmra.mrb[0].mxu0 %v341
    %v550 = vpop.f32.mrb[0].mxu0
    %v551 = vadd.f32 0.0, %v550
    %v552 = vpop.f32.mrb[0].mxu0
    %v553 = vadd.f32 0.0, %v552
    %554 = vmatprep.mubr.f32.mxu0 0.0
    %555 = vmatmul.mubr.f32.gmra.mrb[0].mxu0 %v344
    %v556 = vpop.f32.mrb[0].mxu0
    %v557 = vadd.f32 0.0, %v556
    %v558 = vpop.f32.mrb[0].mxu0
    %v559 = vadd.f32 0.0, %v558
    %560 = vmatprep.mubr.f32.mxu0 0.0
    %561 = vmatmul.mubr.f32.gmra.mrb[0].mxu0 %v347
    %v562 = vpop.f32.mrb[0].mxu0
    %v563 = vadd.f32 0.0, %v562
    %v564 = vpop.f32.mrb[0].mxu0
    %v565 = vadd.f32 0.0, %v564
    %566 = vmatprep.mubr.f32.mxu0 0.0
    %567 = vmatmul.mubr.f32.gmra.mrb[0].mxu0 %v350
    %v568 = vpop.f32.mrb[0].mxu0
    %v569 = vadd.f32 0.0, %v568
    %v570 = vpop.f32.mrb[0].mxu0
    %v571 = vadd.f32 0.0, %v570
    %572 = vmatprep.mubr.f32.mxu0 0.0
    %573 = vmatmul.mubr.f32.gmra.mrb[0].mxu0 %v353
    %v574 = vpop.f32.mrb[0].mxu0
    %v575 = vadd.f32 0.0, %v574
    %v576 = vpop.f32.mrb[0].mxu0
    %v577 = vadd.f32 0.0, %v576
    %578 = vmatprep.mubr.f32.mxu0 0.0
    %579 = vmatmul.mubr.f32.gmra.mrb[0].mxu0 %v356
    %v580 = vpop.f32.mrb[0].mxu0
    %v581 = vadd.f32 0.0, %v580
    %v582 = vpop.f32.mrb[0].mxu0
    %v583 = vadd.f32 0.0, %v582
    %584 = vmatprep.mubr.f32.mxu0 0.0
    %585 = vmatmul.mubr.f32.gmra.mrb[0].mxu0 %v359
    %v586 = vpop.f32.mrb[0].mxu0
    %v587 = vadd.f32 0.0, %v586
    %v588 = vpop.f32.mrb[0].mxu0
    %v589 = vadd.f32 0.0, %v588
    %590 = vmatprep.mubr.f32.mxu0 0.0
    %591 = vmatmul.mubr.f32.gmra.mrb[0].mxu0 %v362
    %v592 = vpop.f32.mrb[0].mxu0
    %v593 = vadd.f32 0.0, %v592
    %v594 = vpop.f32.mrb[0].mxu0
    %v595 = vadd.f32 0.0, %v594
    %596 = vmatprep.mubr.f32.mxu0 0.0
    %597 = vmatmul.mubr.f32.gmra.mrb[0].mxu0 %v365
    %v598 = vpop.f32.mrb[0].mxu0
    %v599 = vadd.f32 0.0, %v598
    %v600 = vpop.f32.mrb[0].mxu0
    %v601 = vadd.f32 0.0, %v600
    %602 = vmatprep.mubr.f32.mxu0 0.0
    %603 = vmatmul.mubr.f32.gmra.mrb[0].mxu0 %v368
    %v604 = vpop.f32.mrb[0].mxu0
    %v605 = vadd.f32 0.0, %v604
    %v606 = vpop.f32.mrb[0].mxu0
    %v607 = vadd.f32 0.0, %v606
    %608 = vmatprep.mubr.f32.mxu0 0.0
    %609 = vmatmul.mubr.f32.gmra.mrb[0].mxu0 %v371
    %v610 = vpop.f32.mrb[0].mxu0
    %v611 = vadd.f32 0.0, %v610
    %v612 = vpop.f32.mrb[0].mxu0
    %v613 = vadd.f32 0.0, %v612
    %614 = vmatprep.mubr.f32.mxu0 0.0
    %615 = vmatmul.mubr.f32.gmra.mrb[0].mxu0 %v374
    %v616 = vpop.f32.mrb[0].mxu0
    %v617 = vadd.f32 0.0, %v616
    %v618 = vpop.f32.mrb[0].mxu0
    %v619 = vadd.f32 0.0, %v618
    %620 = vmatprep.mubr.f32.mxu0 0.0
    %621 = vmatmul.mubr.f32.gmra.mrb[0].mxu0 %v377
    %v622 = vpop.f32.mrb[0].mxu0
    %v623 = vadd.f32 0.0, %v622
    %v624 = vpop.f32.mrb[0].mxu0
    %v625 = vadd.f32 0.0, %v624
    %626 = vmatprep.mubr.f32.mxu0 0.0
    %627 = vmatmul.mubr.f32.gmra.mrb[0].mxu0 %v380
    %v628 = vpop.f32.mrb[0].mxu0
    %v629 = vadd.f32 0.0, %v628
    %v630 = vpop.f32.mrb[0].mxu0
    %v631 = vadd.f32 0.0, %v630
    %632 = vmatprep.mubr.f32.mxu0 0.0
    %633 = vmatmul.mubr.f32.gmra.mrb[0].mxu0 %v383
    %v634 = vpop.f32.mrb[0].mxu0
    %v635 = vadd.f32 0.0, %v634
    %v636 = vpop.f32.mrb[0].mxu0
    %v637 = vadd.f32 0.0, %v636
    %638 = vmatprep.mubr.f32.mxu0 0.0
    %639 = vmatmul.mubr.f32.gmra.mrb[0].mxu0 %v386
    %v640 = vpop.f32.mrb[0].mxu0
    %v641 = vadd.f32 0.0, %v640
    %v642 = vpop.f32.mrb[0].mxu0
    %v643 = vadd.f32 0.0, %v642
    %644 = vdwg.mxu0
    %v646 = vsel %vm116, %v187, 0
    %v649 = vsel %vm116, %v188, 0
    %v652 = vsel %vm116, %v189, 0
    %v655 = vsel %vm116, %v190, 0
    %v658 = vsel %vm116, %v191, 0
    %v661 = vsel %vm116, %v192, 0
    %v664 = vsel %vm116, %v193, 0
    %v667 = vsel %vm116, %v194, 0
    %v670 = vsel %vm116, %v195, 0
    %v673 = vsel %vm116, %v196, 0
    %v676 = vsel %vm116, %v197, 0
    %v679 = vsel %vm116, %v198, 0
    %v682 = vsel %vm116, %v199, 0
    %v685 = vsel %vm116, %v200, 0
    %v688 = vsel %vm116, %v201, 0
    %v691 = vsel %vm116, %v202, 0
    %v694 = vsel %vm116, %v203, 0
    %v697 = vsel %vm116, %v204, 0
    %v700 = vsel %vm116, %v205, 0
    %v703 = vsel %vm116, %v206, 0
    %v706 = vsel %vm116, %v207, 0
    %v709 = vsel %vm116, %v208, 0
    %v712 = vsel %vm116, %v209, 0
    %v715 = vsel %vm116, %v210, 0
    %v718 = vsel %vm116, %v211, 0
    %v721 = vsel %vm116, %v212, 0
    %v724 = vsel %vm116, %v213, 0
    %v727 = vsel %vm116, %v214, 0
    %v730 = vsel %vm116, %v215, 0
    %v733 = vsel %vm116, %v216, 0
    %v736 = vsel %vm116, %v217, 0
    %v739 = vsel %vm116, %v218, 0
    %741 = vmatprep.subr.mxu0 %v220
    %742 = vmatpush1.msra.mxu0 %v219
    %743 = vmatprep.subr.mxu0 %v222
    %744 = vmatpush1.msra.mxu0 %v221
    %745 = vmatprep.subr.mxu0 %v224
    %746 = vmatpush1.msra.mxu0 %v223
    %747 = vmatprep.subr.mxu0 %v226
    %748 = vmatpush1.msra.mxu0 %v225
    %749 = vmatprep.subr.mxu0 %v228
    %750 = vmatpush1.msra.mxu0 %v227
    %751 = vmatprep.subr.mxu0 %v230
    %752 = vmatpush1.msra.mxu0 %v229
    %753 = vmatprep.subr.mxu0 %v232
    %754 = vmatpush1.msra.mxu0 %v231
    %755 = vmatprep.subr.mxu0 %v234
    %756 = vmatpush1.msra.mxu0 %v233
    %757 = vmatprep.subr.mxu0 %v236
    %758 = vmatpush1.msra.mxu0 %v235
    %759 = vmatprep.subr.mxu0 %v238
    %760 = vmatpush1.msra.mxu0 %v237
    %761 = vmatprep.subr.mxu0 0.0
    %762 = vmatpush1.msra.mxu0 0.0
    %763 = vmatprep.subr.mxu0 0.0
    %764 = vmatpush1.msra.mxu0 0.0
    %765 = vmatprep.subr.mxu0 0.0
    %766 = vmatpush1.msra.mxu0 0.0
    %767 = vmatprep.subr.mxu0 0.0
    %768 = vmatpush1.msra.mxu0 0.0
    %769 = vmatprep.subr.mxu0 0.0
    %770 = vmatpush1.msra.mxu0 0.0
    %771 = vmatprep.subr.mxu0 0.0
    %772 = vmatpush1.msra.mxu0 0.0
    %773 = vmatprep.subr.mxu0 0.0
    %774 = vmatpush1.msra.mxu0 0.0
    %775 = vmatprep.subr.mxu0 0.0
    %776 = vmatpush1.msra.mxu0 0.0
    %777 = vmatprep.subr.mxu0 0.0
    %778 = vmatpush1.msra.mxu0 0.0
    %779 = vmatprep.subr.mxu0 0.0
    %780 = vmatpush1.msra.mxu0 0.0
    %781 = vmatprep.subr.mxu0 0.0
    %782 = vmatpush1.msra.mxu0 0.0
    %783 = vmatprep.subr.mxu0 0.0
    %784 = vmatpush1.msra.mxu0 0.0
    %785 = vmatprep.subr.mxu0 0.0
    %786 = vmatpush1.msra.mxu0 0.0
    %787 = vmatprep.subr.mxu0 0.0
    %788 = vmatpush1.msra.mxu0 0.0
    %789 = vmatprep.subr.mxu0 0.0
    %790 = vmatpush1.msra.mxu0 0.0
    %791 = vmatprep.subr.mxu0 0.0
    %792 = vmatpush1.msra.mxu0 0.0
    %793 = vmatprep.subr.mxu0 0.0
    %794 = vmatpush1.msra.mxu0 0.0
    %795 = vmatprep.subr.mxu0 0.0
    %796 = vmatpush1.msra.mxu0 0.0
    %797 = vmatprep.subr.mxu0 0.0
    %798 = vmatpush1.msra.mxu0 0.0
    %799 = vmatprep.subr.mxu0 0.0
    %800 = vmatpush1.msra.mxu0 0.0
    %801 = vmatprep.subr.mxu0 0.0
    %802 = vmatpush1.msra.mxu0 0.0
    %803 = vmatprep.subr.mxu0 0.0
    %804 = vmatpush1.msra.mxu0 0.0
    %805 = vmatprep.mubr.f32.mxu0 0.0
    %806 = vmatmul.mubr.f32.gmra.mrb[0].mxu0 %v646
    %v807 = vpop.f32.mrb[0].mxu0
    %v808 = vadd.f32 %v455, %v807
    %v809 = vpop.f32.mrb[0].mxu0
    %v810 = vadd.f32 %v457, %v809
    %811 = vmatprep.mubr.f32.mxu0 0.0
    %812 = vmatmul.mubr.f32.gmra.mrb[0].mxu0 %v649
    %v813 = vpop.f32.mrb[0].mxu0
    %v814 = vadd.f32 %v461, %v813
    %v815 = vpop.f32.mrb[0].mxu0
    %v816 = vadd.f32 %v463, %v815
    %817 = vmatprep.mubr.f32.mxu0 0.0
    %818 = vmatmul.mubr.f32.gmra.mrb[0].mxu0 %v652
    %v819 = vpop.f32.mrb[0].mxu0
    %v820 = vadd.f32 %v467, %v819
    %v821 = vpop.f32.mrb[0].mxu0
    %v822 = vadd.f32 %v469, %v821
    %823 = vmatprep.mubr.f32.mxu0 0.0
    %824 = vmatmul.mubr.f32.gmra.mrb[0].mxu0 %v655
    %v825 = vpop.f32.mrb[0].mxu0
    %v826 = vadd.f32 %v473, %v825
    %v827 = vpop.f32.mrb[0].mxu0
    %v828 = vadd.f32 %v475, %v827
    %829 = vmatprep.mubr.f32.mxu0 0.0
    %830 = vmatmul.mubr.f32.gmra.mrb[0].mxu0 %v658
    %v831 = vpop.f32.mrb[0].mxu0
    %v832 = vadd.f32 %v479, %v831
    %v833 = vpop.f32.mrb[0].mxu0
    %v834 = vadd.f32 %v481, %v833
    %835 = vmatprep.mubr.f32.mxu0 0.0
    %836 = vmatmul.mubr.f32.gmra.mrb[0].mxu0 %v661
    %v837 = vpop.f32.mrb[0].mxu0
    %v838 = vadd.f32 %v485, %v837
    %v839 = vpop.f32.mrb[0].mxu0
    %v840 = vadd.f32 %v487, %v839
    %841 = vmatprep.mubr.f32.mxu0 0.0
    %842 = vmatmul.mubr.f32.gmra.mrb[0].mxu0 %v664
    %v843 = vpop.f32.mrb[0].mxu0
    %v844 = vadd.f32 %v491, %v843
    %v845 = vpop.f32.mrb[0].mxu0
    %v846 = vadd.f32 %v493, %v845
    %847 = vmatprep.mubr.f32.mxu0 0.0
    %848 = vmatmul.mubr.f32.gmra.mrb[0].mxu0 %v667
    %v849 = vpop.f32.mrb[0].mxu0
    %v850 = vadd.f32 %v497, %v849
    %v851 = vpop.f32.mrb[0].mxu0
    %v852 = vadd.f32 %v499, %v851
    %853 = vmatprep.mubr.f32.mxu0 0.0
    %854 = vmatmul.mubr.f32.gmra.mrb[0].mxu0 %v670
    %v855 = vpop.f32.mrb[0].mxu0
    %v856 = vadd.f32 %v503, %v855
    %v857 = vpop.f32.mrb[0].mxu0
    %v858 = vadd.f32 %v505, %v857
    %859 = vmatprep.mubr.f32.mxu0 0.0
    %860 = vmatmul.mubr.f32.gmra.mrb[0].mxu0 %v673
    %v861 = vpop.f32.mrb[0].mxu0
    %v862 = vadd.f32 %v509, %v861
    %v863 = vpop.f32.mrb[0].mxu0
    %v864 = vadd.f32 %v511, %v863
    %865 = vmatprep.mubr.f32.mxu0 0.0
    %866 = vmatmul.mubr.f32.gmra.mrb[0].mxu0 %v676
    %v867 = vpop.f32.mrb[0].mxu0
    %v868 = vadd.f32 %v515, %v867
    %v869 = vpop.f32.mrb[0].mxu0
    %v870 = vadd.f32 %v517, %v869
    %871 = vmatprep.mubr.f32.mxu0 0.0
    %872 = vmatmul.mubr.f32.gmra.mrb[0].mxu0 %v679
    %v873 = vpop.f32.mrb[0].mxu0
    %v874 = vadd.f32 %v521, %v873
    %v875 = vpop.f32.mrb[0].mxu0
    %v876 = vadd.f32 %v523, %v875
    %877 = vmatprep.mubr.f32.mxu0 0.0
    %878 = vmatmul.mubr.f32.gmra.mrb[0].mxu0 %v682
    %v879 = vpop.f32.mrb[0].mxu0
    %v880 = vadd.f32 %v527, %v879
    %v881 = vpop.f32.mrb[0].mxu0
    %v882 = vadd.f32 %v529, %v881
    %883 = vmatprep.mubr.f32.mxu0 0.0
    %884 = vmatmul.mubr.f32.gmra.mrb[0].mxu0 %v685
    %v885 = vpop.f32.mrb[0].mxu0
    %v886 = vadd.f32 %v533, %v885
    %v887 = vpop.f32.mrb[0].mxu0
    %v888 = vadd.f32 %v535, %v887
    %889 = vmatprep.mubr.f32.mxu0 0.0
    %890 = vmatmul.mubr.f32.gmra.mrb[0].mxu0 %v688
    %v891 = vpop.f32.mrb[0].mxu0
    %v892 = vadd.f32 %v539, %v891
    %v893 = vpop.f32.mrb[0].mxu0
    %v894 = vadd.f32 %v541, %v893
    %895 = vmatprep.mubr.f32.mxu0 0.0
    %896 = vmatmul.mubr.f32.gmra.mrb[0].mxu0 %v691
    %v897 = vpop.f32.mrb[0].mxu0
    %v898 = vadd.f32 %v545, %v897
    %v899 = vpop.f32.mrb[0].mxu0
    %v900 = vadd.f32 %v547, %v899
    %901 = vmatprep.mubr.f32.mxu0 0.0
    %902 = vmatmul.mubr.f32.gmra.mrb[0].mxu0 %v694
    %v903 = vpop.f32.mrb[0].mxu0
    %v904 = vadd.f32 %v551, %v903
    %v905 = vpop.f32.mrb[0].mxu0
    %v906 = vadd.f32 %v553, %v905
    %907 = vmatprep.mubr.f32.mxu0 0.0
    %908 = vmatmul.mubr.f32.gmra.mrb[0].mxu0 %v697
    %v909 = vpop.f32.mrb[0].mxu0
    %v910 = vadd.f32 %v557, %v909
    %v911 = vpop.f32.mrb[0].mxu0
    %v912 = vadd.f32 %v559, %v911
    %913 = vmatprep.mubr.f32.mxu0 0.0
    %914 = vmatmul.mubr.f32.gmra.mrb[0].mxu0 %v700
    %v915 = vpop.f32.mrb[0].mxu0
    %v916 = vadd.f32 %v563, %v915
    %v917 = vpop.f32.mrb[0].mxu0
    %v918 = vadd.f32 %v565, %v917
    %919 = vmatprep.mubr.f32.mxu0 0.0
    %920 = vmatmul.mubr.f32.gmra.mrb[0].mxu0 %v703
    %v921 = vpop.f32.mrb[0].mxu0
    %v922 = vadd.f32 %v569, %v921
    %v923 = vpop.f32.mrb[0].mxu0
    %v924 = vadd.f32 %v571, %v923
    %925 = vmatprep.mubr.f32.mxu0 0.0
    %926 = vmatmul.mubr.f32.gmra.mrb[0].mxu0 %v706
    %v927 = vpop.f32.mrb[0].mxu0
    %v928 = vadd.f32 %v575, %v927
    %v929 = vpop.f32.mrb[0].mxu0
    %v930 = vadd.f32 %v577, %v929
    %931 = vmatprep.mubr.f32.mxu0 0.0
    %932 = vmatmul.mubr.f32.gmra.mrb[0].mxu0 %v709
    %v933 = vpop.f32.mrb[0].mxu0
    %v934 = vadd.f32 %v581, %v933
    %v935 = vpop.f32.mrb[0].mxu0
    %v936 = vadd.f32 %v583, %v935
    %937 = vmatprep.mubr.f32.mxu0 0.0
    %938 = vmatmul.mubr.f32.gmra.mrb[0].mxu0 %v712
    %v939 = vpop.f32.mrb[0].mxu0
    %v940 = vadd.f32 %v587, %v939
    %v941 = vpop.f32.mrb[0].mxu0
    %v942 = vadd.f32 %v589, %v941
    %943 = vmatprep.mubr.f32.mxu0 0.0
    %944 = vmatmul.mubr.f32.gmra.mrb[0].mxu0 %v715
    %v945 = vpop.f32.mrb[0].mxu0
    %v946 = vadd.f32 %v593, %v945
    %v947 = vpop.f32.mrb[0].mxu0
    %v948 = vadd.f32 %v595, %v947
    %949 = vmatprep.mubr.f32.mxu0 0.0
    %950 = vmatmul.mubr.f32.gmra.mrb[0].mxu0 %v718
    %v951 = vpop.f32.mrb[0].mxu0
    %v952 = vadd.f32 %v599, %v951
    %v953 = vpop.f32.mrb[0].mxu0
    %v954 = vadd.f32 %v601, %v953
    %955 = vmatprep.mubr.f32.mxu0 0.0
    %956 = vmatmul.mubr.f32.gmra.mrb[0].mxu0 %v721
    %v957 = vpop.f32.mrb[0].mxu0
    %v958 = vadd.f32 %v605, %v957
    %v959 = vpop.f32.mrb[0].mxu0
    %v960 = vadd.f32 %v607, %v959
    %961 = vmatprep.mubr.f32.mxu0 0.0
    %962 = vmatmul.mubr.f32.gmra.mrb[0].mxu0 %v724
    %v963 = vpop.f32.mrb[0].mxu0
    %v964 = vadd.f32 %v611, %v963
    %v965 = vpop.f32.mrb[0].mxu0
    %v966 = vadd.f32 %v613, %v965
    %967 = vmatprep.mubr.f32.mxu0 0.0
    %968 = vmatmul.mubr.f32.gmra.mrb[0].mxu0 %v727
    %v969 = vpop.f32.mrb[0].mxu0
    %v970 = vadd.f32 %v617, %v969
    %v971 = vpop.f32.mrb[0].mxu0
    %v972 = vadd.f32 %v619, %v971
    %973 = vmatprep.mubr.f32.mxu0 0.0
    %974 = vmatmul.mubr.f32.gmra.mrb[0].mxu0 %v730
    %v975 = vpop.f32.mrb[0].mxu0
    %v976 = vadd.f32 %v623, %v975
    %v977 = vpop.f32.mrb[0].mxu0
    %v978 = vadd.f32 %v625, %v977
    %979 = vmatprep.mubr.f32.mxu0 0.0
    %980 = vmatmul.mubr.f32.gmra.mrb[0].mxu0 %v733
    %v981 = vpop.f32.mrb[0].mxu0
    %v982 = vadd.f32 %v629, %v981
    %v983 = vpop.f32.mrb[0].mxu0
    %v984 = vadd.f32 %v631, %v983
    %985 = vmatprep.mubr.f32.mxu0 0.0
    %986 = vmatmul.mubr.f32.gmra.mrb[0].mxu0 %v736
    %v987 = vpop.f32.mrb[0].mxu0
    %v988 = vadd.f32 %v635, %v987
    %v989 = vpop.f32.mrb[0].mxu0
    %v990 = vadd.f32 %v637, %v989
    %991 = vmatprep.mubr.f32.mxu0 0.0
    %992 = vmatmul.mubr.f32.gmra.mrb[0].mxu0 %v739
    %v993 = vpop.f32.mrb[0].mxu0
    %v994 = vadd.f32 %v641, %v993
    %v995 = vpop.f32.mrb[0].mxu0
    %v996 = vadd.f32 %v643, %v995
    %997 = vdwg.mxu0
    %s998 = scalar_lea.vmem [#allocation2], 32
    %v999 = vld [vmem:[%s998] sm:$0xff]
    %v1000 = vld [vmem:[%s998 + $0x8] sm:$0xff]
    %v1001 = vld [vmem:[%s998 + $0x10] sm:$0xff]
    %v1002 = vld [vmem:[%s998 + $0x18] sm:$0xff]
    %v1003 = vld [vmem:[%s998 + $0x20] sm:$0xff]
    %v1004 = vld [vmem:[%s998 + $0x28] sm:$0xff]
    %v1005 = vld [vmem:[%s998 + $0x30] sm:$0xff]
    %v1006 = vld [vmem:[%s998 + $0x38] sm:$0xff]
    %v1007 = vld [vmem:[%s998 + $0x40] sm:$0xff]
    %v1008 = vld [vmem:[%s998 + $0x48] sm:$0xff]
    %v1009 = vld [vmem:[%s998 + $0x50] sm:$0xff]
    %v1010 = vld [vmem:[%s998 + $0x58] sm:$0xff]
    %v1011 = vld [vmem:[%s998 + $0x60] sm:$0xff]
    %v1012 = vld [vmem:[%s998 + $0x68] sm:$0xff]
    %v1013 = vld [vmem:[%s998 + $0x70] sm:$0xff]
    %v1014 = vld [vmem:[%s998 + $0x78] sm:$0xff]
    %v1015 = vld [vmem:[%s998 + $0x80] sm:$0xff]
    %v1016 = vld [vmem:[%s998 + $0x88] sm:$0xff]
    %v1017 = vld [vmem:[%s998 + $0x90] sm:$0xff]
    %v1018 = vld [vmem:[%s998 + $0x98] sm:$0xff]
    %v1019 = vld [vmem:[%s998 + $0xa0] sm:$0xff]
    %v1020 = vld [vmem:[%s998 + $0xa8] sm:$0xff]
    %v1021 = vld [vmem:[%s998 + $0xb0] sm:$0xff]
    %v1022 = vld [vmem:[%s998 + $0xb8] sm:$0xff]
    %v1023 = vld [vmem:[%s998 + $0xc0] sm:$0xff]
    %v1024 = vld [vmem:[%s998 + $0xc8] sm:$0xff]
    %v1025 = vld [vmem:[%s998 + $0xd0] sm:$0xff]
    %v1026 = vld [vmem:[%s998 + $0xd8] sm:$0xff]
    %v1027 = vld [vmem:[%s998 + $0xe0] sm:$0xff]
    %v1028 = vld [vmem:[%s998 + $0xe8] sm:$0xff]
    %v1029 = vld [vmem:[%s998 + $0xf0] sm:$0xff]
    %v1030 = vld [vmem:[%s998 + $0xf8] sm:$0xff]
    %s1031 = scalar_lea.vmem [#allocation7], 320
    %v1032 = vld [vmem:[%s1031] sm:$0xff]
    %v1033 = vld [vmem:[%s1031 + $0x8] sm:$0xff]
    %v1034 = vld [vmem:[%s1031 + $0x10] sm:$0xff]
    %v1035 = vld [vmem:[%s1031 + $0x18] sm:$0xff]
    %v1036 = vld [vmem:[%s1031 + $0x20] sm:$0xff]
    %v1037 = vld [vmem:[%s1031 + $0x28] sm:$0xff]
    %v1038 = vld [vmem:[%s1031 + $0x30] sm:$0xff]
    %v1039 = vld [vmem:[%s1031 + $0x38] sm:$0xff]
    %v1040 = vld [vmem:[%s1031 + $0x40] sm:$0xff]
    %v1041 = vld [vmem:[%s1031 + $0x48] sm:$0xff]
    %v1042 = vld [vmem:[%s1031 + $0x50] sm:$0xff]
    %v1043 = vld [vmem:[%s1031 + $0x58] sm:$0xff]
    %v1044 = vld [vmem:[%s1031 + $0x60] sm:$0xff]
    %v1045 = vld [vmem:[%s1031 + $0x68] sm:$0xff]
    %v1046 = vld [vmem:[%s1031 + $0x70] sm:$0xff]
    %v1047 = vld [vmem:[%s1031 + $0x78] sm:$0xff]
    %v1048 = vld [vmem:[%s1031 + $0x80] sm:$0xff]
    %v1049 = vld [vmem:[%s1031 + $0x88] sm:$0xff]
    %v1050 = vld [vmem:[%s1031 + $0x90] sm:$0xff]
    %v1051 = vld [vmem:[%s1031 + $0x98] sm:$0xff]
    %v1053 = vsel %vm116, %v999, 0
    %v1056 = vsel %vm116, %v1000, 0
    %v1059 = vsel %vm116, %v1001, 0
    %v1062 = vsel %vm116, %v1002, 0
    %v1065 = vsel %vm116, %v1003, 0
    %v1068 = vsel %vm116, %v1004, 0
    %v1071 = vsel %vm116, %v1005, 0
    %v1074 = vsel %vm116, %v1006, 0
    %v1077 = vsel %vm116, %v1007, 0
    %v1080 = vsel %vm116, %v1008, 0
    %v1083 = vsel %vm116, %v1009, 0
    %v1086 = vsel %vm116, %v1010, 0
    %v1089 = vsel %vm116, %v1011, 0
    %v1092 = vsel %vm116, %v1012, 0
    %v1095 = vsel %vm116, %v1013, 0
    %v1098 = vsel %vm116, %v1014, 0
    %v1101 = vsel %vm116, %v1015, 0
    %v1104 = vsel %vm116, %v1016, 0
    %v1107 = vsel %vm116, %v1017, 0
    %v1110 = vsel %vm116, %v1018, 0
    %v1113 = vsel %vm116, %v1019, 0
    %v1116 = vsel %vm116, %v1020, 0
    %v1119 = vsel %vm116, %v1021, 0
    %v1122 = vsel %vm116, %v1022, 0
    %v1125 = vsel %vm116, %v1023, 0
    %v1128 = vsel %vm116, %v1024, 0
    %v1131 = vsel %vm116, %v1025, 0
    %v1134 = vsel %vm116, %v1026, 0
    %v1137 = vsel %vm116, %v1027, 0
    %v1140 = vsel %vm116, %v1028, 0
    %v1143 = vsel %vm116, %v1029, 0
    %v1146 = vsel %vm116, %v1030, 0
    %1148 = vmatprep.subr.mxu0 %v1033
    %1149 = vmatpush1.msra.mxu0 %v1032
    %1150 = vmatprep.subr.mxu0 %v1035
    %1151 = vmatpush1.msra.mxu0 %v1034
    %1152 = vmatprep.subr.mxu0 %v1037
    %1153 = vmatpush1.msra.mxu0 %v1036
    %1154 = vmatprep.subr.mxu0 %v1039
    %1155 = vmatpush1.msra.mxu0 %v1038
    %1156 = vmatprep.subr.mxu0 %v1041
    %1157 = vmatpush1.msra.mxu0 %v1040
    %1158 = vmatprep.subr.mxu0 %v1043
    %1159 = vmatpush1.msra.mxu0 %v1042
    %1160 = vmatprep.subr.mxu0 %v1045
    %1161 = vmatpush1.msra.mxu0 %v1044
    %1162 = vmatprep.subr.mxu0 %v1047
    %1163 = vmatpush1.msra.mxu0 %v1046
    %1164 = vmatprep.subr.mxu0 %v1049
    %1165 = vmatpush1.msra.mxu0 %v1048
    %1166 = vmatprep.subr.mxu0 %v1051
    %1167 = vmatpush1.msra.mxu0 %v1050
    %1168 = vmatprep.subr.mxu0 0.0
    %1169 = vmatpush1.msra.mxu0 0.0
    %1170 = vmatprep.subr.mxu0 0.0
    %1171 = vmatpush1.msra.mxu0 0.0
    %1172 = vmatprep.subr.mxu0 0.0
    %1173 = vmatpush1.msra.mxu0 0.0
    %1174 = vmatprep.subr.mxu0 0.0
    %1175 = vmatpush1.msra.mxu0 0.0
    %1176 = vmatprep.subr.mxu0 0.0
    %1177 = vmatpush1.msra.mxu0 0.0
    %1178 = vmatprep.subr.mxu0 0.0
    %1179 = vmatpush1.msra.mxu0 0.0
    %1180 = vmatprep.subr.mxu0 0.0
    %1181 = vmatpush1.msra.mxu0 0.0
    %1182 = vmatprep.subr.mxu0 0.0
    %1183 = vmatpush1.msra.mxu0 0.0
    %1184 = vmatprep.subr.mxu0 0.0
    %1185 = vmatpush1.msra.mxu0 0.0
    %1186 = vmatprep.subr.mxu0 0.0
    %1187 = vmatpush1.msra.mxu0 0.0
    %1188 = vmatprep.subr.mxu0 0.0
    %1189 = vmatpush1.msra.mxu0 0.0
    %1190 = vmatprep.subr.mxu0 0.0
    %1191 = vmatpush1.msra.mxu0 0.0
    %1192 = vmatprep.subr.mxu0 0.0
    %1193 = vmatpush1.msra.mxu0 0.0
    %1194 = vmatprep.subr.mxu0 0.0
    %1195 = vmatpush1.msra.mxu0 0.0
    %1196 = vmatprep.subr.mxu0 0.0
    %1197 = vmatpush1.msra.mxu0 0.0
    %1198 = vmatprep.subr.mxu0 0.0
    %1199 = vmatpush1.msra.mxu0 0.0
    %1200 = vmatprep.subr.mxu0 0.0
    %1201 = vmatpush1.msra.mxu0 0.0
    %1202 = vmatprep.subr.mxu0 0.0
    %1203 = vmatpush1.msra.mxu0 0.0
    %1204 = vmatprep.subr.mxu0 0.0
    %1205 = vmatpush1.msra.mxu0 0.0
    %1206 = vmatprep.subr.mxu0 0.0
    %1207 = vmatpush1.msra.mxu0 0.0
    %1208 = vmatprep.subr.mxu0 0.0
    %1209 = vmatpush1.msra.mxu0 0.0
    %1210 = vmatprep.subr.mxu0 0.0
    %1211 = vmatpush1.msra.mxu0 0.0
    %1212 = vmatprep.mubr.f32.mxu0 0.0
    %1213 = vmatmul.mubr.f32.gmra.mrb[0].mxu0 %v1053
    %v1214 = vpop.f32.mrb[0].mxu0
    %v1215 = vadd.f32 0.0, %v1214
    %v1216 = vpop.f32.mrb[0].mxu0
    %v1217 = vadd.f32 0.0, %v1216
    %1218 = vmatprep.mubr.f32.mxu0 0.0
    %1219 = vmatmul.mubr.f32.gmra.mrb[0].mxu0 %v1056
    %v1220 = vpop.f32.mrb[0].mxu0
    %v1221 = vadd.f32 0.0, %v1220
    %v1222 = vpop.f32.mrb[0].mxu0
    %v1223 = vadd.f32 0.0, %v1222
    %1224 = vmatprep.mubr.f32.mxu0 0.0
    %1225 = vmatmul.mubr.f32.gmra.mrb[0].mxu0 %v1059
    %v1226 = vpop.f32.mrb[0].mxu0
    %v1227 = vadd.f32 0.0, %v1226
    %v1228 = vpop.f32.mrb[0].mxu0
    %v1229 = vadd.f32 0.0, %v1228
    %1230 = vmatprep.mubr.f32.mxu0 0.0
    %1231 = vmatmul.mubr.f32.gmra.mrb[0].mxu0 %v1062
    %v1232 = vpop.f32.mrb[0].mxu0
    %v1233 = vadd.f32 0.0, %v1232
    %v1234 = vpop.f32.mrb[0].mxu0
    %v1235 = vadd.f32 0.0, %v1234
    %1236 = vmatprep.mubr.f32.mxu0 0.0
    %1237 = vmatmul.mubr.f32.gmra.mrb[0].mxu0 %v1065
    %v1238 = vpop.f32.mrb[0].mxu0
    %v1239 = vadd.f32 0.0, %v1238
    %v1240 = vpop.f32.mrb[0].mxu0
    %v1241 = vadd.f32 0.0, %v1240
    %1242 = vmatprep.mubr.f32.mxu0 0.0
    %1243 = vmatmul.mubr.f32.gmra.mrb[0].mxu0 %v1068
    %v1244 = vpop.f32.mrb[0].mxu0
    %v1245 = vadd.f32 0.0, %v1244
    %v1246 = vpop.f32.mrb[0].mxu0
    %v1247 = vadd.f32 0.0, %v1246
    %1248 = vmatprep.mubr.f32.mxu0 0.0
    %1249 = vmatmul.mubr.f32.gmra.mrb[0].mxu0 %v1071
    %v1250 = vpop.f32.mrb[0].mxu0
    %v1251 = vadd.f32 0.0, %v1250
    %v1252 = vpop.f32.mrb[0].mxu0
    %v1253 = vadd.f32 0.0, %v1252
    %1254 = vmatprep.mubr.f32.mxu0 0.0
    %1255 = vmatmul.mubr.f32.gmra.mrb[0].mxu0 %v1074
    %v1256 = vpop.f32.mrb[0].mxu0
    %v1257 = vadd.f32 0.0, %v1256
    %v1258 = vpop.f32.mrb[0].mxu0
    %v1259 = vadd.f32 0.0, %v1258
    %1260 = vmatprep.mubr.f32.mxu0 0.0
    %1261 = vmatmul.mubr.f32.gmra.mrb[0].mxu0 %v1077
    %v1262 = vpop.f32.mrb[0].mxu0
    %v1263 = vadd.f32 0.0, %v1262
    %v1264 = vpop.f32.mrb[0].mxu0
    %v1265 = vadd.f32 0.0, %v1264
    %1266 = vmatprep.mubr.f32.mxu0 0.0
    %1267 = vmatmul.mubr.f32.gmra.mrb[0].mxu0 %v1080
    %v1268 = vpop.f32.mrb[0].mxu0
    %v1269 = vadd.f32 0.0, %v1268
    %v1270 = vpop.f32.mrb[0].mxu0
    %v1271 = vadd.f32 0.0, %v1270
    %1272 = vmatprep.mubr.f32.mxu0 0.0
    %1273 = vmatmul.mubr.f32.gmra.mrb[0].mxu0 %v1083
    %v1274 = vpop.f32.mrb[0].mxu0
    %v1275 = vadd.f32 0.0, %v1274
    %v1276 = vpop.f32.mrb[0].mxu0
    %v1277 = vadd.f32 0.0, %v1276
    %1278 = vmatprep.mubr.f32.mxu0 0.0
    %1279 = vmatmul.mubr.f32.gmra.mrb[0].mxu0 %v1086
    %v1280 = vpop.f32.mrb[0].mxu0
    %v1281 = vadd.f32 0.0, %v1280
    %v1282 = vpop.f32.mrb[0].mxu0
    %v1283 = vadd.f32 0.0, %v1282
    %1284 = vmatprep.mubr.f32.mxu0 0.0
    %1285 = vmatmul.mubr.f32.gmra.mrb[0].mxu0 %v1089
    %v1286 = vpop.f32.mrb[0].mxu0
    %v1287 = vadd.f32 0.0, %v1286
    %v1288 = vpop.f32.mrb[0].mxu0
    %v1289 = vadd.f32 0.0, %v1288
    %1290 = vmatprep.mubr.f32.mxu0 0.0
    %1291 = vmatmul.mubr.f32.gmra.mrb[0].mxu0 %v1092
    %v1292 = vpop.f32.mrb[0].mxu0
    %v1293 = vadd.f32 0.0, %v1292
    %v1294 = vpop.f32.mrb[0].mxu0
    %v1295 = vadd.f32 0.0, %v1294
    %1296 = vmatprep.mubr.f32.mxu0 0.0
    %1297 = vmatmul.mubr.f32.gmra.mrb[0].mxu0 %v1095
    %v1298 = vpop.f32.mrb[0].mxu0
    %v1299 = vadd.f32 0.0, %v1298
    %v1300 = vpop.f32.mrb[0].mxu0
    %v1301 = vadd.f32 0.0, %v1300
    %1302 = vmatprep.mubr.f32.mxu0 0.0
    %1303 = vmatmul.mubr.f32.gmra.mrb[0].mxu0 %v1098
    %v1304 = vpop.f32.mrb[0].mxu0
    %v1305 = vadd.f32 0.0, %v1304
    %v1306 = vpop.f32.mrb[0].mxu0
    %v1307 = vadd.f32 0.0, %v1306
    %1308 = vmatprep.mubr.f32.mxu0 0.0
    %1309 = vmatmul.mubr.f32.gmra.mrb[0].mxu0 %v1101
    %v1310 = vpop.f32.mrb[0].mxu0
    %v1311 = vadd.f32 0.0, %v1310
    %v1312 = vpop.f32.mrb[0].mxu0
    %v1313 = vadd.f32 0.0, %v1312
    %1314 = vmatprep.mubr.f32.mxu0 0.0
    %1315 = vmatmul.mubr.f32.gmra.mrb[0].mxu0 %v1104
    %v1316 = vpop.f32.mrb[0].mxu0
    %v1317 = vadd.f32 0.0, %v1316
    %v1318 = vpop.f32.mrb[0].mxu0
    %v1319 = vadd.f32 0.0, %v1318
    %1320 = vmatprep.mubr.f32.mxu0 0.0
    %1321 = vmatmul.mubr.f32.gmra.mrb[0].mxu0 %v1107
    %v1322 = vpop.f32.mrb[0].mxu0
    %v1323 = vadd.f32 0.0, %v1322
    %v1324 = vpop.f32.mrb[0].mxu0
    %v1325 = vadd.f32 0.0, %v1324
    %1326 = vmatprep.mubr.f32.mxu0 0.0
    %1327 = vmatmul.mubr.f32.gmra.mrb[0].mxu0 %v1110
    %v1328 = vpop.f32.mrb[0].mxu0
    %v1329 = vadd.f32 0.0, %v1328
    %v1330 = vpop.f32.mrb[0].mxu0
    %v1331 = vadd.f32 0.0, %v1330
    %1332 = vmatprep.mubr.f32.mxu0 0.0
    %1333 = vmatmul.mubr.f32.gmra.mrb[0].mxu0 %v1113
    %v1334 = vpop.f32.mrb[0].mxu0
    %v1335 = vadd.f32 0.0, %v1334
    %v1336 = vpop.f32.mrb[0].mxu0
    %v1337 = vadd.f32 0.0, %v1336
    %1338 = vmatprep.mubr.f32.mxu0 0.0
    %1339 = vmatmul.mubr.f32.gmra.mrb[0].mxu0 %v1116
    %v1340 = vpop.f32.mrb[0].mxu0
    %v1341 = vadd.f32 0.0, %v1340
    %v1342 = vpop.f32.mrb[0].mxu0
    %v1343 = vadd.f32 0.0, %v1342
    %1344 = vmatprep.mubr.f32.mxu0 0.0
    %1345 = vmatmul.mubr.f32.gmra.mrb[0].mxu0 %v1119
    %v1346 = vpop.f32.mrb[0].mxu0
    %v1347 = vadd.f32 0.0, %v1346
    %v1348 = vpop.f32.mrb[0].mxu0
    %v1349 = vadd.f32 0.0, %v1348
    %1350 = vmatprep.mubr.f32.mxu0 0.0
    %1351 = vmatmul.mubr.f32.gmra.mrb[0].mxu0 %v1122
    %v1352 = vpop.f32.mrb[0].mxu0
    %v1353 = vadd.f32 0.0, %v1352
    %v1354 = vpop.f32.mrb[0].mxu0
    %v1355 = vadd.f32 0.0, %v1354
    %1356 = vmatprep.mubr.f32.mxu0 0.0
    %1357 = vmatmul.mubr.f32.gmra.mrb[0].mxu0 %v1125
    %v1358 = vpop.f32.mrb[0].mxu0
    %v1359 = vadd.f32 0.0, %v1358
    %v1360 = vpop.f32.mrb[0].mxu0
    %v1361 = vadd.f32 0.0, %v1360
    %1362 = vmatprep.mubr.f32.mxu0 0.0
    %1363 = vmatmul.mubr.f32.gmra.mrb[0].mxu0 %v1128
    %v1364 = vpop.f32.mrb[0].mxu0
    %v1365 = vadd.f32 0.0, %v1364
    %v1366 = vpop.f32.mrb[0].mxu0
    %v1367 = vadd.f32 0.0, %v1366
    %1368 = vmatprep.mubr.f32.mxu0 0.0
    %1369 = vmatmul.mubr.f32.gmra.mrb[0].mxu0 %v1131
    %v1370 = vpop.f32.mrb[0].mxu0
    %v1371 = vadd.f32 0.0, %v1370
    %v1372 = vpop.f32.mrb[0].mxu0
    %v1373 = vadd.f32 0.0, %v1372
    %1374 = vmatprep.mubr.f32.mxu0 0.0
    %1375 = vmatmul.mubr.f32.gmra.mrb[0].mxu0 %v1134
    %v1376 = vpop.f32.mrb[0].mxu0
    %v1377 = vadd.f32 0.0, %v1376
    %v1378 = vpop.f32.mrb[0].mxu0
    %v1379 = vadd.f32 0.0, %v1378
    %1380 = vmatprep.mubr.f32.mxu0 0.0
    %1381 = vmatmul.mubr.f32.gmra.mrb[0].mxu0 %v1137
    %v1382 = vpop.f32.mrb[0].mxu0
    %v1383 = vadd.f32 0.0, %v1382
    %v1384 = vpop.f32.mrb[0].mxu0
    %v1385 = vadd.f32 0.0, %v1384
    %1386 = vmatprep.mubr.f32.mxu0 0.0
    %1387 = vmatmul.mubr.f32.gmra.mrb[0].mxu0 %v1140
    %v1388 = vpop.f32.mrb[0].mxu0
    %v1389 = vadd.f32 0.0, %v1388
    %v1390 = vpop.f32.mrb[0].mxu0
    %v1391 = vadd.f32 0.0, %v1390
    %1392 = vmatprep.mubr.f32.mxu0 0.0
    %1393 = vmatmul.mubr.f32.gmra.mrb[0].mxu0 %v1143
    %v1394 = vpop.f32.mrb[0].mxu0
    %v1395 = vadd.f32 0.0, %v1394
    %v1396 = vpop.f32.mrb[0].mxu0
    %v1397 = vadd.f32 0.0, %v1396
    %1398 = vmatprep.mubr.f32.mxu0 0.0
    %1399 = vmatmul.mubr.f32.gmra.mrb[0].mxu0 %v1146
    %v1400 = vpop.f32.mrb[0].mxu0
    %v1401 = vadd.f32 0.0, %v1400
    %v1402 = vpop.f32.mrb[0].mxu0
    %v1403 = vadd.f32 0.0, %v1402
    %1404 = vdwg.mxu0
    %v1405 = vadd.f32 %v808, %v1215
    %v1406 = vadd.f32 %v810, %v1217
    %v1407 = vadd.f32 %v814, %v1221
    %v1408 = vadd.f32 %v816, %v1223
    %v1409 = vadd.f32 %v820, %v1227
    %v1410 = vadd.f32 %v822, %v1229
    %v1411 = vadd.f32 %v826, %v1233
    %v1412 = vadd.f32 %v828, %v1235
    %v1413 = vadd.f32 %v832, %v1239
    %v1414 = vadd.f32 %v834, %v1241
    %v1415 = vadd.f32 %v838, %v1245
    %v1416 = vadd.f32 %v840, %v1247
    %v1417 = vadd.f32 %v844, %v1251
    %v1418 = vadd.f32 %v846, %v1253
    %v1419 = vadd.f32 %v850, %v1257
    %v1420 = vadd.f32 %v852, %v1259
    %v1421 = vadd.f32 %v856, %v1263
    %v1422 = vadd.f32 %v858, %v1265
    %v1423 = vadd.f32 %v862, %v1269
    %v1424 = vadd.f32 %v864, %v1271
    %v1425 = vadd.f32 %v868, %v1275
    %v1426 = vadd.f32 %v870, %v1277
    %v1427 = vadd.f32 %v874, %v1281
    %v1428 = vadd.f32 %v876, %v1283
    %v1429 = vadd.f32 %v880, %v1287
    %v1430 = vadd.f32 %v882, %v1289
    %v1431 = vadd.f32 %v886, %v1293
    %v1432 = vadd.f32 %v888, %v1295
    %v1433 = vadd.f32 %v892, %v1299
    %v1434 = vadd.f32 %v894, %v1301
    %v1435 = vadd.f32 %v898, %v1305
    %v1436 = vadd.f32 %v900, %v1307
    %v1437 = vadd.f32 %v904, %v1311
    %v1438 = vadd.f32 %v906, %v1313
    %v1439 = vadd.f32 %v910, %v1317
    %v1440 = vadd.f32 %v912, %v1319
    %v1441 = vadd.f32 %v916, %v1323
    %v1442 = vadd.f32 %v918, %v1325
    %v1443 = vadd.f32 %v922, %v1329
    %v1444 = vadd.f32 %v924, %v1331
    %v1445 = vadd.f32 %v928, %v1335
    %v1446 = vadd.f32 %v930, %v1337
    %v1447 = vadd.f32 %v934, %v1341
    %v1448 = vadd.f32 %v936, %v1343
    %v1449 = vadd.f32 %v940, %v1347
    %v1450 = vadd.f32 %v942, %v1349
    %v1451 = vadd.f32 %v946, %v1353
    %v1452 = vadd.f32 %v948, %v1355
    %v1453 = vadd.f32 %v952, %v1359
    %v1454 = vadd.f32 %v954, %v1361
    %v1455 = vadd.f32 %v958, %v1365
    %v1456 = vadd.f32 %v960, %v1367
    %v1457 = vadd.f32 %v964, %v1371
    %v1458 = vadd.f32 %v966, %v1373
    %v1459 = vadd.f32 %v970, %v1377
    %v1460 = vadd.f32 %v972, %v1379
    %v1461 = vadd.f32 %v976, %v1383
    %v1462 = vadd.f32 %v978, %v1385
    %v1463 = vadd.f32 %v982, %v1389
    %v1464 = vadd.f32 %v984, %v1391
    %v1465 = vadd.f32 %v988, %v1395
    %v1466 = vadd.f32 %v990, %v1397
    %v1467 = vadd.f32 %v994, %v1401
    %v1468 = vadd.f32 %v996, %v1403
    %v1469 = vld [vmem:[#allocation9] sm:$0x3]
    %v1471 = vlaneseq
    %v1472 = vshrl.u32 %v1471, 7
    %v1473 = vsub.s32 0, %v1472
    %v1474 = vrot.slane %v1469, %v1473
    %v1475 = vlaneseq
    %v1476 = vshrl.u32 %v1475, 7
    %v1477 = vsub.s32 1, %v1476
    %v1478 = vrot.slane %v1469, %v1477
    %v1481 = vadd.f32 %v1405, %v1474
    %v1482 = vadd.f32 %v1406, %v1478
    %v1483 = vadd.f32 %v1407, %v1474
    %v1484 = vadd.f32 %v1408, %v1478
    %v1485 = vadd.f32 %v1409, %v1474
    %v1486 = vadd.f32 %v1410, %v1478
    %v1487 = vadd.f32 %v1411, %v1474
    %v1488 = vadd.f32 %v1412, %v1478
    %v1489 = vadd.f32 %v1413, %v1474
    %v1490 = vadd.f32 %v1414, %v1478
    %v1491 = vadd.f32 %v1415, %v1474
    %v1492 = vadd.f32 %v1416, %v1478
    %v1493 = vadd.f32 %v1417, %v1474
    %v1494 = vadd.f32 %v1418, %v1478
    %v1495 = vadd.f32 %v1419, %v1474
    %v1496 = vadd.f32 %v1420, %v1478
    %v1497 = vadd.f32 %v1421, %v1474
    %v1498 = vadd.f32 %v1422, %v1478
    %v1499 = vadd.f32 %v1423, %v1474
    %v1500 = vadd.f32 %v1424, %v1478
    %v1501 = vadd.f32 %v1425, %v1474
    %v1502 = vadd.f32 %v1426, %v1478
    %v1503 = vadd.f32 %v1427, %v1474
    %v1504 = vadd.f32 %v1428, %v1478
    %v1505 = vadd.f32 %v1429, %v1474
    %v1506 = vadd.f32 %v1430, %v1478
    %v1507 = vadd.f32 %v1431, %v1474
    %v1508 = vadd.f32 %v1432, %v1478
    %v1509 = vadd.f32 %v1433, %v1474
    %v1510 = vadd.f32 %v1434, %v1478
    %v1511 = vadd.f32 %v1435, %v1474
    %v1512 = vadd.f32 %v1436, %v1478
    %v1513 = vadd.f32 %v1437, %v1474
    %v1514 = vadd.f32 %v1438, %v1478
    %v1515 = vadd.f32 %v1439, %v1474
    %v1516 = vadd.f32 %v1440, %v1478
    %v1517 = vadd.f32 %v1441, %v1474
    %v1518 = vadd.f32 %v1442, %v1478
    %v1519 = vadd.f32 %v1443, %v1474
    %v1520 = vadd.f32 %v1444, %v1478
    %v1521 = vadd.f32 %v1445, %v1474
    %v1522 = vadd.f32 %v1446, %v1478
    %v1523 = vadd.f32 %v1447, %v1474
    %v1524 = vadd.f32 %v1448, %v1478
    %v1525 = vadd.f32 %v1449, %v1474
    %v1526 = vadd.f32 %v1450, %v1478
    %v1527 = vadd.f32 %v1451, %v1474
    %v1528 = vadd.f32 %v1452, %v1478
    %v1529 = vadd.f32 %v1453, %v1474
    %v1530 = vadd.f32 %v1454, %v1478
    %v1531 = vadd.f32 %v1455, %v1474
    %v1532 = vadd.f32 %v1456, %v1478
    %v1533 = vadd.f32 %v1457, %v1474
    %v1534 = vadd.f32 %v1458, %v1478
    %v1535 = vadd.f32 %v1459, %v1474
    %v1536 = vadd.f32 %v1460, %v1478
    %v1537 = vadd.f32 %v1461, %v1474
    %v1538 = vadd.f32 %v1462, %v1478
    %v1539 = vadd.f32 %v1463, %v1474
    %v1540 = vadd.f32 %v1464, %v1478
    %v1541 = vadd.f32 %v1465, %v1474
    %v1542 = vadd.f32 %v1466, %v1478
    %v1543 = vadd.f32 %v1467, %v1474
    %v1544 = vadd.f32 %v1468, %v1478
    %v1545 = vmax.f32 %v1481, 0.0
    %v1546 = vmax.f32 %v1482, 0.0
    %v1547 = vmax.f32 %v1483, 0.0
    %v1548 = vmax.f32 %v1484, 0.0
    %v1549 = vmax.f32 %v1485, 0.0
    %v1550 = vmax.f32 %v1486, 0.0
    %v1551 = vmax.f32 %v1487, 0.0
    %v1552 = vmax.f32 %v1488, 0.0
    %v1553 = vmax.f32 %v1489, 0.0
    %v1554 = vmax.f32 %v1490, 0.0
    %v1555 = vmax.f32 %v1491, 0.0
    %v1556 = vmax.f32 %v1492, 0.0
    %v1557 = vmax.f32 %v1493, 0.0
    %v1558 = vmax.f32 %v1494, 0.0
    %v1559 = vmax.f32 %v1495, 0.0
    %v1560 = vmax.f32 %v1496, 0.0
    %v1561 = vmax.f32 %v1497, 0.0
    %v1562 = vmax.f32 %v1498, 0.0
    %v1563 = vmax.f32 %v1499, 0.0
    %v1564 = vmax.f32 %v1500, 0.0
    %v1565 = vmax.f32 %v1501, 0.0
    %v1566 = vmax.f32 %v1502, 0.0
    %v1567 = vmax.f32 %v1503, 0.0
    %v1568 = vmax.f32 %v1504, 0.0
    %v1569 = vmax.f32 %v1505, 0.0
    %v1570 = vmax.f32 %v1506, 0.0
    %v1571 = vmax.f32 %v1507, 0.0
    %v1572 = vmax.f32 %v1508, 0.0
    %v1573 = vmax.f32 %v1509, 0.0
    %v1574 = vmax.f32 %v1510, 0.0
    %v1575 = vmax.f32 %v1511, 0.0
    %v1576 = vmax.f32 %v1512, 0.0
    %v1577 = vmax.f32 %v1513, 0.0
    %v1578 = vmax.f32 %v1514, 0.0
    %v1579 = vmax.f32 %v1515, 0.0
    %v1580 = vmax.f32 %v1516, 0.0
    %v1581 = vmax.f32 %v1517, 0.0
    %v1582 = vmax.f32 %v1518, 0.0
    %v1583 = vmax.f32 %v1519, 0.0
    %v1584 = vmax.f32 %v1520, 0.0
    %v1585 = vmax.f32 %v1521, 0.0
    %v1586 = vmax.f32 %v1522, 0.0
    %v1587 = vmax.f32 %v1523, 0.0
    %v1588 = vmax.f32 %v1524, 0.0
    %v1589 = vmax.f32 %v1525, 0.0
    %v1590 = vmax.f32 %v1526, 0.0
    %v1591 = vmax.f32 %v1527, 0.0
    %v1592 = vmax.f32 %v1528, 0.0
    %v1593 = vmax.f32 %v1529, 0.0
    %v1594 = vmax.f32 %v1530, 0.0
    %v1595 = vmax.f32 %v1531, 0.0
    %v1596 = vmax.f32 %v1532, 0.0
    %v1597 = vmax.f32 %v1533, 0.0
    %v1598 = vmax.f32 %v1534, 0.0
    %v1599 = vmax.f32 %v1535, 0.0
    %v1600 = vmax.f32 %v1536, 0.0
    %v1601 = vmax.f32 %v1537, 0.0
    %v1602 = vmax.f32 %v1538, 0.0
    %v1603 = vmax.f32 %v1539, 0.0
    %v1604 = vmax.f32 %v1540, 0.0
    %v1605 = vmax.f32 %v1541, 0.0
    %v1606 = vmax.f32 %v1542, 0.0
    %v1607 = vmax.f32 %v1543, 0.0
    %v1608 = vmax.f32 %v1544, 0.0
    %1609 = vst [vmem:[#allocation3] sm:$0xff] 0.0
    %1610 = vst [vmem:[#allocation3 + $0x8] sm:$0xff] 0.0
    %1611 = vst [vmem:[#allocation3 + $0x10] sm:$0xff] 0.0
    %1612 = vst [vmem:[#allocation3 + $0x18] sm:$0xff] 0.0
    %s1613 = scalar_lea.vmem [#allocation3], 544
    %1614 = vst [vmem:[%s1613] sm:$0xff] 0.0
    %1615 = vst [vmem:[%s1613 + $0x8] sm:$0xff] 0.0
    %1616 = vst [vmem:[%s1613 + $0x10] sm:$0xff] 0.0
    %1617 = vst [vmem:[%s1613 + $0x18] sm:$0xff] 0.0
    %s1618 = scalar_lea.vmem [#allocation3], 32
    %1619 = vst [vmem:[%s1618] sm:$0xff] %v1545
    %1620 = vst [vmem:[%s1618 + $0x8] sm:$0xff] %v1546
    %1621 = vst [vmem:[%s1618 + $0x10] sm:$0xff] %v1547
    %1622 = vst [vmem:[%s1618 + $0x18] sm:$0xff] %v1548
    %1623 = vst [vmem:[%s1618 + $0x20] sm:$0xff] %v1549
    %1624 = vst [vmem:[%s1618 + $0x28] sm:$0xff] %v1550
    %1625 = vst [vmem:[%s1618 + $0x30] sm:$0xff] %v1551
    %1626 = vst [vmem:[%s1618 + $0x38] sm:$0xff] %v1552
    %1627 = vst [vmem:[%s1618 + $0x40] sm:$0xff] %v1553
    %1628 = vst [vmem:[%s1618 + $0x48] sm:$0xff] %v1554
    %1629 = vst [vmem:[%s1618 + $0x50] sm:$0xff] %v1555
    %1630 = vst [vmem:[%s1618 + $0x58] sm:$0xff] %v1556
    %1631 = vst [vmem:[%s1618 + $0x60] sm:$0xff] %v1557
    %1632 = vst [vmem:[%s1618 + $0x68] sm:$0xff] %v1558
    %1633 = vst [vmem:[%s1618 + $0x70] sm:$0xff] %v1559
    %1634 = vst [vmem:[%s1618 + $0x78] sm:$0xff] %v1560
    %1635 = vst [vmem:[%s1618 + $0x80] sm:$0xff] %v1561
    %1636 = vst [vmem:[%s1618 + $0x88] sm:$0xff] %v1562
    %1637 = vst [vmem:[%s1618 + $0x90] sm:$0xff] %v1563
    %1638 = vst [vmem:[%s1618 + $0x98] sm:$0xff] %v1564
    %1639 = vst [vmem:[%s1618 + $0xa0] sm:$0xff] %v1565
    %1640 = vst [vmem:[%s1618 + $0xa8] sm:$0xff] %v1566
    %1641 = vst [vmem:[%s1618 + $0xb0] sm:$0xff] %v1567
    %1642 = vst [vmem:[%s1618 + $0xb8] sm:$0xff] %v1568
    %1643 = vst [vmem:[%s1618 + $0xc0] sm:$0xff] %v1569
    %1644 = vst [vmem:[%s1618 + $0xc8] sm:$0xff] %v1570
    %1645 = vst [vmem:[%s1618 + $0xd0] sm:$0xff] %v1571
    %1646 = vst [vmem:[%s1618 + $0xd8] sm:$0xff] %v1572
    %1647 = vst [vmem:[%s1618 + $0xe0] sm:$0xff] %v1573
    %1648 = vst [vmem:[%s1618 + $0xe8] sm:$0xff] %v1574
    %1649 = vst [vmem:[%s1618 + $0xf0] sm:$0xff] %v1575
    %1650 = vst [vmem:[%s1618 + $0xf8] sm:$0xff] %v1576
    %1651 = vst [vmem:[%s1618 + $0x100] sm:$0xff] %v1577
    %1652 = vst [vmem:[%s1618 + $0x108] sm:$0xff] %v1578
    %1653 = vst [vmem:[%s1618 + $0x110] sm:$0xff] %v1579
    %1654 = vst [vmem:[%s1618 + $0x118] sm:$0xff] %v1580
    %1655 = vst [vmem:[%s1618 + $0x120] sm:$0xff] %v1581
    %1656 = vst [vmem:[%s1618 + $0x128] sm:$0xff] %v1582
    %1657 = vst [vmem:[%s1618 + $0x130] sm:$0xff] %v1583
    %1658 = vst [vmem:[%s1618 + $0x138] sm:$0xff] %v1584
    %1659 = vst [vmem:[%s1618 + $0x140] sm:$0xff] %v1585
    %1660 = vst [vmem:[%s1618 + $0x148] sm:$0xff] %v1586
    %1661 = vst [vmem:[%s1618 + $0x150] sm:$0xff] %v1587
    %1662 = vst [vmem:[%s1618 + $0x158] sm:$0xff] %v1588
    %1663 = vst [vmem:[%s1618 + $0x160] sm:$0xff] %v1589
    %1664 = vst [vmem:[%s1618 + $0x168] sm:$0xff] %v1590
    %1665 = vst [vmem:[%s1618 + $0x170] sm:$0xff] %v1591
    %1666 = vst [vmem:[%s1618 + $0x178] sm:$0xff] %v1592
    %1667 = vst [vmem:[%s1618 + $0x180] sm:$0xff] %v1593
    %1668 = vst [vmem:[%s1618 + $0x188] sm:$0xff] %v1594
    %1669 = vst [vmem:[%s1618 + $0x190] sm:$0xff] %v1595
    %1670 = vst [vmem:[%s1618 + $0x198] sm:$0xff] %v1596
    %1671 = vst [vmem:[%s1618 + $0x1a0] sm:$0xff] %v1597
    %1672 = vst [vmem:[%s1618 + $0x1a8] sm:$0xff] %v1598
    %1673 = vst [vmem:[%s1618 + $0x1b0] sm:$0xff] %v1599
    %1674 = vst [vmem:[%s1618 + $0x1b8] sm:$0xff] %v1600
    %1675 = vst [vmem:[%s1618 + $0x1c0] sm:$0xff] %v1601
    %1676 = vst [vmem:[%s1618 + $0x1c8] sm:$0xff] %v1602
    %1677 = vst [vmem:[%s1618 + $0x1d0] sm:$0xff] %v1603
    %1678 = vst [vmem:[%s1618 + $0x1d8] sm:$0xff] %v1604
    %1679 = vst [vmem:[%s1618 + $0x1e0] sm:$0xff] %v1605
    %1680 = vst [vmem:[%s1618 + $0x1e8] sm:$0xff] %v1606
    %1681 = vst [vmem:[%s1618 + $0x1f0] sm:$0xff] %v1607
    %1682 = vst [vmem:[%s1618 + $0x1f8] sm:$0xff] %v1608
    %v1683 = vld [vmem:[#allocation3] sm:$0xff]
    %v1684 = vld [vmem:[#allocation3 + $0x8] sm:$0xff]
    %v1685 = vld [vmem:[#allocation3 + $0x10] sm:$0xff]
    %v1686 = vld [vmem:[#allocation3 + $0x18] sm:$0xff]
    %v1687 = vld [vmem:[#allocation3 + $0x20] sm:$0xff]
    %v1688 = vld [vmem:[#allocation3 + $0x28] sm:$0xff]
    %v1689 = vld [vmem:[#allocation3 + $0x30] sm:$0xff]
    %v1690 = vld [vmem:[#allocation3 + $0x38] sm:$0xff]
    %v1691 = vld [vmem:[#allocation3 + $0x40] sm:$0xff]
    %v1692 = vld [vmem:[#allocation3 + $0x48] sm:$0xff]
    %v1693 = vld [vmem:[#allocation3 + $0x50] sm:$0xff]
    %v1694 = vld [vmem:[#allocation3 + $0x58] sm:$0xff]
    %v1695 = vld [vmem:[#allocation3 + $0x60] sm:$0xff]
    %v1696 = vld [vmem:[#allocation3 + $0x68] sm:$0xff]
    %v1697 = vld [vmem:[#allocation3 + $0x70] sm:$0xff]
    %v1698 = vld [vmem:[#allocation3 + $0x78] sm:$0xff]
    %v1699 = vld [vmem:[#allocation3 + $0x80] sm:$0xff]
    %v1700 = vld [vmem:[#allocation3 + $0x88] sm:$0xff]
    %v1701 = vld [vmem:[#allocation3 + $0x90] sm:$0xff]
    %v1702 = vld [vmem:[#allocation3 + $0x98] sm:$0xff]
    %v1703 = vld [vmem:[#allocation3 + $0xa0] sm:$0xff]
    %v1704 = vld [vmem:[#allocation3 + $0xa8] sm:$0xff]
    %v1705 = vld [vmem:[#allocation3 + $0xb0] sm:$0xff]
    %v1706 = vld [vmem:[#allocation3 + $0xb8] sm:$0xff]
    %v1707 = vld [vmem:[#allocation3 + $0xc0] sm:$0xff]
    %v1708 = vld [vmem:[#allocation3 + $0xc8] sm:$0xff]
    %v1709 = vld [vmem:[#allocation3 + $0xd0] sm:$0xff]
    %v1710 = vld [vmem:[#allocation3 + $0xd8] sm:$0xff]
    %v1711 = vld [vmem:[#allocation3 + $0xe0] sm:$0xff]
    %v1712 = vld [vmem:[#allocation3 + $0xe8] sm:$0xff]
    %v1713 = vld [vmem:[#allocation3 + $0xf0] sm:$0xff]
    %v1714 = vld [vmem:[#allocation3 + $0xf8] sm:$0xff]
    %v1715 = vld [vmem:[#allocation3 + $0x100] sm:$0xff]
    %v1716 = vld [vmem:[#allocation3 + $0x108] sm:$0xff]
    %v1717 = vld [vmem:[#allocation3 + $0x110] sm:$0xff]
    %v1718 = vld [vmem:[#allocation3 + $0x118] sm:$0xff]
    %v1719 = vld [vmem:[#allocation3 + $0x120] sm:$0xff]
    %v1720 = vld [vmem:[#allocation3 + $0x128] sm:$0xff]
    %v1721 = vld [vmem:[#allocation3 + $0x130] sm:$0xff]
    %v1722 = vld [vmem:[#allocation3 + $0x138] sm:$0xff]
    %v1723 = vld [vmem:[#allocation3 + $0x140] sm:$0xff]
    %v1724 = vld [vmem:[#allocation3 + $0x148] sm:$0xff]
    %v1725 = vld [vmem:[#allocation3 + $0x150] sm:$0xff]
    %v1726 = vld [vmem:[#allocation3 + $0x158] sm:$0xff]
    %v1727 = vld [vmem:[#allocation3 + $0x160] sm:$0xff]
    %v1728 = vld [vmem:[#allocation3 + $0x168] sm:$0xff]
    %v1729 = vld [vmem:[#allocation3 + $0x170] sm:$0xff]
    %v1730 = vld [vmem:[#allocation3 + $0x178] sm:$0xff]
    %v1731 = vld [vmem:[#allocation3 + $0x180] sm:$0xff]
    %v1732 = vld [vmem:[#allocation3 + $0x188] sm:$0xff]
    %v1733 = vld [vmem:[#allocation3 + $0x190] sm:$0xff]
    %v1734 = vld [vmem:[#allocation3 + $0x198] sm:$0xff]
    %v1735 = vld [vmem:[#allocation3 + $0x1a0] sm:$0xff]
    %v1736 = vld [vmem:[#allocation3 + $0x1a8] sm:$0xff]
    %v1737 = vld [vmem:[#allocation3 + $0x1b0] sm:$0xff]
    %v1738 = vld [vmem:[#allocation3 + $0x1b8] sm:$0xff]
    %v1739 = vld [vmem:[#allocation3 + $0x1c0] sm:$0xff]
    %v1740 = vld [vmem:[#allocation3 + $0x1c8] sm:$0xff]
    %v1741 = vld [vmem:[#allocation3 + $0x1d0] sm:$0xff]
    %v1742 = vld [vmem:[#allocation3 + $0x1d8] sm:$0xff]
    %v1743 = vld [vmem:[#allocation3 + $0x1e0] sm:$0xff]
    %v1744 = vld [vmem:[#allocation3 + $0x1e8] sm:$0xff]
    %v1745 = vld [vmem:[#allocation3 + $0x1f0] sm:$0xff]
    %v1746 = vld [vmem:[#allocation3 + $0x1f8] sm:$0xff]
    %v1747 = vld [vmem:[#allocation10] sm:$0xff]
    %v1748 = vld [vmem:[#allocation10 + $0x8] sm:$0xff]
    %v1749 = vld [vmem:[#allocation10 + $0x10] sm:$0xff]
    %v1750 = vld [vmem:[#allocation10 + $0x18] sm:$0xff]
    %v1751 = vld [vmem:[#allocation10 + $0x20] sm:$0xff]
    %v1752 = vld [vmem:[#allocation10 + $0x28] sm:$0xff]
    %v1753 = vld [vmem:[#allocation10 + $0x30] sm:$0xff]
    %v1754 = vld [vmem:[#allocation10 + $0x38] sm:$0xff]
    %v1755 = vld [vmem:[#allocation10 + $0x40] sm:$0xff]
    %v1756 = vld [vmem:[#allocation10 + $0x48] sm:$0xff]
    %v1757 = vld [vmem:[#allocation10 + $0x50] sm:$0xff]
    %v1758 = vld [vmem:[#allocation10 + $0x58] sm:$0xff]
    %v1759 = vld [vmem:[#allocation10 + $0x60] sm:$0xff]
    %v1760 = vld [vmem:[#allocation10 + $0x68] sm:$0xff]
    %v1761 = vld [vmem:[#allocation10 + $0x70] sm:$0xff]
    %v1762 = vld [vmem:[#allocation10 + $0x78] sm:$0xff]
    %v1763 = vld [vmem:[#allocation10 + $0x80] sm:$0xff]
    %v1764 = vld [vmem:[#allocation10 + $0x88] sm:$0xff]
    %v1765 = vld [vmem:[#allocation10 + $0x90] sm:$0xff]
    %v1766 = vld [vmem:[#allocation10 + $0x98] sm:$0xff]
    %v1767 = vld [vmem:[#allocation10 + $0xa0] sm:$0xff]
    %v1768 = vld [vmem:[#allocation10 + $0xa8] sm:$0xff]
    %v1769 = vld [vmem:[#allocation10 + $0xb0] sm:$0xff]
    %v1770 = vld [vmem:[#allocation10 + $0xb8] sm:$0xff]
    %v1771 = vld [vmem:[#allocation10 + $0xc0] sm:$0xff]
    %v1772 = vld [vmem:[#allocation10 + $0xc8] sm:$0xff]
    %v1773 = vld [vmem:[#allocation10 + $0xd0] sm:$0xff]
    %v1774 = vld [vmem:[#allocation10 + $0xd8] sm:$0xff]
    %v1775 = vld [vmem:[#allocation10 + $0xe0] sm:$0xff]
    %v1776 = vld [vmem:[#allocation10 + $0xe8] sm:$0xff]
    %v1777 = vld [vmem:[#allocation10 + $0xf0] sm:$0xff]
    %v1778 = vld [vmem:[#allocation10 + $0xf8] sm:$0xff]
    %v1779 = vld [vmem:[#allocation10 + $0x100] sm:$0xff]
    %v1780 = vld [vmem:[#allocation10 + $0x108] sm:$0xff]
    %v1781 = vld [vmem:[#allocation10 + $0x110] sm:$0xff]
    %v1782 = vld [vmem:[#allocation10 + $0x118] sm:$0xff]
    %v1783 = vld [vmem:[#allocation10 + $0x120] sm:$0xff]
    %v1784 = vld [vmem:[#allocation10 + $0x128] sm:$0xff]
    %v1785 = vld [vmem:[#allocation10 + $0x130] sm:$0xff]
    %v1786 = vld [vmem:[#allocation10 + $0x138] sm:$0xff]
    %v1787 = vld [vmem:[#allocation10 + $0x140] sm:$0xff]
    %v1788 = vld [vmem:[#allocation10 + $0x148] sm:$0xff]
    %v1789 = vld [vmem:[#allocation10 + $0x150] sm:$0xff]
    %v1790 = vld [vmem:[#allocation10 + $0x158] sm:$0xff]
    %v1791 = vld [vmem:[#allocation10 + $0x160] sm:$0xff]
    %v1792 = vld [vmem:[#allocation10 + $0x168] sm:$0xff]
    %v1793 = vld [vmem:[#allocation10 + $0x170] sm:$0xff]
    %v1794 = vld [vmem:[#allocation10 + $0x178] sm:$0xff]
    %v1795 = vld [vmem:[#allocation10 + $0x180] sm:$0xff]
    %v1796 = vld [vmem:[#allocation10 + $0x188] sm:$0xff]
    %v1797 = vld [vmem:[#allocation10 + $0x190] sm:$0xff]
    %v1798 = vld [vmem:[#allocation10 + $0x198] sm:$0xff]
    %v1799 = vld [vmem:[#allocation10 + $0x1a0] sm:$0xff]
    %v1800 = vld [vmem:[#allocation10 + $0x1a8] sm:$0xff]
    %v1801 = vld [vmem:[#allocation10 + $0x1b0] sm:$0xff]
    %v1802 = vld [vmem:[#allocation10 + $0x1b8] sm:$0xff]
    %v1803 = vld [vmem:[#allocation10 + $0x1c0] sm:$0xff]
    %v1804 = vld [vmem:[#allocation10 + $0x1c8] sm:$0xff]
    %v1805 = vld [vmem:[#allocation10 + $0x1d0] sm:$0xff]
    %v1806 = vld [vmem:[#allocation10 + $0x1d8] sm:$0xff]
    %v1807 = vld [vmem:[#allocation10 + $0x1e0] sm:$0xff]
    %v1808 = vld [vmem:[#allocation10 + $0x1e8] sm:$0xff]
    %v1809 = vld [vmem:[#allocation10 + $0x1f0] sm:$0xff]
    %v1810 = vld [vmem:[#allocation10 + $0x1f8] sm:$0xff]
    %v1811 = vld [vmem:[#allocation10 + $0x200] sm:$0xff]
    %v1812 = vld [vmem:[#allocation10 + $0x208] sm:$0xff]
    %v1813 = vld [vmem:[#allocation10 + $0x210] sm:$0xff]
    %v1814 = vld [vmem:[#allocation10 + $0x218] sm:$0xff]
    %v1815 = vld [vmem:[#allocation10 + $0x220] sm:$0xff]
    %v1816 = vld [vmem:[#allocation10 + $0x228] sm:$0xff]
    %v1817 = vld [vmem:[#allocation10 + $0x230] sm:$0xff]
    %v1818 = vld [vmem:[#allocation10 + $0x238] sm:$0xff]
    %v1819 = vld [vmem:[#allocation10 + $0x240] sm:$0xff]
    %v1820 = vld [vmem:[#allocation10 + $0x248] sm:$0xff]
    %v1821 = vld [vmem:[#allocation10 + $0x250] sm:$0xff]
    %v1822 = vld [vmem:[#allocation10 + $0x258] sm:$0xff]
    %v1823 = vld [vmem:[#allocation10 + $0x260] sm:$0xff]
    %v1824 = vld [vmem:[#allocation10 + $0x268] sm:$0xff]
    %v1825 = vld [vmem:[#allocation10 + $0x270] sm:$0xff]
    %v1826 = vld [vmem:[#allocation10 + $0x278] sm:$0xff]
    %v1827 = vld [vmem:[#allocation10 + $0x280] sm:$0xff]
    %v1828 = vld [vmem:[#allocation10 + $0x288] sm:$0xff]
    %v1829 = vld [vmem:[#allocation10 + $0x290] sm:$0xff]
    %v1830 = vld [vmem:[#allocation10 + $0x298] sm:$0xff]
    %v1831 = vld [vmem:[#allocation10 + $0x2a0] sm:$0xff]
    %v1832 = vld [vmem:[#allocation10 + $0x2a8] sm:$0xff]
    %v1833 = vld [vmem:[#allocation10 + $0x2b0] sm:$0xff]
    %v1834 = vld [vmem:[#allocation10 + $0x2b8] sm:$0xff]
    %v1835 = vld [vmem:[#allocation10 + $0x2c0] sm:$0xff]
    %v1836 = vld [vmem:[#allocation10 + $0x2c8] sm:$0xff]
    %v1837 = vld [vmem:[#allocation10 + $0x2d0] sm:$0xff]
    %v1838 = vld [vmem:[#allocation10 + $0x2d8] sm:$0xff]
    %v1839 = vld [vmem:[#allocation10 + $0x2e0] sm:$0xff]
    %v1840 = vld [vmem:[#allocation10 + $0x2e8] sm:$0xff]
    %v1841 = vld [vmem:[#allocation10 + $0x2f0] sm:$0xff]
    %v1842 = vld [vmem:[#allocation10 + $0x2f8] sm:$0xff]
    %v1843 = vld [vmem:[#allocation10 + $0x300] sm:$0xff]
    %v1844 = vld [vmem:[#allocation10 + $0x308] sm:$0xff]
    %v1845 = vld [vmem:[#allocation10 + $0x310] sm:$0xff]
    %v1846 = vld [vmem:[#allocation10 + $0x318] sm:$0xff]
    %v1847 = vld [vmem:[#allocation10 + $0x320] sm:$0xff]
    %v1848 = vld [vmem:[#allocation10 + $0x328] sm:$0xff]
    %v1849 = vld [vmem:[#allocation10 + $0x330] sm:$0xff]
    %v1850 = vld [vmem:[#allocation10 + $0x338] sm:$0xff]
    %v1851 = vld [vmem:[#allocation10 + $0x340] sm:$0xff]
    %v1852 = vld [vmem:[#allocation10 + $0x348] sm:$0xff]
    %v1853 = vld [vmem:[#allocation10 + $0x350] sm:$0xff]
    %v1854 = vld [vmem:[#allocation10 + $0x358] sm:$0xff]
    %v1855 = vld [vmem:[#allocation10 + $0x360] sm:$0xff]
    %v1856 = vld [vmem:[#allocation10 + $0x368] sm:$0xff]
    %v1857 = vld [vmem:[#allocation10 + $0x370] sm:$0xff]
    %v1858 = vld [vmem:[#allocation10 + $0x378] sm:$0xff]
    %v1859 = vld [vmem:[#allocation10 + $0x380] sm:$0xff]
    %v1860 = vld [vmem:[#allocation10 + $0x388] sm:$0xff]
    %v1861 = vld [vmem:[#allocation10 + $0x390] sm:$0xff]
    %v1862 = vld [vmem:[#allocation10 + $0x398] sm:$0xff]
    %v1863 = vld [vmem:[#allocation10 + $0x3a0] sm:$0xff]
    %v1864 = vld [vmem:[#allocation10 + $0x3a8] sm:$0xff]
    %v1865 = vld [vmem:[#allocation10 + $0x3b0] sm:$0xff]
    %v1866 = vld [vmem:[#allocation10 + $0x3b8] sm:$0xff]
    %v1867 = vld [vmem:[#allocation10 + $0x3c0] sm:$0xff]
    %v1868 = vld [vmem:[#allocation10 + $0x3c8] sm:$0xff]
    %v1869 = vld [vmem:[#allocation10 + $0x3d0] sm:$0xff]
    %v1870 = vld [vmem:[#allocation10 + $0x3d8] sm:$0xff]
    %v1871 = vld [vmem:[#allocation10 + $0x3e0] sm:$0xff]
    %v1872 = vld [vmem:[#allocation10 + $0x3e8] sm:$0xff]
    %v1873 = vld [vmem:[#allocation10 + $0x3f0] sm:$0xff]
    %v1874 = vld [vmem:[#allocation10 + $0x3f8] sm:$0xff]
    %v1875 = vld [vmem:[%s1618] sm:$0xff]
    %v1876 = vld [vmem:[%s1618 + $0x8] sm:$0xff]
    %v1877 = vld [vmem:[%s1618 + $0x10] sm:$0xff]
    %v1878 = vld [vmem:[%s1618 + $0x18] sm:$0xff]
    %v1879 = vld [vmem:[%s1618 + $0x20] sm:$0xff]
    %v1880 = vld [vmem:[%s1618 + $0x28] sm:$0xff]
    %v1881 = vld [vmem:[%s1618 + $0x30] sm:$0xff]
    %v1882 = vld [vmem:[%s1618 + $0x38] sm:$0xff]
    %v1883 = vld [vmem:[%s1618 + $0x40] sm:$0xff]
    %v1884 = vld [vmem:[%s1618 + $0x48] sm:$0xff]
    %v1885 = vld [vmem:[%s1618 + $0x50] sm:$0xff]
    %v1886 = vld [vmem:[%s1618 + $0x58] sm:$0xff]
    %v1887 = vld [vmem:[%s1618 + $0x60] sm:$0xff]
    %v1888 = vld [vmem:[%s1618 + $0x68] sm:$0xff]
    %v1889 = vld [vmem:[%s1618 + $0x70] sm:$0xff]
    %v1890 = vld [vmem:[%s1618 + $0x78] sm:$0xff]
    %v1891 = vld [vmem:[%s1618 + $0x80] sm:$0xff]
    %v1892 = vld [vmem:[%s1618 + $0x88] sm:$0xff]
    %v1893 = vld [vmem:[%s1618 + $0x90] sm:$0xff]
    %v1894 = vld [vmem:[%s1618 + $0x98] sm:$0xff]
    %v1895 = vld [vmem:[%s1618 + $0xa0] sm:$0xff]
    %v1896 = vld [vmem:[%s1618 + $0xa8] sm:$0xff]
    %v1897 = vld [vmem:[%s1618 + $0xb0] sm:$0xff]
    %v1898 = vld [vmem:[%s1618 + $0xb8] sm:$0xff]
    %v1899 = vld [vmem:[%s1618 + $0xc0] sm:$0xff]
    %v1900 = vld [vmem:[%s1618 + $0xc8] sm:$0xff]
    %v1901 = vld [vmem:[%s1618 + $0xd0] sm:$0xff]
    %v1902 = vld [vmem:[%s1618 + $0xd8] sm:$0xff]
    %v1903 = vld [vmem:[%s1618 + $0xe0] sm:$0xff]
    %v1904 = vld [vmem:[%s1618 + $0xe8] sm:$0xff]
    %v1905 = vld [vmem:[%s1618 + $0xf0] sm:$0xff]
    %v1906 = vld [vmem:[%s1618 + $0xf8] sm:$0xff]
    %v1907 = vld [vmem:[%s1618 + $0x100] sm:$0xff]
    %v1908 = vld [vmem:[%s1618 + $0x108] sm:$0xff]
    %v1909 = vld [vmem:[%s1618 + $0x110] sm:$0xff]
    %v1910 = vld [vmem:[%s1618 + $0x118] sm:$0xff]
    %v1911 = vld [vmem:[%s1618 + $0x120] sm:$0xff]
    %v1912 = vld [vmem:[%s1618 + $0x128] sm:$0xff]
    %v1913 = vld [vmem:[%s1618 + $0x130] sm:$0xff]
    %v1914 = vld [vmem:[%s1618 + $0x138] sm:$0xff]
    %v1915 = vld [vmem:[%s1618 + $0x140] sm:$0xff]
    %v1916 = vld [vmem:[%s1618 + $0x148] sm:$0xff]
    %v1917 = vld [vmem:[%s1618 + $0x150] sm:$0xff]
    %v1918 = vld [vmem:[%s1618 + $0x158] sm:$0xff]
    %v1919 = vld [vmem:[%s1618 + $0x160] sm:$0xff]
    %v1920 = vld [vmem:[%s1618 + $0x168] sm:$0xff]
    %v1921 = vld [vmem:[%s1618 + $0x170] sm:$0xff]
    %v1922 = vld [vmem:[%s1618 + $0x178] sm:$0xff]
    %v1923 = vld [vmem:[%s1618 + $0x180] sm:$0xff]
    %v1924 = vld [vmem:[%s1618 + $0x188] sm:$0xff]
    %v1925 = vld [vmem:[%s1618 + $0x190] sm:$0xff]
    %v1926 = vld [vmem:[%s1618 + $0x198] sm:$0xff]
    %v1927 = vld [vmem:[%s1618 + $0x1a0] sm:$0xff]
    %v1928 = vld [vmem:[%s1618 + $0x1a8] sm:$0xff]
    %v1929 = vld [vmem:[%s1618 + $0x1b0] sm:$0xff]
    %v1930 = vld [vmem:[%s1618 + $0x1b8] sm:$0xff]
    %v1931 = vld [vmem:[%s1618 + $0x1c0] sm:$0xff]
    %v1932 = vld [vmem:[%s1618 + $0x1c8] sm:$0xff]
    %v1933 = vld [vmem:[%s1618 + $0x1d0] sm:$0xff]
    %v1934 = vld [vmem:[%s1618 + $0x1d8] sm:$0xff]
    %v1935 = vld [vmem:[%s1618 + $0x1e0] sm:$0xff]
    %v1936 = vld [vmem:[%s1618 + $0x1e8] sm:$0xff]
    %v1937 = vld [vmem:[%s1618 + $0x1f0] sm:$0xff]
    %v1938 = vld [vmem:[%s1618 + $0x1f8] sm:$0xff]
    %s1939 = scalar_lea.vmem [#allocation10], 1024
    %v1940 = vld [vmem:[%s1939] sm:$0xff]
    %v1941 = vld [vmem:[%s1939 + $0x8] sm:$0xff]
    %v1942 = vld [vmem:[%s1939 + $0x10] sm:$0xff]
    %v1943 = vld [vmem:[%s1939 + $0x18] sm:$0xff]
    %v1944 = vld [vmem:[%s1939 + $0x20] sm:$0xff]
    %v1945 = vld [vmem:[%s1939 + $0x28] sm:$0xff]
    %v1946 = vld [vmem:[%s1939 + $0x30] sm:$0xff]
    %v1947 = vld [vmem:[%s1939 + $0x38] sm:$0xff]
    %v1948 = vld [vmem:[%s1939 + $0x40] sm:$0xff]
    %v1949 = vld [vmem:[%s1939 + $0x48] sm:$0xff]
    %v1950 = vld [vmem:[%s1939 + $0x50] sm:$0xff]
    %v1951 = vld [vmem:[%s1939 + $0x58] sm:$0xff]
    %v1952 = vld [vmem:[%s1939 + $0x60] sm:$0xff]
    %v1953 = vld [vmem:[%s1939 + $0x68] sm:$0xff]
    %v1954 = vld [vmem:[%s1939 + $0x70] sm:$0xff]
    %v1955 = vld [vmem:[%s1939 + $0x78] sm:$0xff]
    %v1956 = vld [vmem:[%s1939 + $0x80] sm:$0xff]
    %v1957 = vld [vmem:[%s1939 + $0x88] sm:$0xff]
    %v1958 = vld [vmem:[%s1939 + $0x90] sm:$0xff]
    %v1959 = vld [vmem:[%s1939 + $0x98] sm:$0xff]
    %v1960 = vld [vmem:[%s1939 + $0xa0] sm:$0xff]
    %v1961 = vld [vmem:[%s1939 + $0xa8] sm:$0xff]
    %v1962 = vld [vmem:[%s1939 + $0xb0] sm:$0xff]
    %v1963 = vld [vmem:[%s1939 + $0xb8] sm:$0xff]
    %v1964 = vld [vmem:[%s1939 + $0xc0] sm:$0xff]
    %v1965 = vld [vmem:[%s1939 + $0xc8] sm:$0xff]
    %v1966 = vld [vmem:[%s1939 + $0xd0] sm:$0xff]
    %v1967 = vld [vmem:[%s1939 + $0xd8] sm:$0xff]
    %v1968 = vld [vmem:[%s1939 + $0xe0] sm:$0xff]
    %v1969 = vld [vmem:[%s1939 + $0xe8] sm:$0xff]
    %v1970 = vld [vmem:[%s1939 + $0xf0] sm:$0xff]
    %v1971 = vld [vmem:[%s1939 + $0xf8] sm:$0xff]
    %v1972 = vld [vmem:[%s1939 + $0x100] sm:$0xff]
    %v1973 = vld [vmem:[%s1939 + $0x108] sm:$0xff]
    %v1974 = vld [vmem:[%s1939 + $0x110] sm:$0xff]
    %v1975 = vld [vmem:[%s1939 + $0x118] sm:$0xff]
    %v1976 = vld [vmem:[%s1939 + $0x120] sm:$0xff]
    %v1977 = vld [vmem:[%s1939 + $0x128] sm:$0xff]
    %v1978 = vld [vmem:[%s1939 + $0x130] sm:$0xff]
    %v1979 = vld [vmem:[%s1939 + $0x138] sm:$0xff]
    %v1980 = vld [vmem:[%s1939 + $0x140] sm:$0xff]
    %v1981 = vld [vmem:[%s1939 + $0x148] sm:$0xff]
    %v1982 = vld [vmem:[%s1939 + $0x150] sm:$0xff]
    %v1983 = vld [vmem:[%s1939 + $0x158] sm:$0xff]
    %v1984 = vld [vmem:[%s1939 + $0x160] sm:$0xff]
    %v1985 = vld [vmem:[%s1939 + $0x168] sm:$0xff]
    %v1986 = vld [vmem:[%s1939 + $0x170] sm:$0xff]
    %v1987 = vld [vmem:[%s1939 + $0x178] sm:$0xff]
    %v1988 = vld [vmem:[%s1939 + $0x180] sm:$0xff]
    %v1989 = vld [vmem:[%s1939 + $0x188] sm:$0xff]
    %v1990 = vld [vmem:[%s1939 + $0x190] sm:$0xff]
    %v1991 = vld [vmem:[%s1939 + $0x198] sm:$0xff]
    %v1992 = vld [vmem:[%s1939 + $0x1a0] sm:$0xff]
    %v1993 = vld [vmem:[%s1939 + $0x1a8] sm:$0xff]
    %v1994 = vld [vmem:[%s1939 + $0x1b0] sm:$0xff]
    %v1995 = vld [vmem:[%s1939 + $0x1b8] sm:$0xff]
    %v1996 = vld [vmem:[%s1939 + $0x1c0] sm:$0xff]
    %v1997 = vld [vmem:[%s1939 + $0x1c8] sm:$0xff]
    %v1998 = vld [vmem:[%s1939 + $0x1d0] sm:$0xff]
    %v1999 = vld [vmem:[%s1939 + $0x1d8] sm:$0xff]
    %v2000 = vld [vmem:[%s1939 + $0x1e0] sm:$0xff]
    %v2001 = vld [vmem:[%s1939 + $0x1e8] sm:$0xff]
    %v2002 = vld [vmem:[%s1939 + $0x1f0] sm:$0xff]
    %v2003 = vld [vmem:[%s1939 + $0x1f8] sm:$0xff]
    %v2004 = vld [vmem:[%s1939 + $0x200] sm:$0xff]
    %v2005 = vld [vmem:[%s1939 + $0x208] sm:$0xff]
    %v2006 = vld [vmem:[%s1939 + $0x210] sm:$0xff]
    %v2007 = vld [vmem:[%s1939 + $0x218] sm:$0xff]
    %v2008 = vld [vmem:[%s1939 + $0x220] sm:$0xff]
    %v2009 = vld [vmem:[%s1939 + $0x228] sm:$0xff]
    %v2010 = vld [vmem:[%s1939 + $0x230] sm:$0xff]
    %v2011 = vld [vmem:[%s1939 + $0x238] sm:$0xff]
    %v2012 = vld [vmem:[%s1939 + $0x240] sm:$0xff]
    %v2013 = vld [vmem:[%s1939 + $0x248] sm:$0xff]
    %v2014 = vld [vmem:[%s1939 + $0x250] sm:$0xff]
    %v2015 = vld [vmem:[%s1939 + $0x258] sm:$0xff]
    %v2016 = vld [vmem:[%s1939 + $0x260] sm:$0xff]
    %v2017 = vld [vmem:[%s1939 + $0x268] sm:$0xff]
    %v2018 = vld [vmem:[%s1939 + $0x270] sm:$0xff]
    %v2019 = vld [vmem:[%s1939 + $0x278] sm:$0xff]
    %v2020 = vld [vmem:[%s1939 + $0x280] sm:$0xff]
    %v2021 = vld [vmem:[%s1939 + $0x288] sm:$0xff]
    %v2022 = vld [vmem:[%s1939 + $0x290] sm:$0xff]
    %v2023 = vld [vmem:[%s1939 + $0x298] sm:$0xff]
    %v2024 = vld [vmem:[%s1939 + $0x2a0] sm:$0xff]
    %v2025 = vld [vmem:[%s1939 + $0x2a8] sm:$0xff]
    %v2026 = vld [vmem:[%s1939 + $0x2b0] sm:$0xff]
    %v2027 = vld [vmem:[%s1939 + $0x2b8] sm:$0xff]
    %v2028 = vld [vmem:[%s1939 + $0x2c0] sm:$0xff]
    %v2029 = vld [vmem:[%s1939 + $0x2c8] sm:$0xff]
    %v2030 = vld [vmem:[%s1939 + $0x2d0] sm:$0xff]
    %v2031 = vld [vmem:[%s1939 + $0x2d8] sm:$0xff]
    %v2032 = vld [vmem:[%s1939 + $0x2e0] sm:$0xff]
    %v2033 = vld [vmem:[%s1939 + $0x2e8] sm:$0xff]
    %v2034 = vld [vmem:[%s1939 + $0x2f0] sm:$0xff]
    %v2035 = vld [vmem:[%s1939 + $0x2f8] sm:$0xff]
    %v2036 = vld [vmem:[%s1939 + $0x300] sm:$0xff]
    %v2037 = vld [vmem:[%s1939 + $0x308] sm:$0xff]
    %v2038 = vld [vmem:[%s1939 + $0x310] sm:$0xff]
    %v2039 = vld [vmem:[%s1939 + $0x318] sm:$0xff]
    %v2040 = vld [vmem:[%s1939 + $0x320] sm:$0xff]
    %v2041 = vld [vmem:[%s1939 + $0x328] sm:$0xff]
    %v2042 = vld [vmem:[%s1939 + $0x330] sm:$0xff]
    %v2043 = vld [vmem:[%s1939 + $0x338] sm:$0xff]
    %v2044 = vld [vmem:[%s1939 + $0x340] sm:$0xff]
    %v2045 = vld [vmem:[%s1939 + $0x348] sm:$0xff]
    %v2046 = vld [vmem:[%s1939 + $0x350] sm:$0xff]
    %v2047 = vld [vmem:[%s1939 + $0x358] sm:$0xff]
    %v2048 = vld [vmem:[%s1939 + $0x360] sm:$0xff]
    %v2049 = vld [vmem:[%s1939 + $0x368] sm:$0xff]
    %v2050 = vld [vmem:[%s1939 + $0x370] sm:$0xff]
    %v2051 = vld [vmem:[%s1939 + $0x378] sm:$0xff]
    %v2052 = vld [vmem:[%s1939 + $0x380] sm:$0xff]
    %v2053 = vld [vmem:[%s1939 + $0x388] sm:$0xff]
    %v2054 = vld [vmem:[%s1939 + $0x390] sm:$0xff]
    %v2055 = vld [vmem:[%s1939 + $0x398] sm:$0xff]
    %v2056 = vld [vmem:[%s1939 + $0x3a0] sm:$0xff]
    %v2057 = vld [vmem:[%s1939 + $0x3a8] sm:$0xff]
    %v2058 = vld [vmem:[%s1939 + $0x3b0] sm:$0xff]
    %v2059 = vld [vmem:[%s1939 + $0x3b8] sm:$0xff]
    %v2060 = vld [vmem:[%s1939 + $0x3c0] sm:$0xff]
    %v2061 = vld [vmem:[%s1939 + $0x3c8] sm:$0xff]
    %v2062 = vld [vmem:[%s1939 + $0x3d0] sm:$0xff]
    %v2063 = vld [vmem:[%s1939 + $0x3d8] sm:$0xff]
    %v2064 = vld [vmem:[%s1939 + $0x3e0] sm:$0xff]
    %v2065 = vld [vmem:[%s1939 + $0x3e8] sm:$0xff]
    %v2066 = vld [vmem:[%s1939 + $0x3f0] sm:$0xff]
    %v2067 = vld [vmem:[%s1939 + $0x3f8] sm:$0xff]
    %2068 = vmatprep.subr.mxu0 %v1941
    %2069 = vmatpush1.msra.mxu0 %v1940
    %2070 = vmatprep.subr.mxu0 %v1945
    %2071 = vmatpush1.msra.mxu0 %v1944
    %2072 = vmatprep.subr.mxu0 %v1949
    %2073 = vmatpush1.msra.mxu0 %v1948
    %2074 = vmatprep.subr.mxu0 %v1953
    %2075 = vmatpush1.msra.mxu0 %v1952
    %2076 = vmatprep.subr.mxu0 %v1957
    %2077 = vmatpush1.msra.mxu0 %v1956
    %2078 = vmatprep.subr.mxu0 %v1961
    %2079 = vmatpush1.msra.mxu0 %v1960
    %2080 = vmatprep.subr.mxu0 %v1965
    %2081 = vmatpush1.msra.mxu0 %v1964
    %2082 = vmatprep.subr.mxu0 %v1969
    %2083 = vmatpush1.msra.mxu0 %v1968
    %2084 = vmatprep.subr.mxu0 %v1973
    %2085 = vmatpush1.msra.mxu0 %v1972
    %2086 = vmatprep.subr.mxu0 %v1977
    %2087 = vmatpush1.msra.mxu0 %v1976
    %2088 = vmatprep.subr.mxu0 %v1981
    %2089 = vmatpush1.msra.mxu0 %v1980
    %2090 = vmatprep.subr.mxu0 %v1985
    %2091 = vmatpush1.msra.mxu0 %v1984
    %2092 = vmatprep.subr.mxu0 %v1989
    %2093 = vmatpush1.msra.mxu0 %v1988
    %2094 = vmatprep.subr.mxu0 %v1993
    %2095 = vmatpush1.msra.mxu0 %v1992
    %2096 = vmatprep.subr.mxu0 %v1997
    %2097 = vmatpush1.msra.mxu0 %v1996
    %2098 = vmatprep.subr.mxu0 %v2001
    %2099 = vmatpush1.msra.mxu0 %v2000
    %2100 = vmatprep.subr.mxu0 %v2005
    %2101 = vmatpush1.msra.mxu0 %v2004
    %2102 = vmatprep.subr.mxu0 %v2009
    %2103 = vmatpush1.msra.mxu0 %v2008
    %2104 = vmatprep.subr.mxu0 %v2013
    %2105 = vmatpush1.msra.mxu0 %v2012
    %2106 = vmatprep.subr.mxu0 %v2017
    %2107 = vmatpush1.msra.mxu0 %v2016
    %2108 = vmatprep.subr.mxu0 %v2021
    %2109 = vmatpush1.msra.mxu0 %v2020
    %2110 = vmatprep.subr.mxu0 %v2025
    %2111 = vmatpush1.msra.mxu0 %v2024
    %2112 = vmatprep.subr.mxu0 %v2029
    %2113 = vmatpush1.msra.mxu0 %v2028
    %2114 = vmatprep.subr.mxu0 %v2033
    %2115 = vmatpush1.msra.mxu0 %v2032
    %2116 = vmatprep.subr.mxu0 %v2037
    %2117 = vmatpush1.msra.mxu0 %v2036
    %2118 = vmatprep.subr.mxu0 %v2041
    %2119 = vmatpush1.msra.mxu0 %v2040
    %2120 = vmatprep.subr.mxu0 %v2045
    %2121 = vmatpush1.msra.mxu0 %v2044
    %2122 = vmatprep.subr.mxu0 %v2049
    %2123 = vmatpush1.msra.mxu0 %v2048
    %2124 = vmatprep.subr.mxu0 %v2053
    %2125 = vmatpush1.msra.mxu0 %v2052
    %2126 = vmatprep.subr.mxu0 %v2057
    %2127 = vmatpush1.msra.mxu0 %v2056
    %2128 = vmatprep.subr.mxu0 %v2061
    %2129 = vmatpush1.msra.mxu0 %v2060
    %2130 = vmatprep.subr.mxu0 %v2065
    %2131 = vmatpush1.msra.mxu0 %v2064
    %2132 = vmatprep.mubr.f32.mxu0 %v1876
    %2133 = vmatmul.mubr.f32.gmra.mrb[0].mxu0 %v1875
    %v2134 = vpop.f32.mrb[0].mxu0
    %v2135 = vadd.f32 0.0, %v2134
    %v2136 = vpop.f32.mrb[0].mxu0
    %v2137 = vadd.f32 0.0, %v2136
    %2138 = vmatprep.mubr.f32.mxu0 %v1878
    %2139 = vmatmul.mubr.f32.gmra.mrb[0].mxu0 %v1877
    %v2140 = vpop.f32.mrb[0].mxu0
    %v2141 = vadd.f32 0.0, %v2140
    %v2142 = vpop.f32.mrb[0].mxu0
    %v2143 = vadd.f32 0.0, %v2142
    %2144 = vmatprep.mubr.f32.mxu0 %v1880
    %2145 = vmatmul.mubr.f32.gmra.mrb[0].mxu0 %v1879
    %v2146 = vpop.f32.mrb[0].mxu0
    %v2147 = vadd.f32 0.0, %v2146
    %v2148 = vpop.f32.mrb[0].mxu0
    %v2149 = vadd.f32 0.0, %v2148
    %2150 = vmatprep.mubr.f32.mxu0 %v1882
    %2151 = vmatmul.mubr.f32.gmra.mrb[0].mxu0 %v1881
    %v2152 = vpop.f32.mrb[0].mxu0
    %v2153 = vadd.f32 0.0, %v2152
    %v2154 = vpop.f32.mrb[0].mxu0
    %v2155 = vadd.f32 0.0, %v2154
    %2156 = vmatprep.mubr.f32.mxu0 %v1884
    %2157 = vmatmul.mubr.f32.gmra.mrb[0].mxu0 %v1883
    %v2158 = vpop.f32.mrb[0].mxu0
    %v2159 = vadd.f32 0.0, %v2158
    %v2160 = vpop.f32.mrb[0].mxu0
    %v2161 = vadd.f32 0.0, %v2160
    %2162 = vmatprep.mubr.f32.mxu0 %v1886
    %2163 = vmatmul.mubr.f32.gmra.mrb[0].mxu0 %v1885
    %v2164 = vpop.f32.mrb[0].mxu0
    %v2165 = vadd.f32 0.0, %v2164
    %v2166 = vpop.f32.mrb[0].mxu0
    %v2167 = vadd.f32 0.0, %v2166
    %2168 = vmatprep.mubr.f32.mxu0 %v1888
    %2169 = vmatmul.mubr.f32.gmra.mrb[0].mxu0 %v1887
    %v2170 = vpop.f32.mrb[0].mxu0
    %v2171 = vadd.f32 0.0, %v2170
    %v2172 = vpop.f32.mrb[0].mxu0
    %v2173 = vadd.f32 0.0, %v2172
    %2174 = vmatprep.mubr.f32.mxu0 %v1890
    %2175 = vmatmul.mubr.f32.gmra.mrb[0].mxu0 %v1889
    %v2176 = vpop.f32.mrb[0].mxu0
    %v2177 = vadd.f32 0.0, %v2176
    %v2178 = vpop.f32.mrb[0].mxu0
    %v2179 = vadd.f32 0.0, %v2178
    %2180 = vmatprep.mubr.f32.mxu0 %v1892
    %2181 = vmatmul.mubr.f32.gmra.mrb[0].mxu0 %v1891
    %v2182 = vpop.f32.mrb[0].mxu0
    %v2183 = vadd.f32 0.0, %v2182
    %v2184 = vpop.f32.mrb[0].mxu0
    %v2185 = vadd.f32 0.0, %v2184
    %2186 = vmatprep.mubr.f32.mxu0 %v1894
    %2187 = vmatmul.mubr.f32.gmra.mrb[0].mxu0 %v1893
    %v2188 = vpop.f32.mrb[0].mxu0
    %v2189 = vadd.f32 0.0, %v2188
    %v2190 = vpop.f32.mrb[0].mxu0
    %v2191 = vadd.f32 0.0, %v2190
    %2192 = vmatprep.mubr.f32.mxu0 %v1896
    %2193 = vmatmul.mubr.f32.gmra.mrb[0].mxu0 %v1895
    %v2194 = vpop.f32.mrb[0].mxu0
    %v2195 = vadd.f32 0.0, %v2194
    %v2196 = vpop.f32.mrb[0].mxu0
    %v2197 = vadd.f32 0.0, %v2196
    %2198 = vmatprep.mubr.f32.mxu0 %v1898
    %2199 = vmatmul.mubr.f32.gmra.mrb[0].mxu0 %v1897
    %v2200 = vpop.f32.mrb[0].mxu0
    %v2201 = vadd.f32 0.0, %v2200
    %v2202 = vpop.f32.mrb[0].mxu0
    %v2203 = vadd.f32 0.0, %v2202
    %2204 = vmatprep.mubr.f32.mxu0 %v1900
    %2205 = vmatmul.mubr.f32.gmra.mrb[0].mxu0 %v1899
    %v2206 = vpop.f32.mrb[0].mxu0
    %v2207 = vadd.f32 0.0, %v2206
    %v2208 = vpop.f32.mrb[0].mxu0
    %v2209 = vadd.f32 0.0, %v2208
    %2210 = vmatprep.mubr.f32.mxu0 %v1902
    %2211 = vmatmul.mubr.f32.gmra.mrb[0].mxu0 %v1901
    %v2212 = vpop.f32.mrb[0].mxu0
    %v2213 = vadd.f32 0.0, %v2212
    %v2214 = vpop.f32.mrb[0].mxu0
    %v2215 = vadd.f32 0.0, %v2214
    %2216 = vmatprep.mubr.f32.mxu0 %v1904
    %2217 = vmatmul.mubr.f32.gmra.mrb[0].mxu0 %v1903
    %v2218 = vpop.f32.mrb[0].mxu0
    %v2219 = vadd.f32 0.0, %v2218
    %v2220 = vpop.f32.mrb[0].mxu0
    %v2221 = vadd.f32 0.0, %v2220
    %2222 = vmatprep.mubr.f32.mxu0 %v1906
    %2223 = vmatmul.mubr.f32.gmra.mrb[0].mxu0 %v1905
    %v2224 = vpop.f32.mrb[0].mxu0
    %v2225 = vadd.f32 0.0, %v2224
    %v2226 = vpop.f32.mrb[0].mxu0
    %v2227 = vadd.f32 0.0, %v2226
    %2228 = vmatprep.mubr.f32.mxu0 %v1908
    %2229 = vmatmul.mubr.f32.gmra.mrb[0].mxu0 %v1907
    %v2230 = vpop.f32.mrb[0].mxu0
    %v2231 = vadd.f32 0.0, %v2230
    %v2232 = vpop.f32.mrb[0].mxu0
    %v2233 = vadd.f32 0.0, %v2232
    %2234 = vmatprep.mubr.f32.mxu0 %v1910
    %2235 = vmatmul.mubr.f32.gmra.mrb[0].mxu0 %v1909
    %v2236 = vpop.f32.mrb[0].mxu0
    %v2237 = vadd.f32 0.0, %v2236
    %v2238 = vpop.f32.mrb[0].mxu0
    %v2239 = vadd.f32 0.0, %v2238
    %2240 = vmatprep.mubr.f32.mxu0 %v1912
    %2241 = vmatmul.mubr.f32.gmra.mrb[0].mxu0 %v1911
    %v2242 = vpop.f32.mrb[0].mxu0
    %v2243 = vadd.f32 0.0, %v2242
    %v2244 = vpop.f32.mrb[0].mxu0
    %v2245 = vadd.f32 0.0, %v2244
    %2246 = vmatprep.mubr.f32.mxu0 %v1914
    %2247 = vmatmul.mubr.f32.gmra.mrb[0].mxu0 %v1913
    %v2248 = vpop.f32.mrb[0].mxu0
    %v2249 = vadd.f32 0.0, %v2248
    %v2250 = vpop.f32.mrb[0].mxu0
    %v2251 = vadd.f32 0.0, %v2250
    %2252 = vmatprep.mubr.f32.mxu0 %v1916
    %2253 = vmatmul.mubr.f32.gmra.mrb[0].mxu0 %v1915
    %v2254 = vpop.f32.mrb[0].mxu0
    %v2255 = vadd.f32 0.0, %v2254
    %v2256 = vpop.f32.mrb[0].mxu0
    %v2257 = vadd.f32 0.0, %v2256
    %2258 = vmatprep.mubr.f32.mxu0 %v1918
    %2259 = vmatmul.mubr.f32.gmra.mrb[0].mxu0 %v1917
    %v2260 = vpop.f32.mrb[0].mxu0
    %v2261 = vadd.f32 0.0, %v2260
    %v2262 = vpop.f32.mrb[0].mxu0
    %v2263 = vadd.f32 0.0, %v2262
    %2264 = vmatprep.mubr.f32.mxu0 %v1920
    %2265 = vmatmul.mubr.f32.gmra.mrb[0].mxu0 %v1919
    %v2266 = vpop.f32.mrb[0].mxu0
    %v2267 = vadd.f32 0.0, %v2266
    %v2268 = vpop.f32.mrb[0].mxu0
    %v2269 = vadd.f32 0.0, %v2268
    %2270 = vmatprep.mubr.f32.mxu0 %v1922
    %2271 = vmatmul.mubr.f32.gmra.mrb[0].mxu0 %v1921
    %v2272 = vpop.f32.mrb[0].mxu0
    %v2273 = vadd.f32 0.0, %v2272
    %v2274 = vpop.f32.mrb[0].mxu0
    %v2275 = vadd.f32 0.0, %v2274
    %2276 = vmatprep.mubr.f32.mxu0 %v1924
    %2277 = vmatmul.mubr.f32.gmra.mrb[0].mxu0 %v1923
    %v2278 = vpop.f32.mrb[0].mxu0
    %v2279 = vadd.f32 0.0, %v2278
    %v2280 = vpop.f32.mrb[0].mxu0
    %v2281 = vadd.f32 0.0, %v2280
    %2282 = vmatprep.mubr.f32.mxu0 %v1926
    %2283 = vmatmul.mubr.f32.gmra.mrb[0].mxu0 %v1925
    %v2284 = vpop.f32.mrb[0].mxu0
    %v2285 = vadd.f32 0.0, %v2284
    %v2286 = vpop.f32.mrb[0].mxu0
    %v2287 = vadd.f32 0.0, %v2286
    %2288 = vmatprep.mubr.f32.mxu0 %v1928
    %2289 = vmatmul.mubr.f32.gmra.mrb[0].mxu0 %v1927
    %v2290 = vpop.f32.mrb[0].mxu0
    %v2291 = vadd.f32 0.0, %v2290
    %v2292 = vpop.f32.mrb[0].mxu0
    %v2293 = vadd.f32 0.0, %v2292
    %2294 = vmatprep.mubr.f32.mxu0 %v1930
    %2295 = vmatmul.mubr.f32.gmra.mrb[0].mxu0 %v1929
    %v2296 = vpop.f32.mrb[0].mxu0
    %v2297 = vadd.f32 0.0, %v2296
    %v2298 = vpop.f32.mrb[0].mxu0
    %v2299 = vadd.f32 0.0, %v2298
    %2300 = vmatprep.mubr.f32.mxu0 %v1932
    %2301 = vmatmul.mubr.f32.gmra.mrb[0].mxu0 %v1931
    %v2302 = vpop.f32.mrb[0].mxu0
    %v2303 = vadd.f32 0.0, %v2302
    %v2304 = vpop.f32.mrb[0].mxu0
    %v2305 = vadd.f32 0.0, %v2304
    %2306 = vmatprep.mubr.f32.mxu0 %v1934
    %2307 = vmatmul.mubr.f32.gmra.mrb[0].mxu0 %v1933
    %v2308 = vpop.f32.mrb[0].mxu0
    %v2309 = vadd.f32 0.0, %v2308
    %v2310 = vpop.f32.mrb[0].mxu0
    %v2311 = vadd.f32 0.0, %v2310
    %2312 = vmatprep.mubr.f32.mxu0 %v1936
    %2313 = vmatmul.mubr.f32.gmra.mrb[0].mxu0 %v1935
    %v2314 = vpop.f32.mrb[0].mxu0
    %v2315 = vadd.f32 0.0, %v2314
    %v2316 = vpop.f32.mrb[0].mxu0
    %v2317 = vadd.f32 0.0, %v2316
    %2318 = vmatprep.mubr.f32.mxu0 %v1938
    %2319 = vmatmul.mubr.f32.gmra.mrb[0].mxu0 %v1937
    %v2320 = vpop.f32.mrb[0].mxu0
    %v2321 = vadd.f32 0.0, %v2320
    %v2322 = vpop.f32.mrb[0].mxu0
    %v2323 = vadd.f32 0.0, %v2322
    %2324 = vdwg.mxu0
    %2325 = vmatprep.subr.mxu0 %v1943
    %2326 = vmatpush1.msra.mxu0 %v1942
    %2327 = vmatprep.subr.mxu0 %v1947
    %2328 = vmatpush1.msra.mxu0 %v1946
    %2329 = vmatprep.subr.mxu0 %v1951
    %2330 = vmatpush1.msra.mxu0 %v1950
    %2331 = vmatprep.subr.mxu0 %v1955
    %2332 = vmatpush1.msra.mxu0 %v1954
    %2333 = vmatprep.subr.mxu0 %v1959
    %2334 = vmatpush1.msra.mxu0 %v1958
    %2335 = vmatprep.subr.mxu0 %v1963
    %2336 = vmatpush1.msra.mxu0 %v1962
    %2337 = vmatprep.subr.mxu0 %v1967
    %2338 = vmatpush1.msra.mxu0 %v1966
    %2339 = vmatprep.subr.mxu0 %v1971
    %2340 = vmatpush1.msra.mxu0 %v1970
    %2341 = vmatprep.subr.mxu0 %v1975
    %2342 = vmatpush1.msra.mxu0 %v1974
    %2343 = vmatprep.subr.mxu0 %v1979
    %2344 = vmatpush1.msra.mxu0 %v1978
    %2345 = vmatprep.subr.mxu0 %v1983
    %2346 = vmatpush1.msra.mxu0 %v1982
    %2347 = vmatprep.subr.mxu0 %v1987
    %2348 = vmatpush1.msra.mxu0 %v1986
    %2349 = vmatprep.subr.mxu0 %v1991
    %2350 = vmatpush1.msra.mxu0 %v1990
    %2351 = vmatprep.subr.mxu0 %v1995
    %2352 = vmatpush1.msra.mxu0 %v1994
    %2353 = vmatprep.subr.mxu0 %v1999
    %2354 = vmatpush1.msra.mxu0 %v1998
    %2355 = vmatprep.subr.mxu0 %v2003
    %2356 = vmatpush1.msra.mxu0 %v2002
    %2357 = vmatprep.subr.mxu0 %v2007
    %2358 = vmatpush1.msra.mxu0 %v2006
    %2359 = vmatprep.subr.mxu0 %v2011
    %2360 = vmatpush1.msra.mxu0 %v2010
    %2361 = vmatprep.subr.mxu0 %v2015
    %2362 = vmatpush1.msra.mxu0 %v2014
    %2363 = vmatprep.subr.mxu0 %v2019
    %2364 = vmatpush1.msra.mxu0 %v2018
    %2365 = vmatprep.subr.mxu0 %v2023
    %2366 = vmatpush1.msra.mxu0 %v2022
    %2367 = vmatprep.subr.mxu0 %v2027
    %2368 = vmatpush1.msra.mxu0 %v2026
    %2369 = vmatprep.subr.mxu0 %v2031
    %2370 = vmatpush1.msra.mxu0 %v2030
    %2371 = vmatprep.subr.mxu0 %v2035
    %2372 = vmatpush1.msra.mxu0 %v2034
    %2373 = vmatprep.subr.mxu0 %v2039
    %2374 = vmatpush1.msra.mxu0 %v2038
    %2375 = vmatprep.subr.mxu0 %v2043
    %2376 = vmatpush1.msra.mxu0 %v2042
    %2377 = vmatprep.subr.mxu0 %v2047
    %2378 = vmatpush1.msra.mxu0 %v2046
    %2379 = vmatprep.subr.mxu0 %v2051
    %2380 = vmatpush1.msra.mxu0 %v2050
    %2381 = vmatprep.subr.mxu0 %v2055
    %2382 = vmatpush1.msra.mxu0 %v2054
    %2383 = vmatprep.subr.mxu0 %v2059
    %2384 = vmatpush1.msra.mxu0 %v2058
    %2385 = vmatprep.subr.mxu0 %v2063
    %2386 = vmatpush1.msra.mxu0 %v2062
    %2387 = vmatprep.subr.mxu0 %v2067
    %2388 = vmatpush1.msra.mxu0 %v2066
    %2389 = vmatprep.mubr.f32.mxu0 %v1876
    %2390 = vmatmul.mubr.f32.gmra.mrb[0].mxu0 %v1875
    %v2391 = vpop.f32.mrb[0].mxu0
    %v2392 = vadd.f32 0.0, %v2391
    %v2393 = vpop.f32.mrb[0].mxu0
    %v2394 = vadd.f32 0.0, %v2393
    %2395 = vmatprep.mubr.f32.mxu0 %v1878
    %2396 = vmatmul.mubr.f32.gmra.mrb[0].mxu0 %v1877
    %v2397 = vpop.f32.mrb[0].mxu0
    %v2398 = vadd.f32 0.0, %v2397
    %v2399 = vpop.f32.mrb[0].mxu0
    %v2400 = vadd.f32 0.0, %v2399
    %2401 = vmatprep.mubr.f32.mxu0 %v1880
    %2402 = vmatmul.mubr.f32.gmra.mrb[0].mxu0 %v1879
    %v2403 = vpop.f32.mrb[0].mxu0
    %v2404 = vadd.f32 0.0, %v2403
    %v2405 = vpop.f32.mrb[0].mxu0
    %v2406 = vadd.f32 0.0, %v2405
    %2407 = vmatprep.mubr.f32.mxu0 %v1882
    %2408 = vmatmul.mubr.f32.gmra.mrb[0].mxu0 %v1881
    %v2409 = vpop.f32.mrb[0].mxu0
    %v2410 = vadd.f32 0.0, %v2409
    %v2411 = vpop.f32.mrb[0].mxu0
    %v2412 = vadd.f32 0.0, %v2411
    %2413 = vmatprep.mubr.f32.mxu0 %v1884
    %2414 = vmatmul.mubr.f32.gmra.mrb[0].mxu0 %v1883
    %v2415 = vpop.f32.mrb[0].mxu0
    %v2416 = vadd.f32 0.0, %v2415
    %v2417 = vpop.f32.mrb[0].mxu0
    %v2418 = vadd.f32 0.0, %v2417
    %2419 = vmatprep.mubr.f32.mxu0 %v1886
    %2420 = vmatmul.mubr.f32.gmra.mrb[0].mxu0 %v1885
    %v2421 = vpop.f32.mrb[0].mxu0
    %v2422 = vadd.f32 0.0, %v2421
    %v2423 = vpop.f32.mrb[0].mxu0
    %v2424 = vadd.f32 0.0, %v2423
    %2425 = vmatprep.mubr.f32.mxu0 %v1888
    %2426 = vmatmul.mubr.f32.gmra.mrb[0].mxu0 %v1887
    %v2427 = vpop.f32.mrb[0].mxu0
    %v2428 = vadd.f32 0.0, %v2427
    %v2429 = vpop.f32.mrb[0].mxu0
    %v2430 = vadd.f32 0.0, %v2429
    %2431 = vmatprep.mubr.f32.mxu0 %v1890
    %2432 = vmatmul.mubr.f32.gmra.mrb[0].mxu0 %v1889
    %v2433 = vpop.f32.mrb[0].mxu0
    %v2434 = vadd.f32 0.0, %v2433
    %v2435 = vpop.f32.mrb[0].mxu0
    %v2436 = vadd.f32 0.0, %v2435
    %2437 = vmatprep.mubr.f32.mxu0 %v1892
    %2438 = vmatmul.mubr.f32.gmra.mrb[0].mxu0 %v1891
    %v2439 = vpop.f32.mrb[0].mxu0
    %v2440 = vadd.f32 0.0, %v2439
    %v2441 = vpop.f32.mrb[0].mxu0
    %v2442 = vadd.f32 0.0, %v2441
    %2443 = vmatprep.mubr.f32.mxu0 %v1894
    %2444 = vmatmul.mubr.f32.gmra.mrb[0].mxu0 %v1893
    %v2445 = vpop.f32.mrb[0].mxu0
    %v2446 = vadd.f32 0.0, %v2445
    %v2447 = vpop.f32.mrb[0].mxu0
    %v2448 = vadd.f32 0.0, %v2447
    %2449 = vmatprep.mubr.f32.mxu0 %v1896
    %2450 = vmatmul.mubr.f32.gmra.mrb[0].mxu0 %v1895
    %v2451 = vpop.f32.mrb[0].mxu0
    %v2452 = vadd.f32 0.0, %v2451
    %v2453 = vpop.f32.mrb[0].mxu0
    %v2454 = vadd.f32 0.0, %v2453
    %2455 = vmatprep.mubr.f32.mxu0 %v1898
    %2456 = vmatmul.mubr.f32.gmra.mrb[0].mxu0 %v1897
    %v2457 = vpop.f32.mrb[0].mxu0
    %v2458 = vadd.f32 0.0, %v2457
    %v2459 = vpop.f32.mrb[0].mxu0
    %v2460 = vadd.f32 0.0, %v2459
    %2461 = vmatprep.mubr.f32.mxu0 %v1900
    %2462 = vmatmul.mubr.f32.gmra.mrb[0].mxu0 %v1899
    %v2463 = vpop.f32.mrb[0].mxu0
    %v2464 = vadd.f32 0.0, %v2463
    %v2465 = vpop.f32.mrb[0].mxu0
    %v2466 = vadd.f32 0.0, %v2465
    %2467 = vmatprep.mubr.f32.mxu0 %v1902
    %2468 = vmatmul.mubr.f32.gmra.mrb[0].mxu0 %v1901
    %v2469 = vpop.f32.mrb[0].mxu0
    %v2470 = vadd.f32 0.0, %v2469
    %v2471 = vpop.f32.mrb[0].mxu0
    %v2472 = vadd.f32 0.0, %v2471
    %2473 = vmatprep.mubr.f32.mxu0 %v1904
    %2474 = vmatmul.mubr.f32.gmra.mrb[0].mxu0 %v1903
    %v2475 = vpop.f32.mrb[0].mxu0
    %v2476 = vadd.f32 0.0, %v2475
    %v2477 = vpop.f32.mrb[0].mxu0
    %v2478 = vadd.f32 0.0, %v2477
    %2479 = vmatprep.mubr.f32.mxu0 %v1906
    %2480 = vmatmul.mubr.f32.gmra.mrb[0].mxu0 %v1905
    %v2481 = vpop.f32.mrb[0].mxu0
    %v2482 = vadd.f32 0.0, %v2481
    %v2483 = vpop.f32.mrb[0].mxu0
    %v2484 = vadd.f32 0.0, %v2483
    %2485 = vmatprep.mubr.f32.mxu0 %v1908
    %2486 = vmatmul.mubr.f32.gmra.mrb[0].mxu0 %v1907
    %v2487 = vpop.f32.mrb[0].mxu0
    %v2488 = vadd.f32 0.0, %v2487
    %v2489 = vpop.f32.mrb[0].mxu0
    %v2490 = vadd.f32 0.0, %v2489
    %2491 = vmatprep.mubr.f32.mxu0 %v1910
    %2492 = vmatmul.mubr.f32.gmra.mrb[0].mxu0 %v1909
    %v2493 = vpop.f32.mrb[0].mxu0
    %v2494 = vadd.f32 0.0, %v2493
    %v2495 = vpop.f32.mrb[0].mxu0
    %v2496 = vadd.f32 0.0, %v2495
    %2497 = vmatprep.mubr.f32.mxu0 %v1912
    %2498 = vmatmul.mubr.f32.gmra.mrb[0].mxu0 %v1911
    %v2499 = vpop.f32.mrb[0].mxu0
    %v2500 = vadd.f32 0.0, %v2499
    %v2501 = vpop.f32.mrb[0].mxu0
    %v2502 = vadd.f32 0.0, %v2501
    %2503 = vmatprep.mubr.f32.mxu0 %v1914
    %2504 = vmatmul.mubr.f32.gmra.mrb[0].mxu0 %v1913
    %v2505 = vpop.f32.mrb[0].mxu0
    %v2506 = vadd.f32 0.0, %v2505
    %v2507 = vpop.f32.mrb[0].mxu0
    %v2508 = vadd.f32 0.0, %v2507
    %2509 = vmatprep.mubr.f32.mxu0 %v1916
    %2510 = vmatmul.mubr.f32.gmra.mrb[0].mxu0 %v1915
    %v2511 = vpop.f32.mrb[0].mxu0
    %v2512 = vadd.f32 0.0, %v2511
    %v2513 = vpop.f32.mrb[0].mxu0
    %v2514 = vadd.f32 0.0, %v2513
    %2515 = vmatprep.mubr.f32.mxu0 %v1918
    %2516 = vmatmul.mubr.f32.gmra.mrb[0].mxu0 %v1917
    %v2517 = vpop.f32.mrb[0].mxu0
    %v2518 = vadd.f32 0.0, %v2517
    %v2519 = vpop.f32.mrb[0].mxu0
    %v2520 = vadd.f32 0.0, %v2519
    %2521 = vmatprep.mubr.f32.mxu0 %v1920
    %2522 = vmatmul.mubr.f32.gmra.mrb[0].mxu0 %v1919
    %v2523 = vpop.f32.mrb[0].mxu0
    %v2524 = vadd.f32 0.0, %v2523
    %v2525 = vpop.f32.mrb[0].mxu0
    %v2526 = vadd.f32 0.0, %v2525
    %2527 = vmatprep.mubr.f32.mxu0 %v1922
    %2528 = vmatmul.mubr.f32.gmra.mrb[0].mxu0 %v1921
    %v2529 = vpop.f32.mrb[0].mxu0
    %v2530 = vadd.f32 0.0, %v2529
    %v2531 = vpop.f32.mrb[0].mxu0
    %v2532 = vadd.f32 0.0, %v2531
    %2533 = vmatprep.mubr.f32.mxu0 %v1924
    %2534 = vmatmul.mubr.f32.gmra.mrb[0].mxu0 %v1923
    %v2535 = vpop.f32.mrb[0].mxu0
    %v2536 = vadd.f32 0.0, %v2535
    %v2537 = vpop.f32.mrb[0].mxu0
    %v2538 = vadd.f32 0.0, %v2537
    %2539 = vmatprep.mubr.f32.mxu0 %v1926
    %2540 = vmatmul.mubr.f32.gmra.mrb[0].mxu0 %v1925
    %v2541 = vpop.f32.mrb[0].mxu0
    %v2542 = vadd.f32 0.0, %v2541
    %v2543 = vpop.f32.mrb[0].mxu0
    %v2544 = vadd.f32 0.0, %v2543
    %2545 = vmatprep.mubr.f32.mxu0 %v1928
    %2546 = vmatmul.mubr.f32.gmra.mrb[0].mxu0 %v1927
    %v2547 = vpop.f32.mrb[0].mxu0
    %v2548 = vadd.f32 0.0, %v2547
    %v2549 = vpop.f32.mrb[0].mxu0
    %v2550 = vadd.f32 0.0, %v2549
    %2551 = vmatprep.mubr.f32.mxu0 %v1930
    %2552 = vmatmul.mubr.f32.gmra.mrb[0].mxu0 %v1929
    %v2553 = vpop.f32.mrb[0].mxu0
    %v2554 = vadd.f32 0.0, %v2553
    %v2555 = vpop.f32.mrb[0].mxu0
    %v2556 = vadd.f32 0.0, %v2555
    %2557 = vmatprep.mubr.f32.mxu0 %v1932
    %2558 = vmatmul.mubr.f32.gmra.mrb[0].mxu0 %v1931
    %v2559 = vpop.f32.mrb[0].mxu0
    %v2560 = vadd.f32 0.0, %v2559
    %v2561 = vpop.f32.mrb[0].mxu0
    %v2562 = vadd.f32 0.0, %v2561
    %2563 = vmatprep.mubr.f32.mxu0 %v1934
    %2564 = vmatmul.mubr.f32.gmra.mrb[0].mxu0 %v1933
    %v2565 = vpop.f32.mrb[0].mxu0
    %v2566 = vadd.f32 0.0, %v2565
    %v2567 = vpop.f32.mrb[0].mxu0
    %v2568 = vadd.f32 0.0, %v2567
    %2569 = vmatprep.mubr.f32.mxu0 %v1936
    %2570 = vmatmul.mubr.f32.gmra.mrb[0].mxu0 %v1935
    %v2571 = vpop.f32.mrb[0].mxu0
    %v2572 = vadd.f32 0.0, %v2571
    %v2573 = vpop.f32.mrb[0].mxu0
    %v2574 = vadd.f32 0.0, %v2573
    %2575 = vmatprep.mubr.f32.mxu0 %v1938
    %2576 = vmatmul.mubr.f32.gmra.mrb[0].mxu0 %v1937
    %v2577 = vpop.f32.mrb[0].mxu0
    %v2578 = vadd.f32 0.0, %v2577
    %v2579 = vpop.f32.mrb[0].mxu0
    %v2580 = vadd.f32 0.0, %v2579
    %2581 = vdwg.mxu0
    %2582 = vmatprep.subr.mxu0 %v1748
    %2583 = vmatpush1.msra.mxu0 %v1747
    %2584 = vmatprep.subr.mxu0 %v1752
    %2585 = vmatpush1.msra.mxu0 %v1751
    %2586 = vmatprep.subr.mxu0 %v1756
    %2587 = vmatpush1.msra.mxu0 %v1755
    %2588 = vmatprep.subr.mxu0 %v1760
    %2589 = vmatpush1.msra.mxu0 %v1759
    %2590 = vmatprep.subr.mxu0 %v1764
    %2591 = vmatpush1.msra.mxu0 %v1763
    %2592 = vmatprep.subr.mxu0 %v1768
    %2593 = vmatpush1.msra.mxu0 %v1767
    %2594 = vmatprep.subr.mxu0 %v1772
    %2595 = vmatpush1.msra.mxu0 %v1771
    %2596 = vmatprep.subr.mxu0 %v1776
    %2597 = vmatpush1.msra.mxu0 %v1775
    %2598 = vmatprep.subr.mxu0 %v1780
    %2599 = vmatpush1.msra.mxu0 %v1779
    %2600 = vmatprep.subr.mxu0 %v1784
    %2601 = vmatpush1.msra.mxu0 %v1783
    %2602 = vmatprep.subr.mxu0 %v1788
    %2603 = vmatpush1.msra.mxu0 %v1787
    %2604 = vmatprep.subr.mxu0 %v1792
    %2605 = vmatpush1.msra.mxu0 %v1791
    %2606 = vmatprep.subr.mxu0 %v1796
    %2607 = vmatpush1.msra.mxu0 %v1795
    %2608 = vmatprep.subr.mxu0 %v1800
    %2609 = vmatpush1.msra.mxu0 %v1799
    %2610 = vmatprep.subr.mxu0 %v1804
    %2611 = vmatpush1.msra.mxu0 %v1803
    %2612 = vmatprep.subr.mxu0 %v1808
    %2613 = vmatpush1.msra.mxu0 %v1807
    %2614 = vmatprep.subr.mxu0 %v1812
    %2615 = vmatpush1.msra.mxu0 %v1811
    %2616 = vmatprep.subr.mxu0 %v1816
    %2617 = vmatpush1.msra.mxu0 %v1815
    %2618 = vmatprep.subr.mxu0 %v1820
    %2619 = vmatpush1.msra.mxu0 %v1819
    %2620 = vmatprep.subr.mxu0 %v1824
    %2621 = vmatpush1.msra.mxu0 %v1823
    %2622 = vmatprep.subr.mxu0 %v1828
    %2623 = vmatpush1.msra.mxu0 %v1827
    %2624 = vmatprep.subr.mxu0 %v1832
    %2625 = vmatpush1.msra.mxu0 %v1831
    %2626 = vmatprep.subr.mxu0 %v1836
    %2627 = vmatpush1.msra.mxu0 %v1835
    %2628 = vmatprep.subr.mxu0 %v1840
    %2629 = vmatpush1.msra.mxu0 %v1839
    %2630 = vmatprep.subr.mxu0 %v1844
    %2631 = vmatpush1.msra.mxu0 %v1843
    %2632 = vmatprep.subr.mxu0 %v1848
    %2633 = vmatpush1.msra.mxu0 %v1847
    %2634 = vmatprep.subr.mxu0 %v1852
    %2635 = vmatpush1.msra.mxu0 %v1851
    %2636 = vmatprep.subr.mxu0 %v1856
    %2637 = vmatpush1.msra.mxu0 %v1855
    %2638 = vmatprep.subr.mxu0 %v1860
    %2639 = vmatpush1.msra.mxu0 %v1859
    %2640 = vmatprep.subr.mxu0 %v1864
    %2641 = vmatpush1.msra.mxu0 %v1863
    %2642 = vmatprep.subr.mxu0 %v1868
    %2643 = vmatpush1.msra.mxu0 %v1867
    %2644 = vmatprep.subr.mxu0 %v1872
    %2645 = vmatpush1.msra.mxu0 %v1871
    %2646 = vmatprep.mubr.f32.mxu0 %v1684
    %2647 = vmatmul.mubr.f32.gmra.mrb[0].mxu0 %v1683
    %v2648 = vpop.f32.mrb[0].mxu0
    %v2649 = vadd.f32 %v2135, %v2648
    %v2650 = vpop.f32.mrb[0].mxu0
    %v2651 = vadd.f32 %v2137, %v2650
    %2652 = vmatprep.mubr.f32.mxu0 %v1686
    %2653 = vmatmul.mubr.f32.gmra.mrb[0].mxu0 %v1685
    %v2654 = vpop.f32.mrb[0].mxu0
    %v2655 = vadd.f32 %v2141, %v2654
    %v2656 = vpop.f32.mrb[0].mxu0
    %v2657 = vadd.f32 %v2143, %v2656
    %2658 = vmatprep.mubr.f32.mxu0 %v1688
    %2659 = vmatmul.mubr.f32.gmra.mrb[0].mxu0 %v1687
    %v2660 = vpop.f32.mrb[0].mxu0
    %v2661 = vadd.f32 %v2147, %v2660
    %v2662 = vpop.f32.mrb[0].mxu0
    %v2663 = vadd.f32 %v2149, %v2662
    %2664 = vmatprep.mubr.f32.mxu0 %v1690
    %2665 = vmatmul.mubr.f32.gmra.mrb[0].mxu0 %v1689
    %v2666 = vpop.f32.mrb[0].mxu0
    %v2667 = vadd.f32 %v2153, %v2666
    %v2668 = vpop.f32.mrb[0].mxu0
    %v2669 = vadd.f32 %v2155, %v2668
    %2670 = vmatprep.mubr.f32.mxu0 %v1692
    %2671 = vmatmul.mubr.f32.gmra.mrb[0].mxu0 %v1691
    %v2672 = vpop.f32.mrb[0].mxu0
    %v2673 = vadd.f32 %v2159, %v2672
    %v2674 = vpop.f32.mrb[0].mxu0
    %v2675 = vadd.f32 %v2161, %v2674
    %2676 = vmatprep.mubr.f32.mxu0 %v1694
    %2677 = vmatmul.mubr.f32.gmra.mrb[0].mxu0 %v1693
    %v2678 = vpop.f32.mrb[0].mxu0
    %v2679 = vadd.f32 %v2165, %v2678
    %v2680 = vpop.f32.mrb[0].mxu0
    %v2681 = vadd.f32 %v2167, %v2680
    %2682 = vmatprep.mubr.f32.mxu0 %v1696
    %2683 = vmatmul.mubr.f32.gmra.mrb[0].mxu0 %v1695
    %v2684 = vpop.f32.mrb[0].mxu0
    %v2685 = vadd.f32 %v2171, %v2684
    %v2686 = vpop.f32.mrb[0].mxu0
    %v2687 = vadd.f32 %v2173, %v2686
    %2688 = vmatprep.mubr.f32.mxu0 %v1698
    %2689 = vmatmul.mubr.f32.gmra.mrb[0].mxu0 %v1697
    %v2690 = vpop.f32.mrb[0].mxu0
    %v2691 = vadd.f32 %v2177, %v2690
    %v2692 = vpop.f32.mrb[0].mxu0
    %v2693 = vadd.f32 %v2179, %v2692
    %2694 = vmatprep.mubr.f32.mxu0 %v1700
    %2695 = vmatmul.mubr.f32.gmra.mrb[0].mxu0 %v1699
    %v2696 = vpop.f32.mrb[0].mxu0
    %v2697 = vadd.f32 %v2183, %v2696
    %v2698 = vpop.f32.mrb[0].mxu0
    %v2699 = vadd.f32 %v2185, %v2698
    %2700 = vmatprep.mubr.f32.mxu0 %v1702
    %2701 = vmatmul.mubr.f32.gmra.mrb[0].mxu0 %v1701
    %v2702 = vpop.f32.mrb[0].mxu0
    %v2703 = vadd.f32 %v2189, %v2702
    %v2704 = vpop.f32.mrb[0].mxu0
    %v2705 = vadd.f32 %v2191, %v2704
    %2706 = vmatprep.mubr.f32.mxu0 %v1704
    %2707 = vmatmul.mubr.f32.gmra.mrb[0].mxu0 %v1703
    %v2708 = vpop.f32.mrb[0].mxu0
    %v2709 = vadd.f32 %v2195, %v2708
    %v2710 = vpop.f32.mrb[0].mxu0
    %v2711 = vadd.f32 %v2197, %v2710
    %2712 = vmatprep.mubr.f32.mxu0 %v1706
    %2713 = vmatmul.mubr.f32.gmra.mrb[0].mxu0 %v1705
    %v2714 = vpop.f32.mrb[0].mxu0
    %v2715 = vadd.f32 %v2201, %v2714
    %v2716 = vpop.f32.mrb[0].mxu0
    %v2717 = vadd.f32 %v2203, %v2716
    %2718 = vmatprep.mubr.f32.mxu0 %v1708
    %2719 = vmatmul.mubr.f32.gmra.mrb[0].mxu0 %v1707
    %v2720 = vpop.f32.mrb[0].mxu0
    %v2721 = vadd.f32 %v2207, %v2720
    %v2722 = vpop.f32.mrb[0].mxu0
    %v2723 = vadd.f32 %v2209, %v2722
    %2724 = vmatprep.mubr.f32.mxu0 %v1710
    %2725 = vmatmul.mubr.f32.gmra.mrb[0].mxu0 %v1709
    %v2726 = vpop.f32.mrb[0].mxu0
    %v2727 = vadd.f32 %v2213, %v2726
    %v2728 = vpop.f32.mrb[0].mxu0
    %v2729 = vadd.f32 %v2215, %v2728
    %2730 = vmatprep.mubr.f32.mxu0 %v1712
    %2731 = vmatmul.mubr.f32.gmra.mrb[0].mxu0 %v1711
    %v2732 = vpop.f32.mrb[0].mxu0
    %v2733 = vadd.f32 %v2219, %v2732
    %v2734 = vpop.f32.mrb[0].mxu0
    %v2735 = vadd.f32 %v2221, %v2734
    %2736 = vmatprep.mubr.f32.mxu0 %v1714
    %2737 = vmatmul.mubr.f32.gmra.mrb[0].mxu0 %v1713
    %v2738 = vpop.f32.mrb[0].mxu0
    %v2739 = vadd.f32 %v2225, %v2738
    %v2740 = vpop.f32.mrb[0].mxu0
    %v2741 = vadd.f32 %v2227, %v2740
    %2742 = vmatprep.mubr.f32.mxu0 %v1716
    %2743 = vmatmul.mubr.f32.gmra.mrb[0].mxu0 %v1715
    %v2744 = vpop.f32.mrb[0].mxu0
    %v2745 = vadd.f32 %v2231, %v2744
    %v2746 = vpop.f32.mrb[0].mxu0
    %v2747 = vadd.f32 %v2233, %v2746
    %2748 = vmatprep.mubr.f32.mxu0 %v1718
    %2749 = vmatmul.mubr.f32.gmra.mrb[0].mxu0 %v1717
    %v2750 = vpop.f32.mrb[0].mxu0
    %v2751 = vadd.f32 %v2237, %v2750
    %v2752 = vpop.f32.mrb[0].mxu0
    %v2753 = vadd.f32 %v2239, %v2752
    %2754 = vmatprep.mubr.f32.mxu0 %v1720
    %2755 = vmatmul.mubr.f32.gmra.mrb[0].mxu0 %v1719
    %v2756 = vpop.f32.mrb[0].mxu0
    %v2757 = vadd.f32 %v2243, %v2756
    %v2758 = vpop.f32.mrb[0].mxu0
    %v2759 = vadd.f32 %v2245, %v2758
    %2760 = vmatprep.mubr.f32.mxu0 %v1722
    %2761 = vmatmul.mubr.f32.gmra.mrb[0].mxu0 %v1721
    %v2762 = vpop.f32.mrb[0].mxu0
    %v2763 = vadd.f32 %v2249, %v2762
    %v2764 = vpop.f32.mrb[0].mxu0
    %v2765 = vadd.f32 %v2251, %v2764
    %2766 = vmatprep.mubr.f32.mxu0 %v1724
    %2767 = vmatmul.mubr.f32.gmra.mrb[0].mxu0 %v1723
    %v2768 = vpop.f32.mrb[0].mxu0
    %v2769 = vadd.f32 %v2255, %v2768
    %v2770 = vpop.f32.mrb[0].mxu0
    %v2771 = vadd.f32 %v2257, %v2770
    %2772 = vmatprep.mubr.f32.mxu0 %v1726
    %2773 = vmatmul.mubr.f32.gmra.mrb[0].mxu0 %v1725
    %v2774 = vpop.f32.mrb[0].mxu0
    %v2775 = vadd.f32 %v2261, %v2774
    %v2776 = vpop.f32.mrb[0].mxu0
    %v2777 = vadd.f32 %v2263, %v2776
    %2778 = vmatprep.mubr.f32.mxu0 %v1728
    %2779 = vmatmul.mubr.f32.gmra.mrb[0].mxu0 %v1727
    %v2780 = vpop.f32.mrb[0].mxu0
    %v2781 = vadd.f32 %v2267, %v2780
    %v2782 = vpop.f32.mrb[0].mxu0
    %v2783 = vadd.f32 %v2269, %v2782
    %2784 = vmatprep.mubr.f32.mxu0 %v1730
    %2785 = vmatmul.mubr.f32.gmra.mrb[0].mxu0 %v1729
    %v2786 = vpop.f32.mrb[0].mxu0
    %v2787 = vadd.f32 %v2273, %v2786
    %v2788 = vpop.f32.mrb[0].mxu0
    %v2789 = vadd.f32 %v2275, %v2788
    %2790 = vmatprep.mubr.f32.mxu0 %v1732
    %2791 = vmatmul.mubr.f32.gmra.mrb[0].mxu0 %v1731
    %v2792 = vpop.f32.mrb[0].mxu0
    %v2793 = vadd.f32 %v2279, %v2792
    %v2794 = vpop.f32.mrb[0].mxu0
    %v2795 = vadd.f32 %v2281, %v2794
    %2796 = vmatprep.mubr.f32.mxu0 %v1734
    %2797 = vmatmul.mubr.f32.gmra.mrb[0].mxu0 %v1733
    %v2798 = vpop.f32.mrb[0].mxu0
    %v2799 = vadd.f32 %v2285, %v2798
    %v2800 = vpop.f32.mrb[0].mxu0
    %v2801 = vadd.f32 %v2287, %v2800
    %2802 = vmatprep.mubr.f32.mxu0 %v1736
    %2803 = vmatmul.mubr.f32.gmra.mrb[0].mxu0 %v1735
    %v2804 = vpop.f32.mrb[0].mxu0
    %v2805 = vadd.f32 %v2291, %v2804
    %v2806 = vpop.f32.mrb[0].mxu0
    %v2807 = vadd.f32 %v2293, %v2806
    %2808 = vmatprep.mubr.f32.mxu0 %v1738
    %2809 = vmatmul.mubr.f32.gmra.mrb[0].mxu0 %v1737
    %v2810 = vpop.f32.mrb[0].mxu0
    %v2811 = vadd.f32 %v2297, %v2810
    %v2812 = vpop.f32.mrb[0].mxu0
    %v2813 = vadd.f32 %v2299, %v2812
    %2814 = vmatprep.mubr.f32.mxu0 %v1740
    %2815 = vmatmul.mubr.f32.gmra.mrb[0].mxu0 %v1739
    %v2816 = vpop.f32.mrb[0].mxu0
    %v2817 = vadd.f32 %v2303, %v2816
    %v2818 = vpop.f32.mrb[0].mxu0
    %v2819 = vadd.f32 %v2305, %v2818
    %2820 = vmatprep.mubr.f32.mxu0 %v1742
    %2821 = vmatmul.mubr.f32.gmra.mrb[0].mxu0 %v1741
    %v2822 = vpop.f32.mrb[0].mxu0
    %v2823 = vadd.f32 %v2309, %v2822
    %v2824 = vpop.f32.mrb[0].mxu0
    %v2825 = vadd.f32 %v2311, %v2824
    %2826 = vmatprep.mubr.f32.mxu0 %v1744
    %2827 = vmatmul.mubr.f32.gmra.mrb[0].mxu0 %v1743
    %v2828 = vpop.f32.mrb[0].mxu0
    %v2829 = vadd.f32 %v2315, %v2828
    %v2830 = vpop.f32.mrb[0].mxu0
    %v2831 = vadd.f32 %v2317, %v2830
    %2832 = vmatprep.mubr.f32.mxu0 %v1746
    %2833 = vmatmul.mubr.f32.gmra.mrb[0].mxu0 %v1745
    %v2834 = vpop.f32.mrb[0].mxu0
    %v2835 = vadd.f32 %v2321, %v2834
    %v2836 = vpop.f32.mrb[0].mxu0
    %v2837 = vadd.f32 %v2323, %v2836
    %2838 = vdwg.mxu0
    %2839 = vmatprep.subr.mxu0 %v1750
    %2840 = vmatpush1.msra.mxu0 %v1749
    %2841 = vmatprep.subr.mxu0 %v1754
    %2842 = vmatpush1.msra.mxu0 %v1753
    %2843 = vmatprep.subr.mxu0 %v1758
    %2844 = vmatpush1.msra.mxu0 %v1757
    %2845 = vmatprep.subr.mxu0 %v1762
    %2846 = vmatpush1.msra.mxu0 %v1761
    %2847 = vmatprep.subr.mxu0 %v1766
    %2848 = vmatpush1.msra.mxu0 %v1765
    %2849 = vmatprep.subr.mxu0 %v1770
    %2850 = vmatpush1.msra.mxu0 %v1769
    %2851 = vmatprep.subr.mxu0 %v1774
    %2852 = vmatpush1.msra.mxu0 %v1773
    %2853 = vmatprep.subr.mxu0 %v1778
    %2854 = vmatpush1.msra.mxu0 %v1777
    %2855 = vmatprep.subr.mxu0 %v1782
    %2856 = vmatpush1.msra.mxu0 %v1781
    %2857 = vmatprep.subr.mxu0 %v1786
    %2858 = vmatpush1.msra.mxu0 %v1785
    %2859 = vmatprep.subr.mxu0 %v1790
    %2860 = vmatpush1.msra.mxu0 %v1789
    %2861 = vmatprep.subr.mxu0 %v1794
    %2862 = vmatpush1.msra.mxu0 %v1793
    %2863 = vmatprep.subr.mxu0 %v1798
    %2864 = vmatpush1.msra.mxu0 %v1797
    %2865 = vmatprep.subr.mxu0 %v1802
    %2866 = vmatpush1.msra.mxu0 %v1801
    %2867 = vmatprep.subr.mxu0 %v1806
    %2868 = vmatpush1.msra.mxu0 %v1805
    %2869 = vmatprep.subr.mxu0 %v1810
    %2870 = vmatpush1.msra.mxu0 %v1809
    %2871 = vmatprep.subr.mxu0 %v1814
    %2872 = vmatpush1.msra.mxu0 %v1813
    %2873 = vmatprep.subr.mxu0 %v1818
    %2874 = vmatpush1.msra.mxu0 %v1817
    %2875 = vmatprep.subr.mxu0 %v1822
    %2876 = vmatpush1.msra.mxu0 %v1821
    %2877 = vmatprep.subr.mxu0 %v1826
    %2878 = vmatpush1.msra.mxu0 %v1825
    %2879 = vmatprep.subr.mxu0 %v1830
    %2880 = vmatpush1.msra.mxu0 %v1829
    %2881 = vmatprep.subr.mxu0 %v1834
    %2882 = vmatpush1.msra.mxu0 %v1833
    %2883 = vmatprep.subr.mxu0 %v1838
    %2884 = vmatpush1.msra.mxu0 %v1837
    %2885 = vmatprep.subr.mxu0 %v1842
    %2886 = vmatpush1.msra.mxu0 %v1841
    %2887 = vmatprep.subr.mxu0 %v1846
    %2888 = vmatpush1.msra.mxu0 %v1845
    %2889 = vmatprep.subr.mxu0 %v1850
    %2890 = vmatpush1.msra.mxu0 %v1849
    %2891 = vmatprep.subr.mxu0 %v1854
    %2892 = vmatpush1.msra.mxu0 %v1853
    %2893 = vmatprep.subr.mxu0 %v1858
    %2894 = vmatpush1.msra.mxu0 %v1857
    %2895 = vmatprep.subr.mxu0 %v1862
    %2896 = vmatpush1.msra.mxu0 %v1861
    %2897 = vmatprep.subr.mxu0 %v1866
    %2898 = vmatpush1.msra.mxu0 %v1865
    %2899 = vmatprep.subr.mxu0 %v1870
    %2900 = vmatpush1.msra.mxu0 %v1869
    %2901 = vmatprep.subr.mxu0 %v1874
    %2902 = vmatpush1.msra.mxu0 %v1873
    %2903 = vmatprep.mubr.f32.mxu0 %v1684
    %2904 = vmatmul.mubr.f32.gmra.mrb[0].mxu0 %v1683
    %v2905 = vpop.f32.mrb[0].mxu0
    %v2906 = vadd.f32 %v2392, %v2905
    %v2907 = vpop.f32.mrb[0].mxu0
    %v2908 = vadd.f32 %v2394, %v2907
    %2909 = vmatprep.mubr.f32.mxu0 %v1686
    %2910 = vmatmul.mubr.f32.gmra.mrb[0].mxu0 %v1685
    %v2911 = vpop.f32.mrb[0].mxu0
    %v2912 = vadd.f32 %v2398, %v2911
    %v2913 = vpop.f32.mrb[0].mxu0
    %v2914 = vadd.f32 %v2400, %v2913
    %2915 = vmatprep.mubr.f32.mxu0 %v1688
    %2916 = vmatmul.mubr.f32.gmra.mrb[0].mxu0 %v1687
    %v2917 = vpop.f32.mrb[0].mxu0
    %v2918 = vadd.f32 %v2404, %v2917
    %v2919 = vpop.f32.mrb[0].mxu0
    %v2920 = vadd.f32 %v2406, %v2919
    %2921 = vmatprep.mubr.f32.mxu0 %v1690
    %2922 = vmatmul.mubr.f32.gmra.mrb[0].mxu0 %v1689
    %v2923 = vpop.f32.mrb[0].mxu0
    %v2924 = vadd.f32 %v2410, %v2923
    %v2925 = vpop.f32.mrb[0].mxu0
    %v2926 = vadd.f32 %v2412, %v2925
    %2927 = vmatprep.mubr.f32.mxu0 %v1692
    %2928 = vmatmul.mubr.f32.gmra.mrb[0].mxu0 %v1691
    %v2929 = vpop.f32.mrb[0].mxu0
    %v2930 = vadd.f32 %v2416, %v2929
    %v2931 = vpop.f32.mrb[0].mxu0
    %v2932 = vadd.f32 %v2418, %v2931
    %2933 = vmatprep.mubr.f32.mxu0 %v1694
    %2934 = vmatmul.mubr.f32.gmra.mrb[0].mxu0 %v1693
    %v2935 = vpop.f32.mrb[0].mxu0
    %v2936 = vadd.f32 %v2422, %v2935
    %v2937 = vpop.f32.mrb[0].mxu0
    %v2938 = vadd.f32 %v2424, %v2937
    %2939 = vmatprep.mubr.f32.mxu0 %v1696
    %2940 = vmatmul.mubr.f32.gmra.mrb[0].mxu0 %v1695
    %v2941 = vpop.f32.mrb[0].mxu0
    %v2942 = vadd.f32 %v2428, %v2941
    %v2943 = vpop.f32.mrb[0].mxu0
    %v2944 = vadd.f32 %v2430, %v2943
    %2945 = vmatprep.mubr.f32.mxu0 %v1698
    %2946 = vmatmul.mubr.f32.gmra.mrb[0].mxu0 %v1697
    %v2947 = vpop.f32.mrb[0].mxu0
    %v2948 = vadd.f32 %v2434, %v2947
    %v2949 = vpop.f32.mrb[0].mxu0
    %v2950 = vadd.f32 %v2436, %v2949
    %2951 = vmatprep.mubr.f32.mxu0 %v1700
    %2952 = vmatmul.mubr.f32.gmra.mrb[0].mxu0 %v1699
    %v2953 = vpop.f32.mrb[0].mxu0
    %v2954 = vadd.f32 %v2440, %v2953
    %v2955 = vpop.f32.mrb[0].mxu0
    %v2956 = vadd.f32 %v2442, %v2955
    %2957 = vmatprep.mubr.f32.mxu0 %v1702
    %2958 = vmatmul.mubr.f32.gmra.mrb[0].mxu0 %v1701
    %v2959 = vpop.f32.mrb[0].mxu0
    %v2960 = vadd.f32 %v2446, %v2959
    %v2961 = vpop.f32.mrb[0].mxu0
    %v2962 = vadd.f32 %v2448, %v2961
    %2963 = vmatprep.mubr.f32.mxu0 %v1704
    %2964 = vmatmul.mubr.f32.gmra.mrb[0].mxu0 %v1703
    %v2965 = vpop.f32.mrb[0].mxu0
    %v2966 = vadd.f32 %v2452, %v2965
    %v2967 = vpop.f32.mrb[0].mxu0
    %v2968 = vadd.f32 %v2454, %v2967
    %2969 = vmatprep.mubr.f32.mxu0 %v1706
    %2970 = vmatmul.mubr.f32.gmra.mrb[0].mxu0 %v1705
    %v2971 = vpop.f32.mrb[0].mxu0
    %v2972 = vadd.f32 %v2458, %v2971
    %v2973 = vpop.f32.mrb[0].mxu0
    %v2974 = vadd.f32 %v2460, %v2973
    %2975 = vmatprep.mubr.f32.mxu0 %v1708
    %2976 = vmatmul.mubr.f32.gmra.mrb[0].mxu0 %v1707
    %v2977 = vpop.f32.mrb[0].mxu0
    %v2978 = vadd.f32 %v2464, %v2977
    %v2979 = vpop.f32.mrb[0].mxu0
    %v2980 = vadd.f32 %v2466, %v2979
    %2981 = vmatprep.mubr.f32.mxu0 %v1710
    %2982 = vmatmul.mubr.f32.gmra.mrb[0].mxu0 %v1709
    %v2983 = vpop.f32.mrb[0].mxu0
    %v2984 = vadd.f32 %v2470, %v2983
    %v2985 = vpop.f32.mrb[0].mxu0
    %v2986 = vadd.f32 %v2472, %v2985
    %2987 = vmatprep.mubr.f32.mxu0 %v1712
    %2988 = vmatmul.mubr.f32.gmra.mrb[0].mxu0 %v1711
    %v2989 = vpop.f32.mrb[0].mxu0
    %v2990 = vadd.f32 %v2476, %v2989
    %v2991 = vpop.f32.mrb[0].mxu0
    %v2992 = vadd.f32 %v2478, %v2991
    %2993 = vmatprep.mubr.f32.mxu0 %v1714
    %2994 = vmatmul.mubr.f32.gmra.mrb[0].mxu0 %v1713
    %v2995 = vpop.f32.mrb[0].mxu0
    %v2996 = vadd.f32 %v2482, %v2995
    %v2997 = vpop.f32.mrb[0].mxu0
    %v2998 = vadd.f32 %v2484, %v2997
    %2999 = vmatprep.mubr.f32.mxu0 %v1716
    %3000 = vmatmul.mubr.f32.gmra.mrb[0].mxu0 %v1715
    %v3001 = vpop.f32.mrb[0].mxu0
    %v3002 = vadd.f32 %v2488, %v3001
    %v3003 = vpop.f32.mrb[0].mxu0
    %v3004 = vadd.f32 %v2490, %v3003
    %3005 = vmatprep.mubr.f32.mxu0 %v1718
    %3006 = vmatmul.mubr.f32.gmra.mrb[0].mxu0 %v1717
    %v3007 = vpop.f32.mrb[0].mxu0
    %v3008 = vadd.f32 %v2494, %v3007
    %v3009 = vpop.f32.mrb[0].mxu0
    %v3010 = vadd.f32 %v2496, %v3009
    %3011 = vmatprep.mubr.f32.mxu0 %v1720
    %3012 = vmatmul.mubr.f32.gmra.mrb[0].mxu0 %v1719
    %v3013 = vpop.f32.mrb[0].mxu0
    %v3014 = vadd.f32 %v2500, %v3013
    %v3015 = vpop.f32.mrb[0].mxu0
    %v3016 = vadd.f32 %v2502, %v3015
    %3017 = vmatprep.mubr.f32.mxu0 %v1722
    %3018 = vmatmul.mubr.f32.gmra.mrb[0].mxu0 %v1721
    %v3019 = vpop.f32.mrb[0].mxu0
    %v3020 = vadd.f32 %v2506, %v3019
    %v3021 = vpop.f32.mrb[0].mxu0
    %v3022 = vadd.f32 %v2508, %v3021
    %3023 = vmatprep.mubr.f32.mxu0 %v1724
    %3024 = vmatmul.mubr.f32.gmra.mrb[0].mxu0 %v1723
    %v3025 = vpop.f32.mrb[0].mxu0
    %v3026 = vadd.f32 %v2512, %v3025
    %v3027 = vpop.f32.mrb[0].mxu0
    %v3028 = vadd.f32 %v2514, %v3027
    %3029 = vmatprep.mubr.f32.mxu0 %v1726
    %3030 = vmatmul.mubr.f32.gmra.mrb[0].mxu0 %v1725
    %v3031 = vpop.f32.mrb[0].mxu0
    %v3032 = vadd.f32 %v2518, %v3031
    %v3033 = vpop.f32.mrb[0].mxu0
    %v3034 = vadd.f32 %v2520, %v3033
    %3035 = vmatprep.mubr.f32.mxu0 %v1728
    %3036 = vmatmul.mubr.f32.gmra.mrb[0].mxu0 %v1727
    %v3037 = vpop.f32.mrb[0].mxu0
    %v3038 = vadd.f32 %v2524, %v3037
    %v3039 = vpop.f32.mrb[0].mxu0
    %v3040 = vadd.f32 %v2526, %v3039
    %3041 = vmatprep.mubr.f32.mxu0 %v1730
    %3042 = vmatmul.mubr.f32.gmra.mrb[0].mxu0 %v1729
    %v3043 = vpop.f32.mrb[0].mxu0
    %v3044 = vadd.f32 %v2530, %v3043
    %v3045 = vpop.f32.mrb[0].mxu0
    %v3046 = vadd.f32 %v2532, %v3045
    %3047 = vmatprep.mubr.f32.mxu0 %v1732
    %3048 = vmatmul.mubr.f32.gmra.mrb[0].mxu0 %v1731
    %v3049 = vpop.f32.mrb[0].mxu0
    %v3050 = vadd.f32 %v2536, %v3049
    %v3051 = vpop.f32.mrb[0].mxu0
    %v3052 = vadd.f32 %v2538, %v3051
    %3053 = vmatprep.mubr.f32.mxu0 %v1734
    %3054 = vmatmul.mubr.f32.gmra.mrb[0].mxu0 %v1733
    %v3055 = vpop.f32.mrb[0].mxu0
    %v3056 = vadd.f32 %v2542, %v3055
    %v3057 = vpop.f32.mrb[0].mxu0
    %v3058 = vadd.f32 %v2544, %v3057
    %3059 = vmatprep.mubr.f32.mxu0 %v1736
    %3060 = vmatmul.mubr.f32.gmra.mrb[0].mxu0 %v1735
    %v3061 = vpop.f32.mrb[0].mxu0
    %v3062 = vadd.f32 %v2548, %v3061
    %v3063 = vpop.f32.mrb[0].mxu0
    %v3064 = vadd.f32 %v2550, %v3063
    %3065 = vmatprep.mubr.f32.mxu0 %v1738
    %3066 = vmatmul.mubr.f32.gmra.mrb[0].mxu0 %v1737
    %v3067 = vpop.f32.mrb[0].mxu0
    %v3068 = vadd.f32 %v2554, %v3067
    %v3069 = vpop.f32.mrb[0].mxu0
    %v3070 = vadd.f32 %v2556, %v3069
    %3071 = vmatprep.mubr.f32.mxu0 %v1740
    %3072 = vmatmul.mubr.f32.gmra.mrb[0].mxu0 %v1739
    %v3073 = vpop.f32.mrb[0].mxu0
    %v3074 = vadd.f32 %v2560, %v3073
    %v3075 = vpop.f32.mrb[0].mxu0
    %v3076 = vadd.f32 %v2562, %v3075
    %3077 = vmatprep.mubr.f32.mxu0 %v1742
    %3078 = vmatmul.mubr.f32.gmra.mrb[0].mxu0 %v1741
    %v3079 = vpop.f32.mrb[0].mxu0
    %v3080 = vadd.f32 %v2566, %v3079
    %v3081 = vpop.f32.mrb[0].mxu0
    %v3082 = vadd.f32 %v2568, %v3081
    %3083 = vmatprep.mubr.f32.mxu0 %v1744
    %3084 = vmatmul.mubr.f32.gmra.mrb[0].mxu0 %v1743
    %v3085 = vpop.f32.mrb[0].mxu0
    %v3086 = vadd.f32 %v2572, %v3085
    %v3087 = vpop.f32.mrb[0].mxu0
    %v3088 = vadd.f32 %v2574, %v3087
    %3089 = vmatprep.mubr.f32.mxu0 %v1746
    %3090 = vmatmul.mubr.f32.gmra.mrb[0].mxu0 %v1745
    %v3091 = vpop.f32.mrb[0].mxu0
    %v3092 = vadd.f32 %v2578, %v3091
    %v3093 = vpop.f32.mrb[0].mxu0
    %v3094 = vadd.f32 %v2580, %v3093
    %3095 = vdwg.mxu0
    %s3096 = scalar_lea.vmem [#allocation3], 64
    %v3097 = vld [vmem:[%s3096] sm:$0xff]
    %v3098 = vld [vmem:[%s3096 + $0x8] sm:$0xff]
    %v3099 = vld [vmem:[%s3096 + $0x10] sm:$0xff]
    %v3100 = vld [vmem:[%s3096 + $0x18] sm:$0xff]
    %v3101 = vld [vmem:[%s3096 + $0x20] sm:$0xff]
    %v3102 = vld [vmem:[%s3096 + $0x28] sm:$0xff]
    %v3103 = vld [vmem:[%s3096 + $0x30] sm:$0xff]
    %v3104 = vld [vmem:[%s3096 + $0x38] sm:$0xff]
    %v3105 = vld [vmem:[%s3096 + $0x40] sm:$0xff]
    %v3106 = vld [vmem:[%s3096 + $0x48] sm:$0xff]
    %v3107 = vld [vmem:[%s3096 + $0x50] sm:$0xff]
    %v3108 = vld [vmem:[%s3096 + $0x58] sm:$0xff]
    %v3109 = vld [vmem:[%s3096 + $0x60] sm:$0xff]
    %v3110 = vld [vmem:[%s3096 + $0x68] sm:$0xff]
    %v3111 = vld [vmem:[%s3096 + $0x70] sm:$0xff]
    %v3112 = vld [vmem:[%s3096 + $0x78] sm:$0xff]
    %v3113 = vld [vmem:[%s3096 + $0x80] sm:$0xff]
    %v3114 = vld [vmem:[%s3096 + $0x88] sm:$0xff]
    %v3115 = vld [vmem:[%s3096 + $0x90] sm:$0xff]
    %v3116 = vld [vmem:[%s3096 + $0x98] sm:$0xff]
    %v3117 = vld [vmem:[%s3096 + $0xa0] sm:$0xff]
    %v3118 = vld [vmem:[%s3096 + $0xa8] sm:$0xff]
    %v3119 = vld [vmem:[%s3096 + $0xb0] sm:$0xff]
    %v3120 = vld [vmem:[%s3096 + $0xb8] sm:$0xff]
    %v3121 = vld [vmem:[%s3096 + $0xc0] sm:$0xff]
    %v3122 = vld [vmem:[%s3096 + $0xc8] sm:$0xff]
    %v3123 = vld [vmem:[%s3096 + $0xd0] sm:$0xff]
    %v3124 = vld [vmem:[%s3096 + $0xd8] sm:$0xff]
    %v3125 = vld [vmem:[%s3096 + $0xe0] sm:$0xff]
    %v3126 = vld [vmem:[%s3096 + $0xe8] sm:$0xff]
    %v3127 = vld [vmem:[%s3096 + $0xf0] sm:$0xff]
    %v3128 = vld [vmem:[%s3096 + $0xf8] sm:$0xff]
    %v3129 = vld [vmem:[%s3096 + $0x100] sm:$0xff]
    %v3130 = vld [vmem:[%s3096 + $0x108] sm:$0xff]
    %v3131 = vld [vmem:[%s3096 + $0x110] sm:$0xff]
    %v3132 = vld [vmem:[%s3096 + $0x118] sm:$0xff]
    %v3133 = vld [vmem:[%s3096 + $0x120] sm:$0xff]
    %v3134 = vld [vmem:[%s3096 + $0x128] sm:$0xff]
    %v3135 = vld [vmem:[%s3096 + $0x130] sm:$0xff]
    %v3136 = vld [vmem:[%s3096 + $0x138] sm:$0xff]
    %v3137 = vld [vmem:[%s3096 + $0x140] sm:$0xff]
    %v3138 = vld [vmem:[%s3096 + $0x148] sm:$0xff]
    %v3139 = vld [vmem:[%s3096 + $0x150] sm:$0xff]
    %v3140 = vld [vmem:[%s3096 + $0x158] sm:$0xff]
    %v3141 = vld [vmem:[%s3096 + $0x160] sm:$0xff]
    %v3142 = vld [vmem:[%s3096 + $0x168] sm:$0xff]
    %v3143 = vld [vmem:[%s3096 + $0x170] sm:$0xff]
    %v3144 = vld [vmem:[%s3096 + $0x178] sm:$0xff]
    %v3145 = vld [vmem:[%s3096 + $0x180] sm:$0xff]
    %v3146 = vld [vmem:[%s3096 + $0x188] sm:$0xff]
    %v3147 = vld [vmem:[%s3096 + $0x190] sm:$0xff]
    %v3148 = vld [vmem:[%s3096 + $0x198] sm:$0xff]
    %v3149 = vld [vmem:[%s3096 + $0x1a0] sm:$0xff]
    %v3150 = vld [vmem:[%s3096 + $0x1a8] sm:$0xff]
    %v3151 = vld [vmem:[%s3096 + $0x1b0] sm:$0xff]
    %v3152 = vld [vmem:[%s3096 + $0x1b8] sm:$0xff]
    %v3153 = vld [vmem:[%s3096 + $0x1c0] sm:$0xff]
    %v3154 = vld [vmem:[%s3096 + $0x1c8] sm:$0xff]
    %v3155 = vld [vmem:[%s3096 + $0x1d0] sm:$0xff]
    %v3156 = vld [vmem:[%s3096 + $0x1d8] sm:$0xff]
    %v3157 = vld [vmem:[%s3096 + $0x1e0] sm:$0xff]
    %v3158 = vld [vmem:[%s3096 + $0x1e8] sm:$0xff]
    %v3159 = vld [vmem:[%s3096 + $0x1f0] sm:$0xff]
    %v3160 = vld [vmem:[%s3096 + $0x1f8] sm:$0xff]
    %s3161 = scalar_lea.vmem [#allocation10], 2048
    %v3162 = vld [vmem:[%s3161] sm:$0xff]
    %v3163 = vld [vmem:[%s3161 + $0x8] sm:$0xff]
    %v3164 = vld [vmem:[%s3161 + $0x10] sm:$0xff]
    %v3165 = vld [vmem:[%s3161 + $0x18] sm:$0xff]
    %v3166 = vld [vmem:[%s3161 + $0x20] sm:$0xff]
    %v3167 = vld [vmem:[%s3161 + $0x28] sm:$0xff]
    %v3168 = vld [vmem:[%s3161 + $0x30] sm:$0xff]
    %v3169 = vld [vmem:[%s3161 + $0x38] sm:$0xff]
    %v3170 = vld [vmem:[%s3161 + $0x40] sm:$0xff]
    %v3171 = vld [vmem:[%s3161 + $0x48] sm:$0xff]
    %v3172 = vld [vmem:[%s3161 + $0x50] sm:$0xff]
    %v3173 = vld [vmem:[%s3161 + $0x58] sm:$0xff]
    %v3174 = vld [vmem:[%s3161 + $0x60] sm:$0xff]
    %v3175 = vld [vmem:[%s3161 + $0x68] sm:$0xff]
    %v3176 = vld [vmem:[%s3161 + $0x70] sm:$0xff]
    %v3177 = vld [vmem:[%s3161 + $0x78] sm:$0xff]
    %v3178 = vld [vmem:[%s3161 + $0x80] sm:$0xff]
    %v3179 = vld [vmem:[%s3161 + $0x88] sm:$0xff]
    %v3180 = vld [vmem:[%s3161 + $0x90] sm:$0xff]
    %v3181 = vld [vmem:[%s3161 + $0x98] sm:$0xff]
    %v3182 = vld [vmem:[%s3161 + $0xa0] sm:$0xff]
    %v3183 = vld [vmem:[%s3161 + $0xa8] sm:$0xff]
    %v3184 = vld [vmem:[%s3161 + $0xb0] sm:$0xff]
    %v3185 = vld [vmem:[%s3161 + $0xb8] sm:$0xff]
    %v3186 = vld [vmem:[%s3161 + $0xc0] sm:$0xff]
    %v3187 = vld [vmem:[%s3161 + $0xc8] sm:$0xff]
    %v3188 = vld [vmem:[%s3161 + $0xd0] sm:$0xff]
    %v3189 = vld [vmem:[%s3161 + $0xd8] sm:$0xff]
    %v3190 = vld [vmem:[%s3161 + $0xe0] sm:$0xff]
    %v3191 = vld [vmem:[%s3161 + $0xe8] sm:$0xff]
    %v3192 = vld [vmem:[%s3161 + $0xf0] sm:$0xff]
    %v3193 = vld [vmem:[%s3161 + $0xf8] sm:$0xff]
    %v3194 = vld [vmem:[%s3161 + $0x100] sm:$0xff]
    %v3195 = vld [vmem:[%s3161 + $0x108] sm:$0xff]
    %v3196 = vld [vmem:[%s3161 + $0x110] sm:$0xff]
    %v3197 = vld [vmem:[%s3161 + $0x118] sm:$0xff]
    %v3198 = vld [vmem:[%s3161 + $0x120] sm:$0xff]
    %v3199 = vld [vmem:[%s3161 + $0x128] sm:$0xff]
    %v3200 = vld [vmem:[%s3161 + $0x130] sm:$0xff]
    %v3201 = vld [vmem:[%s3161 + $0x138] sm:$0xff]
    %v3202 = vld [vmem:[%s3161 + $0x140] sm:$0xff]
    %v3203 = vld [vmem:[%s3161 + $0x148] sm:$0xff]
    %v3204 = vld [vmem:[%s3161 + $0x150] sm:$0xff]
    %v3205 = vld [vmem:[%s3161 + $0x158] sm:$0xff]
    %v3206 = vld [vmem:[%s3161 + $0x160] sm:$0xff]
    %v3207 = vld [vmem:[%s3161 + $0x168] sm:$0xff]
    %v3208 = vld [vmem:[%s3161 + $0x170] sm:$0xff]
    %v3209 = vld [vmem:[%s3161 + $0x178] sm:$0xff]
    %v3210 = vld [vmem:[%s3161 + $0x180] sm:$0xff]
    %v3211 = vld [vmem:[%s3161 + $0x188] sm:$0xff]
    %v3212 = vld [vmem:[%s3161 + $0x190] sm:$0xff]
    %v3213 = vld [vmem:[%s3161 + $0x198] sm:$0xff]
    %v3214 = vld [vmem:[%s3161 + $0x1a0] sm:$0xff]
    %v3215 = vld [vmem:[%s3161 + $0x1a8] sm:$0xff]
    %v3216 = vld [vmem:[%s3161 + $0x1b0] sm:$0xff]
    %v3217 = vld [vmem:[%s3161 + $0x1b8] sm:$0xff]
    %v3218 = vld [vmem:[%s3161 + $0x1c0] sm:$0xff]
    %v3219 = vld [vmem:[%s3161 + $0x1c8] sm:$0xff]
    %v3220 = vld [vmem:[%s3161 + $0x1d0] sm:$0xff]
    %v3221 = vld [vmem:[%s3161 + $0x1d8] sm:$0xff]
    %v3222 = vld [vmem:[%s3161 + $0x1e0] sm:$0xff]
    %v3223 = vld [vmem:[%s3161 + $0x1e8] sm:$0xff]
    %v3224 = vld [vmem:[%s3161 + $0x1f0] sm:$0xff]
    %v3225 = vld [vmem:[%s3161 + $0x1f8] sm:$0xff]
    %v3226 = vld [vmem:[%s3161 + $0x200] sm:$0xff]
    %v3227 = vld [vmem:[%s3161 + $0x208] sm:$0xff]
    %v3228 = vld [vmem:[%s3161 + $0x210] sm:$0xff]
    %v3229 = vld [vmem:[%s3161 + $0x218] sm:$0xff]
    %v3230 = vld [vmem:[%s3161 + $0x220] sm:$0xff]
    %v3231 = vld [vmem:[%s3161 + $0x228] sm:$0xff]
    %v3232 = vld [vmem:[%s3161 + $0x230] sm:$0xff]
    %v3233 = vld [vmem:[%s3161 + $0x238] sm:$0xff]
    %v3234 = vld [vmem:[%s3161 + $0x240] sm:$0xff]
    %v3235 = vld [vmem:[%s3161 + $0x248] sm:$0xff]
    %v3236 = vld [vmem:[%s3161 + $0x250] sm:$0xff]
    %v3237 = vld [vmem:[%s3161 + $0x258] sm:$0xff]
    %v3238 = vld [vmem:[%s3161 + $0x260] sm:$0xff]
    %v3239 = vld [vmem:[%s3161 + $0x268] sm:$0xff]
    %v3240 = vld [vmem:[%s3161 + $0x270] sm:$0xff]
    %v3241 = vld [vmem:[%s3161 + $0x278] sm:$0xff]
    %v3242 = vld [vmem:[%s3161 + $0x280] sm:$0xff]
    %v3243 = vld [vmem:[%s3161 + $0x288] sm:$0xff]
    %v3244 = vld [vmem:[%s3161 + $0x290] sm:$0xff]
    %v3245 = vld [vmem:[%s3161 + $0x298] sm:$0xff]
    %v3246 = vld [vmem:[%s3161 + $0x2a0] sm:$0xff]
    %v3247 = vld [vmem:[%s3161 + $0x2a8] sm:$0xff]
    %v3248 = vld [vmem:[%s3161 + $0x2b0] sm:$0xff]
    %v3249 = vld [vmem:[%s3161 + $0x2b8] sm:$0xff]
    %v3250 = vld [vmem:[%s3161 + $0x2c0] sm:$0xff]
    %v3251 = vld [vmem:[%s3161 + $0x2c8] sm:$0xff]
    %v3252 = vld [vmem:[%s3161 + $0x2d0] sm:$0xff]
    %v3253 = vld [vmem:[%s3161 + $0x2d8] sm:$0xff]
    %v3254 = vld [vmem:[%s3161 + $0x2e0] sm:$0xff]
    %v3255 = vld [vmem:[%s3161 + $0x2e8] sm:$0xff]
    %v3256 = vld [vmem:[%s3161 + $0x2f0] sm:$0xff]
    %v3257 = vld [vmem:[%s3161 + $0x2f8] sm:$0xff]
    %v3258 = vld [vmem:[%s3161 + $0x300] sm:$0xff]
    %v3259 = vld [vmem:[%s3161 + $0x308] sm:$0xff]
    %v3260 = vld [vmem:[%s3161 + $0x310] sm:$0xff]
    %v3261 = vld [vmem:[%s3161 + $0x318] sm:$0xff]
    %v3262 = vld [vmem:[%s3161 + $0x320] sm:$0xff]
    %v3263 = vld [vmem:[%s3161 + $0x328] sm:$0xff]
    %v3264 = vld [vmem:[%s3161 + $0x330] sm:$0xff]
    %v3265 = vld [vmem:[%s3161 + $0x338] sm:$0xff]
    %v3266 = vld [vmem:[%s3161 + $0x340] sm:$0xff]
    %v3267 = vld [vmem:[%s3161 + $0x348] sm:$0xff]
    %v3268 = vld [vmem:[%s3161 + $0x350] sm:$0xff]
    %v3269 = vld [vmem:[%s3161 + $0x358] sm:$0xff]
    %v3270 = vld [vmem:[%s3161 + $0x360] sm:$0xff]
    %v3271 = vld [vmem:[%s3161 + $0x368] sm:$0xff]
    %v3272 = vld [vmem:[%s3161 + $0x370] sm:$0xff]
    %v3273 = vld [vmem:[%s3161 + $0x378] sm:$0xff]
    %v3274 = vld [vmem:[%s3161 + $0x380] sm:$0xff]
    %v3275 = vld [vmem:[%s3161 + $0x388] sm:$0xff]
    %v3276 = vld [vmem:[%s3161 + $0x390] sm:$0xff]
    %v3277 = vld [vmem:[%s3161 + $0x398] sm:$0xff]
    %v3278 = vld [vmem:[%s3161 + $0x3a0] sm:$0xff]
    %v3279 = vld [vmem:[%s3161 + $0x3a8] sm:$0xff]
    %v3280 = vld [vmem:[%s3161 + $0x3b0] sm:$0xff]
    %v3281 = vld [vmem:[%s3161 + $0x3b8] sm:$0xff]
    %v3282 = vld [vmem:[%s3161 + $0x3c0] sm:$0xff]
    %v3283 = vld [vmem:[%s3161 + $0x3c8] sm:$0xff]
    %v3284 = vld [vmem:[%s3161 + $0x3d0] sm:$0xff]
    %v3285 = vld [vmem:[%s3161 + $0x3d8] sm:$0xff]
    %v3286 = vld [vmem:[%s3161 + $0x3e0] sm:$0xff]
    %v3287 = vld [vmem:[%s3161 + $0x3e8] sm:$0xff]
    %v3288 = vld [vmem:[%s3161 + $0x3f0] sm:$0xff]
    %v3289 = vld [vmem:[%s3161 + $0x3f8] sm:$0xff]
    %3290 = vmatprep.subr.mxu0 %v3163
    %3291 = vmatpush1.msra.mxu0 %v3162
    %3292 = vmatprep.subr.mxu0 %v3167
    %3293 = vmatpush1.msra.mxu0 %v3166
    %3294 = vmatprep.subr.mxu0 %v3171
    %3295 = vmatpush1.msra.mxu0 %v3170
    %3296 = vmatprep.subr.mxu0 %v3175
    %3297 = vmatpush1.msra.mxu0 %v3174
    %3298 = vmatprep.subr.mxu0 %v3179
    %3299 = vmatpush1.msra.mxu0 %v3178
    %3300 = vmatprep.subr.mxu0 %v3183
    %3301 = vmatpush1.msra.mxu0 %v3182
    %3302 = vmatprep.subr.mxu0 %v3187
    %3303 = vmatpush1.msra.mxu0 %v3186
    %3304 = vmatprep.subr.mxu0 %v3191
    %3305 = vmatpush1.msra.mxu0 %v3190
    %3306 = vmatprep.subr.mxu0 %v3195
    %3307 = vmatpush1.msra.mxu0 %v3194
    %3308 = vmatprep.subr.mxu0 %v3199
    %3309 = vmatpush1.msra.mxu0 %v3198
    %3310 = vmatprep.subr.mxu0 %v3203
    %3311 = vmatpush1.msra.mxu0 %v3202
    %3312 = vmatprep.subr.mxu0 %v3207
    %3313 = vmatpush1.msra.mxu0 %v3206
    %3314 = vmatprep.subr.mxu0 %v3211
    %3315 = vmatpush1.msra.mxu0 %v3210
    %3316 = vmatprep.subr.mxu0 %v3215
    %3317 = vmatpush1.msra.mxu0 %v3214
    %3318 = vmatprep.subr.mxu0 %v3219
    %3319 = vmatpush1.msra.mxu0 %v3218
    %3320 = vmatprep.subr.mxu0 %v3223
    %3321 = vmatpush1.msra.mxu0 %v3222
    %3322 = vmatprep.subr.mxu0 %v3227
    %3323 = vmatpush1.msra.mxu0 %v3226
    %3324 = vmatprep.subr.mxu0 %v3231
    %3325 = vmatpush1.msra.mxu0 %v3230
    %3326 = vmatprep.subr.mxu0 %v3235
    %3327 = vmatpush1.msra.mxu0 %v3234
    %3328 = vmatprep.subr.mxu0 %v3239
    %3329 = vmatpush1.msra.mxu0 %v3238
    %3330 = vmatprep.subr.mxu0 %v3243
    %3331 = vmatpush1.msra.mxu0 %v3242
    %3332 = vmatprep.subr.mxu0 %v3247
    %3333 = vmatpush1.msra.mxu0 %v3246
    %3334 = vmatprep.subr.mxu0 %v3251
    %3335 = vmatpush1.msra.mxu0 %v3250
    %3336 = vmatprep.subr.mxu0 %v3255
    %3337 = vmatpush1.msra.mxu0 %v3254
    %3338 = vmatprep.subr.mxu0 %v3259
    %3339 = vmatpush1.msra.mxu0 %v3258
    %3340 = vmatprep.subr.mxu0 %v3263
    %3341 = vmatpush1.msra.mxu0 %v3262
    %3342 = vmatprep.subr.mxu0 %v3267
    %3343 = vmatpush1.msra.mxu0 %v3266
    %3344 = vmatprep.subr.mxu0 %v3271
    %3345 = vmatpush1.msra.mxu0 %v3270
    %3346 = vmatprep.subr.mxu0 %v3275
    %3347 = vmatpush1.msra.mxu0 %v3274
    %3348 = vmatprep.subr.mxu0 %v3279
    %3349 = vmatpush1.msra.mxu0 %v3278
    %3350 = vmatprep.subr.mxu0 %v3283
    %3351 = vmatpush1.msra.mxu0 %v3282
    %3352 = vmatprep.subr.mxu0 %v3287
    %3353 = vmatpush1.msra.mxu0 %v3286
    %3354 = vmatprep.mubr.f32.mxu0 %v3098
    %3355 = vmatmul.mubr.f32.gmra.mrb[0].mxu0 %v3097
    %v3356 = vpop.f32.mrb[0].mxu0
    %v3357 = vadd.f32 0.0, %v3356
    %v3358 = vpop.f32.mrb[0].mxu0
    %v3359 = vadd.f32 0.0, %v3358
    %3360 = vmatprep.mubr.f32.mxu0 %v3100
    %3361 = vmatmul.mubr.f32.gmra.mrb[0].mxu0 %v3099
    %v3362 = vpop.f32.mrb[0].mxu0
    %v3363 = vadd.f32 0.0, %v3362
    %v3364 = vpop.f32.mrb[0].mxu0
    %v3365 = vadd.f32 0.0, %v3364
    %3366 = vmatprep.mubr.f32.mxu0 %v3102
    %3367 = vmatmul.mubr.f32.gmra.mrb[0].mxu0 %v3101
    %v3368 = vpop.f32.mrb[0].mxu0
    %v3369 = vadd.f32 0.0, %v3368
    %v3370 = vpop.f32.mrb[0].mxu0
    %v3371 = vadd.f32 0.0, %v3370
    %3372 = vmatprep.mubr.f32.mxu0 %v3104
    %3373 = vmatmul.mubr.f32.gmra.mrb[0].mxu0 %v3103
    %v3374 = vpop.f32.mrb[0].mxu0
    %v3375 = vadd.f32 0.0, %v3374
    %v3376 = vpop.f32.mrb[0].mxu0
    %v3377 = vadd.f32 0.0, %v3376
    %3378 = vmatprep.mubr.f32.mxu0 %v3106
    %3379 = vmatmul.mubr.f32.gmra.mrb[0].mxu0 %v3105
    %v3380 = vpop.f32.mrb[0].mxu0
    %v3381 = vadd.f32 0.0, %v3380
    %v3382 = vpop.f32.mrb[0].mxu0
    %v3383 = vadd.f32 0.0, %v3382
    %3384 = vmatprep.mubr.f32.mxu0 %v3108
    %3385 = vmatmul.mubr.f32.gmra.mrb[0].mxu0 %v3107
    %v3386 = vpop.f32.mrb[0].mxu0
    %v3387 = vadd.f32 0.0, %v3386
    %v3388 = vpop.f32.mrb[0].mxu0
    %v3389 = vadd.f32 0.0, %v3388
    %3390 = vmatprep.mubr.f32.mxu0 %v3110
    %3391 = vmatmul.mubr.f32.gmra.mrb[0].mxu0 %v3109
    %v3392 = vpop.f32.mrb[0].mxu0
    %v3393 = vadd.f32 0.0, %v3392
    %v3394 = vpop.f32.mrb[0].mxu0
    %v3395 = vadd.f32 0.0, %v3394
    %3396 = vmatprep.mubr.f32.mxu0 %v3112
    %3397 = vmatmul.mubr.f32.gmra.mrb[0].mxu0 %v3111
    %v3398 = vpop.f32.mrb[0].mxu0
    %v3399 = vadd.f32 0.0, %v3398
    %v3400 = vpop.f32.mrb[0].mxu0
    %v3401 = vadd.f32 0.0, %v3400
    %3402 = vmatprep.mubr.f32.mxu0 %v3114
    %3403 = vmatmul.mubr.f32.gmra.mrb[0].mxu0 %v3113
    %v3404 = vpop.f32.mrb[0].mxu0
    %v3405 = vadd.f32 0.0, %v3404
    %v3406 = vpop.f32.mrb[0].mxu0
    %v3407 = vadd.f32 0.0, %v3406
    %3408 = vmatprep.mubr.f32.mxu0 %v3116
    %3409 = vmatmul.mubr.f32.gmra.mrb[0].mxu0 %v3115
    %v3410 = vpop.f32.mrb[0].mxu0
    %v3411 = vadd.f32 0.0, %v3410
    %v3412 = vpop.f32.mrb[0].mxu0
    %v3413 = vadd.f32 0.0, %v3412
    %3414 = vmatprep.mubr.f32.mxu0 %v3118
    %3415 = vmatmul.mubr.f32.gmra.mrb[0].mxu0 %v3117
    %v3416 = vpop.f32.mrb[0].mxu0
    %v3417 = vadd.f32 0.0, %v3416
    %v3418 = vpop.f32.mrb[0].mxu0
    %v3419 = vadd.f32 0.0, %v3418
    %3420 = vmatprep.mubr.f32.mxu0 %v3120
    %3421 = vmatmul.mubr.f32.gmra.mrb[0].mxu0 %v3119
    %v3422 = vpop.f32.mrb[0].mxu0
    %v3423 = vadd.f32 0.0, %v3422
    %v3424 = vpop.f32.mrb[0].mxu0
    %v3425 = vadd.f32 0.0, %v3424
    %3426 = vmatprep.mubr.f32.mxu0 %v3122
    %3427 = vmatmul.mubr.f32.gmra.mrb[0].mxu0 %v3121
    %v3428 = vpop.f32.mrb[0].mxu0
    %v3429 = vadd.f32 0.0, %v3428
    %v3430 = vpop.f32.mrb[0].mxu0
    %v3431 = vadd.f32 0.0, %v3430
    %3432 = vmatprep.mubr.f32.mxu0 %v3124
    %3433 = vmatmul.mubr.f32.gmra.mrb[0].mxu0 %v3123
    %v3434 = vpop.f32.mrb[0].mxu0
    %v3435 = vadd.f32 0.0, %v3434
    %v3436 = vpop.f32.mrb[0].mxu0
    %v3437 = vadd.f32 0.0, %v3436
    %3438 = vmatprep.mubr.f32.mxu0 %v3126
    %3439 = vmatmul.mubr.f32.gmra.mrb[0].mxu0 %v3125
    %v3440 = vpop.f32.mrb[0].mxu0
    %v3441 = vadd.f32 0.0, %v3440
    %v3442 = vpop.f32.mrb[0].mxu0
    %v3443 = vadd.f32 0.0, %v3442
    %3444 = vmatprep.mubr.f32.mxu0 %v3128
    %3445 = vmatmul.mubr.f32.gmra.mrb[0].mxu0 %v3127
    %v3446 = vpop.f32.mrb[0].mxu0
    %v3447 = vadd.f32 0.0, %v3446
    %v3448 = vpop.f32.mrb[0].mxu0
    %v3449 = vadd.f32 0.0, %v3448
    %3450 = vmatprep.mubr.f32.mxu0 %v3130
    %3451 = vmatmul.mubr.f32.gmra.mrb[0].mxu0 %v3129
    %v3452 = vpop.f32.mrb[0].mxu0
    %v3453 = vadd.f32 0.0, %v3452
    %v3454 = vpop.f32.mrb[0].mxu0
    %v3455 = vadd.f32 0.0, %v3454
    %3456 = vmatprep.mubr.f32.mxu0 %v3132
    %3457 = vmatmul.mubr.f32.gmra.mrb[0].mxu0 %v3131
    %v3458 = vpop.f32.mrb[0].mxu0
    %v3459 = vadd.f32 0.0, %v3458
    %v3460 = vpop.f32.mrb[0].mxu0
    %v3461 = vadd.f32 0.0, %v3460
    %3462 = vmatprep.mubr.f32.mxu0 %v3134
    %3463 = vmatmul.mubr.f32.gmra.mrb[0].mxu0 %v3133
    %v3464 = vpop.f32.mrb[0].mxu0
    %v3465 = vadd.f32 0.0, %v3464
    %v3466 = vpop.f32.mrb[0].mxu0
    %v3467 = vadd.f32 0.0, %v3466
    %3468 = vmatprep.mubr.f32.mxu0 %v3136
    %3469 = vmatmul.mubr.f32.gmra.mrb[0].mxu0 %v3135
    %v3470 = vpop.f32.mrb[0].mxu0
    %v3471 = vadd.f32 0.0, %v3470
    %v3472 = vpop.f32.mrb[0].mxu0
    %v3473 = vadd.f32 0.0, %v3472
    %3474 = vmatprep.mubr.f32.mxu0 %v3138
    %3475 = vmatmul.mubr.f32.gmra.mrb[0].mxu0 %v3137
    %v3476 = vpop.f32.mrb[0].mxu0
    %v3477 = vadd.f32 0.0, %v3476
    %v3478 = vpop.f32.mrb[0].mxu0
    %v3479 = vadd.f32 0.0, %v3478
    %3480 = vmatprep.mubr.f32.mxu0 %v3140
    %3481 = vmatmul.mubr.f32.gmra.mrb[0].mxu0 %v3139
    %v3482 = vpop.f32.mrb[0].mxu0
    %v3483 = vadd.f32 0.0, %v3482
    %v3484 = vpop.f32.mrb[0].mxu0
    %v3485 = vadd.f32 0.0, %v3484
    %3486 = vmatprep.mubr.f32.mxu0 %v3142
    %3487 = vmatmul.mubr.f32.gmra.mrb[0].mxu0 %v3141
    %v3488 = vpop.f32.mrb[0].mxu0
    %v3489 = vadd.f32 0.0, %v3488
    %v3490 = vpop.f32.mrb[0].mxu0
    %v3491 = vadd.f32 0.0, %v3490
    %3492 = vmatprep.mubr.f32.mxu0 %v3144
    %3493 = vmatmul.mubr.f32.gmra.mrb[0].mxu0 %v3143
    %v3494 = vpop.f32.mrb[0].mxu0
    %v3495 = vadd.f32 0.0, %v3494
    %v3496 = vpop.f32.mrb[0].mxu0
    %v3497 = vadd.f32 0.0, %v3496
    %3498 = vmatprep.mubr.f32.mxu0 %v3146
    %3499 = vmatmul.mubr.f32.gmra.mrb[0].mxu0 %v3145
    %v3500 = vpop.f32.mrb[0].mxu0
    %v3501 = vadd.f32 0.0, %v3500
    %v3502 = vpop.f32.mrb[0].mxu0
    %v3503 = vadd.f32 0.0, %v3502
    %3504 = vmatprep.mubr.f32.mxu0 %v3148
    %3505 = vmatmul.mubr.f32.gmra.mrb[0].mxu0 %v3147
    %v3506 = vpop.f32.mrb[0].mxu0
    %v3507 = vadd.f32 0.0, %v3506
    %v3508 = vpop.f32.mrb[0].mxu0
    %v3509 = vadd.f32 0.0, %v3508
    %3510 = vmatprep.mubr.f32.mxu0 %v3150
    %3511 = vmatmul.mubr.f32.gmra.mrb[0].mxu0 %v3149
    %v3512 = vpop.f32.mrb[0].mxu0
    %v3513 = vadd.f32 0.0, %v3512
    %v3514 = vpop.f32.mrb[0].mxu0
    %v3515 = vadd.f32 0.0, %v3514
    %3516 = vmatprep.mubr.f32.mxu0 %v3152
    %3517 = vmatmul.mubr.f32.gmra.mrb[0].mxu0 %v3151
    %v3518 = vpop.f32.mrb[0].mxu0
    %v3519 = vadd.f32 0.0, %v3518
    %v3520 = vpop.f32.mrb[0].mxu0
    %v3521 = vadd.f32 0.0, %v3520
    %3522 = vmatprep.mubr.f32.mxu0 %v3154
    %3523 = vmatmul.mubr.f32.gmra.mrb[0].mxu0 %v3153
    %v3524 = vpop.f32.mrb[0].mxu0
    %v3525 = vadd.f32 0.0, %v3524
    %v3526 = vpop.f32.mrb[0].mxu0
    %v3527 = vadd.f32 0.0, %v3526
    %3528 = vmatprep.mubr.f32.mxu0 %v3156
    %3529 = vmatmul.mubr.f32.gmra.mrb[0].mxu0 %v3155
    %v3530 = vpop.f32.mrb[0].mxu0
    %v3531 = vadd.f32 0.0, %v3530
    %v3532 = vpop.f32.mrb[0].mxu0
    %v3533 = vadd.f32 0.0, %v3532
    %3534 = vmatprep.mubr.f32.mxu0 %v3158
    %3535 = vmatmul.mubr.f32.gmra.mrb[0].mxu0 %v3157
    %v3536 = vpop.f32.mrb[0].mxu0
    %v3537 = vadd.f32 0.0, %v3536
    %v3538 = vpop.f32.mrb[0].mxu0
    %v3539 = vadd.f32 0.0, %v3538
    %3540 = vmatprep.mubr.f32.mxu0 %v3160
    %3541 = vmatmul.mubr.f32.gmra.mrb[0].mxu0 %v3159
    %v3542 = vpop.f32.mrb[0].mxu0
    %v3543 = vadd.f32 0.0, %v3542
    %v3544 = vpop.f32.mrb[0].mxu0
    %v3545 = vadd.f32 0.0, %v3544
    %3546 = vdwg.mxu0
    %3547 = vmatprep.subr.mxu0 %v3165
    %3548 = vmatpush1.msra.mxu0 %v3164
    %3549 = vmatprep.subr.mxu0 %v3169
    %3550 = vmatpush1.msra.mxu0 %v3168
    %3551 = vmatprep.subr.mxu0 %v3173
    %3552 = vmatpush1.msra.mxu0 %v3172
    %3553 = vmatprep.subr.mxu0 %v3177
    %3554 = vmatpush1.msra.mxu0 %v3176
    %3555 = vmatprep.subr.mxu0 %v3181
    %3556 = vmatpush1.msra.mxu0 %v3180
    %3557 = vmatprep.subr.mxu0 %v3185
    %3558 = vmatpush1.msra.mxu0 %v3184
    %3559 = vmatprep.subr.mxu0 %v3189
    %3560 = vmatpush1.msra.mxu0 %v3188
    %3561 = vmatprep.subr.mxu0 %v3193
    %3562 = vmatpush1.msra.mxu0 %v3192
    %3563 = vmatprep.subr.mxu0 %v3197
    %3564 = vmatpush1.msra.mxu0 %v3196
    %3565 = vmatprep.subr.mxu0 %v3201
    %3566 = vmatpush1.msra.mxu0 %v3200
    %3567 = vmatprep.subr.mxu0 %v3205
    %3568 = vmatpush1.msra.mxu0 %v3204
    %3569 = vmatprep.subr.mxu0 %v3209
    %3570 = vmatpush1.msra.mxu0 %v3208
    %3571 = vmatprep.subr.mxu0 %v3213
    %3572 = vmatpush1.msra.mxu0 %v3212
    %3573 = vmatprep.subr.mxu0 %v3217
    %3574 = vmatpush1.msra.mxu0 %v3216
    %3575 = vmatprep.subr.mxu0 %v3221
    %3576 = vmatpush1.msra.mxu0 %v3220
    %3577 = vmatprep.subr.mxu0 %v3225
    %3578 = vmatpush1.msra.mxu0 %v3224
    %3579 = vmatprep.subr.mxu0 %v3229
    %3580 = vmatpush1.msra.mxu0 %v3228
    %3581 = vmatprep.subr.mxu0 %v3233
    %3582 = vmatpush1.msra.mxu0 %v3232
    %3583 = vmatprep.subr.mxu0 %v3237
    %3584 = vmatpush1.msra.mxu0 %v3236
    %3585 = vmatprep.subr.mxu0 %v3241
    %3586 = vmatpush1.msra.mxu0 %v3240
    %3587 = vmatprep.subr.mxu0 %v3245
    %3588 = vmatpush1.msra.mxu0 %v3244
    %3589 = vmatprep.subr.mxu0 %v3249
    %3590 = vmatpush1.msra.mxu0 %v3248
    %3591 = vmatprep.subr.mxu0 %v3253
    %3592 = vmatpush1.msra.mxu0 %v3252
    %3593 = vmatprep.subr.mxu0 %v3257
    %3594 = vmatpush1.msra.mxu0 %v3256
    %3595 = vmatprep.subr.mxu0 %v3261
    %3596 = vmatpush1.msra.mxu0 %v3260
    %3597 = vmatprep.subr.mxu0 %v3265
    %3598 = vmatpush1.msra.mxu0 %v3264
    %3599 = vmatprep.subr.mxu0 %v3269
    %3600 = vmatpush1.msra.mxu0 %v3268
    %3601 = vmatprep.subr.mxu0 %v3273
    %3602 = vmatpush1.msra.mxu0 %v3272
    %3603 = vmatprep.subr.mxu0 %v3277
    %3604 = vmatpush1.msra.mxu0 %v3276
    %3605 = vmatprep.subr.mxu0 %v3281
    %3606 = vmatpush1.msra.mxu0 %v3280
    %3607 = vmatprep.subr.mxu0 %v3285
    %3608 = vmatpush1.msra.mxu0 %v3284
    %3609 = vmatprep.subr.mxu0 %v3289
    %3610 = vmatpush1.msra.mxu0 %v3288
    %3611 = vmatprep.mubr.f32.mxu0 %v3098
    %3612 = vmatmul.mubr.f32.gmra.mrb[0].mxu0 %v3097
    %v3613 = vpop.f32.mrb[0].mxu0
    %v3614 = vadd.f32 0.0, %v3613
    %v3615 = vpop.f32.mrb[0].mxu0
    %v3616 = vadd.f32 0.0, %v3615
    %3617 = vmatprep.mubr.f32.mxu0 %v3100
    %3618 = vmatmul.mubr.f32.gmra.mrb[0].mxu0 %v3099
    %v3619 = vpop.f32.mrb[0].mxu0
    %v3620 = vadd.f32 0.0, %v3619
    %v3621 = vpop.f32.mrb[0].mxu0
    %v3622 = vadd.f32 0.0, %v3621
    %3623 = vmatprep.mubr.f32.mxu0 %v3102
    %3624 = vmatmul.mubr.f32.gmra.mrb[0].mxu0 %v3101
    %v3625 = vpop.f32.mrb[0].mxu0
    %v3626 = vadd.f32 0.0, %v3625
    %v3627 = vpop.f32.mrb[0].mxu0
    %v3628 = vadd.f32 0.0, %v3627
    %3629 = vmatprep.mubr.f32.mxu0 %v3104
    %3630 = vmatmul.mubr.f32.gmra.mrb[0].mxu0 %v3103
    %v3631 = vpop.f32.mrb[0].mxu0
    %v3632 = vadd.f32 0.0, %v3631
    %v3633 = vpop.f32.mrb[0].mxu0
    %v3634 = vadd.f32 0.0, %v3633
    %3635 = vmatprep.mubr.f32.mxu0 %v3106
    %3636 = vmatmul.mubr.f32.gmra.mrb[0].mxu0 %v3105
    %v3637 = vpop.f32.mrb[0].mxu0
    %v3638 = vadd.f32 0.0, %v3637
    %v3639 = vpop.f32.mrb[0].mxu0
    %v3640 = vadd.f32 0.0, %v3639
    %3641 = vmatprep.mubr.f32.mxu0 %v3108
    %3642 = vmatmul.mubr.f32.gmra.mrb[0].mxu0 %v3107
    %v3643 = vpop.f32.mrb[0].mxu0
    %v3644 = vadd.f32 0.0, %v3643
    %v3645 = vpop.f32.mrb[0].mxu0
    %v3646 = vadd.f32 0.0, %v3645
    %3647 = vmatprep.mubr.f32.mxu0 %v3110
    %3648 = vmatmul.mubr.f32.gmra.mrb[0].mxu0 %v3109
    %v3649 = vpop.f32.mrb[0].mxu0
    %v3650 = vadd.f32 0.0, %v3649
    %v3651 = vpop.f32.mrb[0].mxu0
    %v3652 = vadd.f32 0.0, %v3651
    %3653 = vmatprep.mubr.f32.mxu0 %v3112
    %3654 = vmatmul.mubr.f32.gmra.mrb[0].mxu0 %v3111
    %v3655 = vpop.f32.mrb[0].mxu0
    %v3656 = vadd.f32 0.0, %v3655
    %v3657 = vpop.f32.mrb[0].mxu0
    %v3658 = vadd.f32 0.0, %v3657
    %3659 = vmatprep.mubr.f32.mxu0 %v3114
    %3660 = vmatmul.mubr.f32.gmra.mrb[0].mxu0 %v3113
    %v3661 = vpop.f32.mrb[0].mxu0
    %v3662 = vadd.f32 0.0, %v3661
    %v3663 = vpop.f32.mrb[0].mxu0
    %v3664 = vadd.f32 0.0, %v3663
    %3665 = vmatprep.mubr.f32.mxu0 %v3116
    %3666 = vmatmul.mubr.f32.gmra.mrb[0].mxu0 %v3115
    %v3667 = vpop.f32.mrb[0].mxu0
    %v3668 = vadd.f32 0.0, %v3667
    %v3669 = vpop.f32.mrb[0].mxu0
    %v3670 = vadd.f32 0.0, %v3669
    %3671 = vmatprep.mubr.f32.mxu0 %v3118
    %3672 = vmatmul.mubr.f32.gmra.mrb[0].mxu0 %v3117
    %v3673 = vpop.f32.mrb[0].mxu0
    %v3674 = vadd.f32 0.0, %v3673
    %v3675 = vpop.f32.mrb[0].mxu0
    %v3676 = vadd.f32 0.0, %v3675
    %3677 = vmatprep.mubr.f32.mxu0 %v3120
    %3678 = vmatmul.mubr.f32.gmra.mrb[0].mxu0 %v3119
    %v3679 = vpop.f32.mrb[0].mxu0
    %v3680 = vadd.f32 0.0, %v3679
    %v3681 = vpop.f32.mrb[0].mxu0
    %v3682 = vadd.f32 0.0, %v3681
    %3683 = vmatprep.mubr.f32.mxu0 %v3122
    %3684 = vmatmul.mubr.f32.gmra.mrb[0].mxu0 %v3121
    %v3685 = vpop.f32.mrb[0].mxu0
    %v3686 = vadd.f32 0.0, %v3685
    %v3687 = vpop.f32.mrb[0].mxu0
    %v3688 = vadd.f32 0.0, %v3687
    %3689 = vmatprep.mubr.f32.mxu0 %v3124
    %3690 = vmatmul.mubr.f32.gmra.mrb[0].mxu0 %v3123
    %v3691 = vpop.f32.mrb[0].mxu0
    %v3692 = vadd.f32 0.0, %v3691
    %v3693 = vpop.f32.mrb[0].mxu0
    %v3694 = vadd.f32 0.0, %v3693
    %3695 = vmatprep.mubr.f32.mxu0 %v3126
    %3696 = vmatmul.mubr.f32.gmra.mrb[0].mxu0 %v3125
    %v3697 = vpop.f32.mrb[0].mxu0
    %v3698 = vadd.f32 0.0, %v3697
    %v3699 = vpop.f32.mrb[0].mxu0
    %v3700 = vadd.f32 0.0, %v3699
    %3701 = vmatprep.mubr.f32.mxu0 %v3128
    %3702 = vmatmul.mubr.f32.gmra.mrb[0].mxu0 %v3127
    %v3703 = vpop.f32.mrb[0].mxu0
    %v3704 = vadd.f32 0.0, %v3703
    %v3705 = vpop.f32.mrb[0].mxu0
    %v3706 = vadd.f32 0.0, %v3705
    %3707 = vmatprep.mubr.f32.mxu0 %v3130
    %3708 = vmatmul.mubr.f32.gmra.mrb[0].mxu0 %v3129
    %v3709 = vpop.f32.mrb[0].mxu0
    %v3710 = vadd.f32 0.0, %v3709
    %v3711 = vpop.f32.mrb[0].mxu0
    %v3712 = vadd.f32 0.0, %v3711
    %3713 = vmatprep.mubr.f32.mxu0 %v3132
    %3714 = vmatmul.mubr.f32.gmra.mrb[0].mxu0 %v3131
    %v3715 = vpop.f32.mrb[0].mxu0
    %v3716 = vadd.f32 0.0, %v3715
    %v3717 = vpop.f32.mrb[0].mxu0
    %v3718 = vadd.f32 0.0, %v3717
    %3719 = vmatprep.mubr.f32.mxu0 %v3134
    %3720 = vmatmul.mubr.f32.gmra.mrb[0].mxu0 %v3133
    %v3721 = vpop.f32.mrb[0].mxu0
    %v3722 = vadd.f32 0.0, %v3721
    %v3723 = vpop.f32.mrb[0].mxu0
    %v3724 = vadd.f32 0.0, %v3723
    %3725 = vmatprep.mubr.f32.mxu0 %v3136
    %3726 = vmatmul.mubr.f32.gmra.mrb[0].mxu0 %v3135
    %v3727 = vpop.f32.mrb[0].mxu0
    %v3728 = vadd.f32 0.0, %v3727
    %v3729 = vpop.f32.mrb[0].mxu0
    %v3730 = vadd.f32 0.0, %v3729
    %3731 = vmatprep.mubr.f32.mxu0 %v3138
    %3732 = vmatmul.mubr.f32.gmra.mrb[0].mxu0 %v3137
    %v3733 = vpop.f32.mrb[0].mxu0
    %v3734 = vadd.f32 0.0, %v3733
    %v3735 = vpop.f32.mrb[0].mxu0
    %v3736 = vadd.f32 0.0, %v3735
    %3737 = vmatprep.mubr.f32.mxu0 %v3140
    %3738 = vmatmul.mubr.f32.gmra.mrb[0].mxu0 %v3139
    %v3739 = vpop.f32.mrb[0].mxu0
    %v3740 = vadd.f32 0.0, %v3739
    %v3741 = vpop.f32.mrb[0].mxu0
    %v3742 = vadd.f32 0.0, %v3741
    %3743 = vmatprep.mubr.f32.mxu0 %v3142
    %3744 = vmatmul.mubr.f32.gmra.mrb[0].mxu0 %v3141
    %v3745 = vpop.f32.mrb[0].mxu0
    %v3746 = vadd.f32 0.0, %v3745
    %v3747 = vpop.f32.mrb[0].mxu0
    %v3748 = vadd.f32 0.0, %v3747
    %3749 = vmatprep.mubr.f32.mxu0 %v3144
    %3750 = vmatmul.mubr.f32.gmra.mrb[0].mxu0 %v3143
    %v3751 = vpop.f32.mrb[0].mxu0
    %v3752 = vadd.f32 0.0, %v3751
    %v3753 = vpop.f32.mrb[0].mxu0
    %v3754 = vadd.f32 0.0, %v3753
    %3755 = vmatprep.mubr.f32.mxu0 %v3146
    %3756 = vmatmul.mubr.f32.gmra.mrb[0].mxu0 %v3145
    %v3757 = vpop.f32.mrb[0].mxu0
    %v3758 = vadd.f32 0.0, %v3757
    %v3759 = vpop.f32.mrb[0].mxu0
    %v3760 = vadd.f32 0.0, %v3759
    %3761 = vmatprep.mubr.f32.mxu0 %v3148
    %3762 = vmatmul.mubr.f32.gmra.mrb[0].mxu0 %v3147
    %v3763 = vpop.f32.mrb[0].mxu0
    %v3764 = vadd.f32 0.0, %v3763
    %v3765 = vpop.f32.mrb[0].mxu0
    %v3766 = vadd.f32 0.0, %v3765
    %3767 = vmatprep.mubr.f32.mxu0 %v3150
    %3768 = vmatmul.mubr.f32.gmra.mrb[0].mxu0 %v3149
    %v3769 = vpop.f32.mrb[0].mxu0
    %v3770 = vadd.f32 0.0, %v3769
    %v3771 = vpop.f32.mrb[0].mxu0
    %v3772 = vadd.f32 0.0, %v3771
    %3773 = vmatprep.mubr.f32.mxu0 %v3152
    %3774 = vmatmul.mubr.f32.gmra.mrb[0].mxu0 %v3151
    %v3775 = vpop.f32.mrb[0].mxu0
    %v3776 = vadd.f32 0.0, %v3775
    %v3777 = vpop.f32.mrb[0].mxu0
    %v3778 = vadd.f32 0.0, %v3777
    %3779 = vmatprep.mubr.f32.mxu0 %v3154
    %3780 = vmatmul.mubr.f32.gmra.mrb[0].mxu0 %v3153
    %v3781 = vpop.f32.mrb[0].mxu0
    %v3782 = vadd.f32 0.0, %v3781
    %v3783 = vpop.f32.mrb[0].mxu0
    %v3784 = vadd.f32 0.0, %v3783
    %3785 = vmatprep.mubr.f32.mxu0 %v3156
    %3786 = vmatmul.mubr.f32.gmra.mrb[0].mxu0 %v3155
    %v3787 = vpop.f32.mrb[0].mxu0
    %v3788 = vadd.f32 0.0, %v3787
    %v3789 = vpop.f32.mrb[0].mxu0
    %v3790 = vadd.f32 0.0, %v3789
    %3791 = vmatprep.mubr.f32.mxu0 %v3158
    %3792 = vmatmul.mubr.f32.gmra.mrb[0].mxu0 %v3157
    %v3793 = vpop.f32.mrb[0].mxu0
    %v3794 = vadd.f32 0.0, %v3793
    %v3795 = vpop.f32.mrb[0].mxu0
    %v3796 = vadd.f32 0.0, %v3795
    %3797 = vmatprep.mubr.f32.mxu0 %v3160
    %3798 = vmatmul.mubr.f32.gmra.mrb[0].mxu0 %v3159
    %v3799 = vpop.f32.mrb[0].mxu0
    %v3800 = vadd.f32 0.0, %v3799
    %v3801 = vpop.f32.mrb[0].mxu0
    %v3802 = vadd.f32 0.0, %v3801
    %3803 = vdwg.mxu0
    %v3804 = vadd.f32 %v2649, %v3357
    %v3805 = vadd.f32 %v2651, %v3359
    %v3806 = vadd.f32 %v2906, %v3614
    %v3807 = vadd.f32 %v2908, %v3616
    %v3808 = vadd.f32 %v2655, %v3363
    %v3809 = vadd.f32 %v2657, %v3365
    %v3810 = vadd.f32 %v2912, %v3620
    %v3811 = vadd.f32 %v2914, %v3622
    %v3812 = vadd.f32 %v2661, %v3369
    %v3813 = vadd.f32 %v2663, %v3371
    %v3814 = vadd.f32 %v2918, %v3626
    %v3815 = vadd.f32 %v2920, %v3628
    %v3816 = vadd.f32 %v2667, %v3375
    %v3817 = vadd.f32 %v2669, %v3377
    %v3818 = vadd.f32 %v2924, %v3632
    %v3819 = vadd.f32 %v2926, %v3634
    %v3820 = vadd.f32 %v2673, %v3381
    %v3821 = vadd.f32 %v2675, %v3383
    %v3822 = vadd.f32 %v2930, %v3638
    %v3823 = vadd.f32 %v2932, %v3640
    %v3824 = vadd.f32 %v2679, %v3387
    %v3825 = vadd.f32 %v2681, %v3389
    %v3826 = vadd.f32 %v2936, %v3644
    %v3827 = vadd.f32 %v2938, %v3646
    %v3828 = vadd.f32 %v2685, %v3393
    %v3829 = vadd.f32 %v2687, %v3395
    %v3830 = vadd.f32 %v2942, %v3650
    %v3831 = vadd.f32 %v2944, %v3652
    %v3832 = vadd.f32 %v2691, %v3399
    %v3833 = vadd.f32 %v2693, %v3401
    %v3834 = vadd.f32 %v2948, %v3656
    %v3835 = vadd.f32 %v2950, %v3658
    %v3836 = vadd.f32 %v2697, %v3405
    %v3837 = vadd.f32 %v2699, %v3407
    %v3838 = vadd.f32 %v2954, %v3662
    %v3839 = vadd.f32 %v2956, %v3664
    %v3840 = vadd.f32 %v2703, %v3411
    %v3841 = vadd.f32 %v2705, %v3413
    %v3842 = vadd.f32 %v2960, %v3668
    %v3843 = vadd.f32 %v2962, %v3670
    %v3844 = vadd.f32 %v2709, %v3417
    %v3845 = vadd.f32 %v2711, %v3419
    %v3846 = vadd.f32 %v2966, %v3674
    %v3847 = vadd.f32 %v2968, %v3676
    %v3848 = vadd.f32 %v2715, %v3423
    %v3849 = vadd.f32 %v2717, %v3425
    %v3850 = vadd.f32 %v2972, %v3680
    %v3851 = vadd.f32 %v2974, %v3682
    %v3852 = vadd.f32 %v2721, %v3429
    %v3853 = vadd.f32 %v2723, %v3431
    %v3854 = vadd.f32 %v2978, %v3686
    %v3855 = vadd.f32 %v2980, %v3688
    %v3856 = vadd.f32 %v2727, %v3435
    %v3857 = vadd.f32 %v2729, %v3437
    %v3858 = vadd.f32 %v2984, %v3692
    %v3859 = vadd.f32 %v2986, %v3694
    %v3860 = vadd.f32 %v2733, %v3441
    %v3861 = vadd.f32 %v2735, %v3443
    %v3862 = vadd.f32 %v2990, %v3698
    %v3863 = vadd.f32 %v2992, %v3700
    %v3864 = vadd.f32 %v2739, %v3447
    %v3865 = vadd.f32 %v2741, %v3449
    %v3866 = vadd.f32 %v2996, %v3704
    %v3867 = vadd.f32 %v2998, %v3706
    %v3868 = vadd.f32 %v2745, %v3453
    %v3869 = vadd.f32 %v2747, %v3455
    %v3870 = vadd.f32 %v3002, %v3710
    %v3871 = vadd.f32 %v3004, %v3712
    %v3872 = vadd.f32 %v2751, %v3459
    %v3873 = vadd.f32 %v2753, %v3461
    %v3874 = vadd.f32 %v3008, %v3716
    %v3875 = vadd.f32 %v3010, %v3718
    %v3876 = vadd.f32 %v2757, %v3465
    %v3877 = vadd.f32 %v2759, %v3467
    %v3878 = vadd.f32 %v3014, %v3722
    %v3879 = vadd.f32 %v3016, %v3724
    %v3880 = vadd.f32 %v2763, %v3471
    %v3881 = vadd.f32 %v2765, %v3473
    %v3882 = vadd.f32 %v3020, %v3728
    %v3883 = vadd.f32 %v3022, %v3730
    %v3884 = vadd.f32 %v2769, %v3477
    %v3885 = vadd.f32 %v2771, %v3479
    %v3886 = vadd.f32 %v3026, %v3734
    %v3887 = vadd.f32 %v3028, %v3736
    %v3888 = vadd.f32 %v2775, %v3483
    %v3889 = vadd.f32 %v2777, %v3485
    %v3890 = vadd.f32 %v3032, %v3740
    %v3891 = vadd.f32 %v3034, %v3742
    %v3892 = vadd.f32 %v2781, %v3489
    %v3893 = vadd.f32 %v2783, %v3491
    %v3894 = vadd.f32 %v3038, %v3746
    %v3895 = vadd.f32 %v3040, %v3748
    %v3896 = vadd.f32 %v2787, %v3495
    %v3897 = vadd.f32 %v2789, %v3497
    %v3898 = vadd.f32 %v3044, %v3752
    %v3899 = vadd.f32 %v3046, %v3754
    %v3900 = vadd.f32 %v2793, %v3501
    %v3901 = vadd.f32 %v2795, %v3503
    %v3902 = vadd.f32 %v3050, %v3758
    %v3903 = vadd.f32 %v3052, %v3760
    %v3904 = vadd.f32 %v2799, %v3507
    %v3905 = vadd.f32 %v2801, %v3509
    %v3906 = vadd.f32 %v3056, %v3764
    %v3907 = vadd.f32 %v3058, %v3766
    %v3908 = vadd.f32 %v2805, %v3513
    %v3909 = vadd.f32 %v2807, %v3515
    %v3910 = vadd.f32 %v3062, %v3770
    %v3911 = vadd.f32 %v3064, %v3772
    %v3912 = vadd.f32 %v2811, %v3519
    %v3913 = vadd.f32 %v2813, %v3521
    %v3914 = vadd.f32 %v3068, %v3776
    %v3915 = vadd.f32 %v3070, %v3778
    %v3916 = vadd.f32 %v2817, %v3525
    %v3917 = vadd.f32 %v2819, %v3527
    %v3918 = vadd.f32 %v3074, %v3782
    %v3919 = vadd.f32 %v3076, %v3784
    %v3920 = vadd.f32 %v2823, %v3531
    %v3921 = vadd.f32 %v2825, %v3533
    %v3922 = vadd.f32 %v3080, %v3788
    %v3923 = vadd.f32 %v3082, %v3790
    %v3924 = vadd.f32 %v2829, %v3537
    %v3925 = vadd.f32 %v2831, %v3539
    %v3926 = vadd.f32 %v3086, %v3794
    %v3927 = vadd.f32 %v3088, %v3796
    %v3928 = vadd.f32 %v2835, %v3543
    %v3929 = vadd.f32 %v2837, %v3545
    %v3930 = vadd.f32 %v3092, %v3800
    %v3931 = vadd.f32 %v3094, %v3802
    %v3932 = vld [vmem:[#allocation12] sm:$0xf]
    %v3934 = vlaneseq
    %v3935 = vshrl.u32 %v3934, 7
    %v3936 = vsub.s32 0, %v3935
    %v3937 = vrot.slane %v3932, %v3936
    %v3938 = vlaneseq
    %v3939 = vshrl.u32 %v3938, 7
    %v3940 = vsub.s32 1, %v3939
    %v3941 = vrot.slane %v3932, %v3940
    %v3942 = vlaneseq
    %v3943 = vshrl.u32 %v3942, 7
    %v3944 = vsub.s32 2, %v3943
    %v3945 = vrot.slane %v3932, %v3944
    %v3946 = vlaneseq
    %v3947 = vshrl.u32 %v3946, 7
    %v3948 = vsub.s32 3, %v3947
    %v3949 = vrot.slane %v3932, %v3948
    %v3954 = vadd.f32 %v3804, %v3937
    %v3955 = vadd.f32 %v3805, %v3941
    %v3956 = vadd.f32 %v3806, %v3945
    %v3957 = vadd.f32 %v3807, %v3949
    %v3958 = vadd.f32 %v3808, %v3937
    %v3959 = vadd.f32 %v3809, %v3941
    %v3960 = vadd.f32 %v3810, %v3945
    %v3961 = vadd.f32 %v3811, %v3949
    %v3962 = vadd.f32 %v3812, %v3937
    %v3963 = vadd.f32 %v3813, %v3941
    %v3964 = vadd.f32 %v3814, %v3945
    %v3965 = vadd.f32 %v3815, %v3949
    %v3966 = vadd.f32 %v3816, %v3937
    %v3967 = vadd.f32 %v3817, %v3941
    %v3968 = vadd.f32 %v3818, %v3945
    %v3969 = vadd.f32 %v3819, %v3949
    %v3970 = vadd.f32 %v3820, %v3937
    %v3971 = vadd.f32 %v3821, %v3941
    %v3972 = vadd.f32 %v3822, %v3945
    %v3973 = vadd.f32 %v3823, %v3949
    %v3974 = vadd.f32 %v3824, %v3937
    %v3975 = vadd.f32 %v3825, %v3941
    %v3976 = vadd.f32 %v3826, %v3945
    %v3977 = vadd.f32 %v3827, %v3949
    %v3978 = vadd.f32 %v3828, %v3937
    %v3979 = vadd.f32 %v3829, %v3941
    %v3980 = vadd.f32 %v3830, %v3945
    %v3981 = vadd.f32 %v3831, %v3949
    %v3982 = vadd.f32 %v3832, %v3937
    %v3983 = vadd.f32 %v3833, %v3941
    %v3984 = vadd.f32 %v3834, %v3945
    %v3985 = vadd.f32 %v3835, %v3949
    %v3986 = vadd.f32 %v3836, %v3937
    %v3987 = vadd.f32 %v3837, %v3941
    %v3988 = vadd.f32 %v3838, %v3945
    %v3989 = vadd.f32 %v3839, %v3949
    %v3990 = vadd.f32 %v3840, %v3937
    %v3991 = vadd.f32 %v3841, %v3941
    %v3992 = vadd.f32 %v3842, %v3945
    %v3993 = vadd.f32 %v3843, %v3949
    %v3994 = vadd.f32 %v3844, %v3937
    %v3995 = vadd.f32 %v3845, %v3941
    %v3996 = vadd.f32 %v3846, %v3945
    %v3997 = vadd.f32 %v3847, %v3949
    %v3998 = vadd.f32 %v3848, %v3937
    %v3999 = vadd.f32 %v3849, %v3941
    %v4000 = vadd.f32 %v3850, %v3945
    %v4001 = vadd.f32 %v3851, %v3949
    %v4002 = vadd.f32 %v3852, %v3937
    %v4003 = vadd.f32 %v3853, %v3941
    %v4004 = vadd.f32 %v3854, %v3945
    %v4005 = vadd.f32 %v3855, %v3949
    %v4006 = vadd.f32 %v3856, %v3937
    %v4007 = vadd.f32 %v3857, %v3941
    %v4008 = vadd.f32 %v3858, %v3945
    %v4009 = vadd.f32 %v3859, %v3949
    %v4010 = vadd.f32 %v3860, %v3937
    %v4011 = vadd.f32 %v3861, %v3941
    %v4012 = vadd.f32 %v3862, %v3945
    %v4013 = vadd.f32 %v3863, %v3949
    %v4014 = vadd.f32 %v3864, %v3937
    %v4015 = vadd.f32 %v3865, %v3941
    %v4016 = vadd.f32 %v3866, %v3945
    %v4017 = vadd.f32 %v3867, %v3949
    %v4018 = vadd.f32 %v3868, %v3937
    %v4019 = vadd.f32 %v3869, %v3941
    %v4020 = vadd.f32 %v3870, %v3945
    %v4021 = vadd.f32 %v3871, %v3949
    %v4022 = vadd.f32 %v3872, %v3937
    %v4023 = vadd.f32 %v3873, %v3941
    %v4024 = vadd.f32 %v3874, %v3945
    %v4025 = vadd.f32 %v3875, %v3949
    %v4026 = vadd.f32 %v3876, %v3937
    %v4027 = vadd.f32 %v3877, %v3941
    %v4028 = vadd.f32 %v3878, %v3945
    %v4029 = vadd.f32 %v3879, %v3949
    %v4030 = vadd.f32 %v3880, %v3937
    %v4031 = vadd.f32 %v3881, %v3941
    %v4032 = vadd.f32 %v3882, %v3945
    %v4033 = vadd.f32 %v3883, %v3949
    %v4034 = vadd.f32 %v3884, %v3937
    %v4035 = vadd.f32 %v3885, %v3941
    %v4036 = vadd.f32 %v3886, %v3945
    %v4037 = vadd.f32 %v3887, %v3949
    %v4038 = vadd.f32 %v3888, %v3937
    %v4039 = vadd.f32 %v3889, %v3941
    %v4040 = vadd.f32 %v3890, %v3945
    %v4041 = vadd.f32 %v3891, %v3949
    %v4042 = vadd.f32 %v3892, %v3937
    %v4043 = vadd.f32 %v3893, %v3941
    %v4044 = vadd.f32 %v3894, %v3945
    %v4045 = vadd.f32 %v3895, %v3949
    %v4046 = vadd.f32 %v3896, %v3937
    %v4047 = vadd.f32 %v3897, %v3941
    %v4048 = vadd.f32 %v3898, %v3945
    %v4049 = vadd.f32 %v3899, %v3949
    %v4050 = vadd.f32 %v3900, %v3937
    %v4051 = vadd.f32 %v3901, %v3941
    %v4052 = vadd.f32 %v3902, %v3945
    %v4053 = vadd.f32 %v3903, %v3949
    %v4054 = vadd.f32 %v3904, %v3937
    %v4055 = vadd.f32 %v3905, %v3941
    %v4056 = vadd.f32 %v3906, %v3945
    %v4057 = vadd.f32 %v3907, %v3949
    %v4058 = vadd.f32 %v3908, %v3937
    %v4059 = vadd.f32 %v3909, %v3941
    %v4060 = vadd.f32 %v3910, %v3945
    %v4061 = vadd.f32 %v3911, %v3949
    %v4062 = vadd.f32 %v3912, %v3937
    %v4063 = vadd.f32 %v3913, %v3941
    %v4064 = vadd.f32 %v3914, %v3945
    %v4065 = vadd.f32 %v3915, %v3949
    %v4066 = vadd.f32 %v3916, %v3937
    %v4067 = vadd.f32 %v3917, %v3941
    %v4068 = vadd.f32 %v3918, %v3945
    %v4069 = vadd.f32 %v3919, %v3949
    %v4070 = vadd.f32 %v3920, %v3937
    %v4071 = vadd.f32 %v3921, %v3941
    %v4072 = vadd.f32 %v3922, %v3945
    %v4073 = vadd.f32 %v3923, %v3949
    %v4074 = vadd.f32 %v3924, %v3937
    %v4075 = vadd.f32 %v3925, %v3941
    %v4076 = vadd.f32 %v3926, %v3945
    %v4077 = vadd.f32 %v3927, %v3949
    %v4078 = vadd.f32 %v3928, %v3937
    %v4079 = vadd.f32 %v3929, %v3941
    %v4080 = vadd.f32 %v3930, %v3945
    %v4081 = vadd.f32 %v3931, %v3949
    %v4082 = vmax.f32 %v3954, 0.0
    %v4083 = vmax.f32 %v3955, 0.0
    %v4084 = vmax.f32 %v3956, 0.0
    %v4085 = vmax.f32 %v3957, 0.0
    %v4086 = vmax.f32 %v3958, 0.0
    %v4087 = vmax.f32 %v3959, 0.0
    %v4088 = vmax.f32 %v3960, 0.0
    %v4089 = vmax.f32 %v3961, 0.0
    %v4090 = vmax.f32 %v3962, 0.0
    %v4091 = vmax.f32 %v3963, 0.0
    %v4092 = vmax.f32 %v3964, 0.0
    %v4093 = vmax.f32 %v3965, 0.0
    %v4094 = vmax.f32 %v3966, 0.0
    %v4095 = vmax.f32 %v3967, 0.0
    %v4096 = vmax.f32 %v3968, 0.0
    %v4097 = vmax.f32 %v3969, 0.0
    %v4098 = vmax.f32 %v3970, 0.0
    %v4099 = vmax.f32 %v3971, 0.0
    %v4100 = vmax.f32 %v3972, 0.0
    %v4101 = vmax.f32 %v3973, 0.0
    %v4102 = vmax.f32 %v3974, 0.0
    %v4103 = vmax.f32 %v3975, 0.0
    %v4104 = vmax.f32 %v3976, 0.0
    %v4105 = vmax.f32 %v3977, 0.0
    %v4106 = vmax.f32 %v3978, 0.0
    %v4107 = vmax.f32 %v3979, 0.0
    %v4108 = vmax.f32 %v3980, 0.0
    %v4109 = vmax.f32 %v3981, 0.0
    %v4110 = vmax.f32 %v3982, 0.0
    %v4111 = vmax.f32 %v3983, 0.0
    %v4112 = vmax.f32 %v3984, 0.0
    %v4113 = vmax.f32 %v3985, 0.0
    %v4114 = vmax.f32 %v3986, 0.0
    %v4115 = vmax.f32 %v3987, 0.0
    %v4116 = vmax.f32 %v3988, 0.0
    %v4117 = vmax.f32 %v3989, 0.0
    %v4118 = vmax.f32 %v3990, 0.0
    %v4119 = vmax.f32 %v3991, 0.0
    %v4120 = vmax.f32 %v3992, 0.0
    %v4121 = vmax.f32 %v3993, 0.0
    %v4122 = vmax.f32 %v3994, 0.0
    %v4123 = vmax.f32 %v3995, 0.0
    %v4124 = vmax.f32 %v3996, 0.0
    %v4125 = vmax.f32 %v3997, 0.0
    %v4126 = vmax.f32 %v3998, 0.0
    %v4127 = vmax.f32 %v3999, 0.0
    %v4128 = vmax.f32 %v4000, 0.0
    %v4129 = vmax.f32 %v4001, 0.0
    %v4130 = vmax.f32 %v4002, 0.0
    %v4131 = vmax.f32 %v4003, 0.0
    %v4132 = vmax.f32 %v4004, 0.0
    %v4133 = vmax.f32 %v4005, 0.0
    %v4134 = vmax.f32 %v4006, 0.0
    %v4135 = vmax.f32 %v4007, 0.0
    %v4136 = vmax.f32 %v4008, 0.0
    %v4137 = vmax.f32 %v4009, 0.0
    %v4138 = vmax.f32 %v4010, 0.0
    %v4139 = vmax.f32 %v4011, 0.0
    %v4140 = vmax.f32 %v4012, 0.0
    %v4141 = vmax.f32 %v4013, 0.0
    %v4142 = vmax.f32 %v4014, 0.0
    %v4143 = vmax.f32 %v4015, 0.0
    %v4144 = vmax.f32 %v4016, 0.0
    %v4145 = vmax.f32 %v4017, 0.0
    %v4146 = vmax.f32 %v4018, 0.0
    %v4147 = vmax.f32 %v4019, 0.0
    %v4148 = vmax.f32 %v4020, 0.0
    %v4149 = vmax.f32 %v4021, 0.0
    %v4150 = vmax.f32 %v4022, 0.0
    %v4151 = vmax.f32 %v4023, 0.0
    %v4152 = vmax.f32 %v4024, 0.0
    %v4153 = vmax.f32 %v4025, 0.0
    %v4154 = vmax.f32 %v4026, 0.0
    %v4155 = vmax.f32 %v4027, 0.0
    %v4156 = vmax.f32 %v4028, 0.0
    %v4157 = vmax.f32 %v4029, 0.0
    %v4158 = vmax.f32 %v4030, 0.0
    %v4159 = vmax.f32 %v4031, 0.0
    %v4160 = vmax.f32 %v4032, 0.0
    %v4161 = vmax.f32 %v4033, 0.0
    %v4162 = vmax.f32 %v4034, 0.0
    %v4163 = vmax.f32 %v4035, 0.0
    %v4164 = vmax.f32 %v4036, 0.0
    %v4165 = vmax.f32 %v4037, 0.0
    %v4166 = vmax.f32 %v4038, 0.0
    %v4167 = vmax.f32 %v4039, 0.0
    %v4168 = vmax.f32 %v4040, 0.0
    %v4169 = vmax.f32 %v4041, 0.0
    %v4170 = vmax.f32 %v4042, 0.0
    %v4171 = vmax.f32 %v4043, 0.0
    %v4172 = vmax.f32 %v4044, 0.0
    %v4173 = vmax.f32 %v4045, 0.0
    %v4174 = vmax.f32 %v4046, 0.0
    %v4175 = vmax.f32 %v4047, 0.0
    %v4176 = vmax.f32 %v4048, 0.0
    %v4177 = vmax.f32 %v4049, 0.0
    %v4178 = vmax.f32 %v4050, 0.0
    %v4179 = vmax.f32 %v4051, 0.0
    %v4180 = vmax.f32 %v4052, 0.0
    %v4181 = vmax.f32 %v4053, 0.0
    %v4182 = vmax.f32 %v4054, 0.0
    %v4183 = vmax.f32 %v4055, 0.0
    %v4184 = vmax.f32 %v4056, 0.0
    %v4185 = vmax.f32 %v4057, 0.0
    %v4186 = vmax.f32 %v4058, 0.0
    %v4187 = vmax.f32 %v4059, 0.0
    %v4188 = vmax.f32 %v4060, 0.0
    %v4189 = vmax.f32 %v4061, 0.0
    %v4190 = vmax.f32 %v4062, 0.0
    %v4191 = vmax.f32 %v4063, 0.0
    %v4192 = vmax.f32 %v4064, 0.0
    %v4193 = vmax.f32 %v4065, 0.0
    %v4194 = vmax.f32 %v4066, 0.0
    %v4195 = vmax.f32 %v4067, 0.0
    %v4196 = vmax.f32 %v4068, 0.0
    %v4197 = vmax.f32 %v4069, 0.0
    %v4198 = vmax.f32 %v4070, 0.0
    %v4199 = vmax.f32 %v4071, 0.0
    %v4200 = vmax.f32 %v4072, 0.0
    %v4201 = vmax.f32 %v4073, 0.0
    %v4202 = vmax.f32 %v4074, 0.0
    %v4203 = vmax.f32 %v4075, 0.0
    %v4204 = vmax.f32 %v4076, 0.0
    %v4205 = vmax.f32 %v4077, 0.0
    %v4206 = vmax.f32 %v4078, 0.0
    %v4207 = vmax.f32 %v4079, 0.0
    %v4208 = vmax.f32 %v4080, 0.0
    %v4209 = vmax.f32 %v4081, 0.0
    %v4210 = vadd.f32 %v4082, %v4090
    %v4211 = vadd.f32 %v4210, %v4098
    %v4212 = vadd.f32 %v4211, %v4106
    %v4213 = vadd.f32 %v4212, %v4114
    %v4214 = vadd.f32 %v4213, %v4122
    %v4215 = vadd.f32 %v4214, %v4130
    %v4216 = vadd.f32 %v4215, %v4138
    %v4217 = vadd.f32 %v4216, %v4146
    %v4218 = vadd.f32 %v4217, %v4154
    %v4219 = vadd.f32 %v4218, %v4162
    %v4220 = vadd.f32 %v4219, %v4170
    %v4221 = vadd.f32 %v4220, %v4178
    %v4222 = vadd.f32 %v4221, %v4186
    %v4223 = vadd.f32 %v4222, %v4194
    %v4224 = vadd.f32 %v4223, %v4202
    %v4225 = vadd.f32 %v4083, %v4091
    %v4226 = vadd.f32 %v4225, %v4099
    %v4227 = vadd.f32 %v4226, %v4107
    %v4228 = vadd.f32 %v4227, %v4115
    %v4229 = vadd.f32 %v4228, %v4123
    %v4230 = vadd.f32 %v4229, %v4131
    %v4231 = vadd.f32 %v4230, %v4139
    %v4232 = vadd.f32 %v4231, %v4147
    %v4233 = vadd.f32 %v4232, %v4155
    %v4234 = vadd.f32 %v4233, %v4163
    %v4235 = vadd.f32 %v4234, %v4171
    %v4236 = vadd.f32 %v4235, %v4179
    %v4237 = vadd.f32 %v4236, %v4187
    %v4238 = vadd.f32 %v4237, %v4195
    %v4239 = vadd.f32 %v4238, %v4203
    %v4240 = vadd.f32 %v4084, %v4092
    %v4241 = vadd.f32 %v4240, %v4100
    %v4242 = vadd.f32 %v4241, %v4108
    %v4243 = vadd.f32 %v4242, %v4116
    %v4244 = vadd.f32 %v4243, %v4124
    %v4245 = vadd.f32 %v4244, %v4132
    %v4246 = vadd.f32 %v4245, %v4140
    %v4247 = vadd.f32 %v4246, %v4148
    %v4248 = vadd.f32 %v4247, %v4156
    %v4249 = vadd.f32 %v4248, %v4164
    %v4250 = vadd.f32 %v4249, %v4172
    %v4251 = vadd.f32 %v4250, %v4180
    %v4252 = vadd.f32 %v4251, %v4188
    %v4253 = vadd.f32 %v4252, %v4196
    %v4254 = vadd.f32 %v4253, %v4204
    %v4255 = vadd.f32 %v4085, %v4093
    %v4256 = vadd.f32 %v4255, %v4101
    %v4257 = vadd.f32 %v4256, %v4109
    %v4258 = vadd.f32 %v4257, %v4117
    %v4259 = vadd.f32 %v4258, %v4125
    %v4260 = vadd.f32 %v4259, %v4133
    %v4261 = vadd.f32 %v4260, %v4141
    %v4262 = vadd.f32 %v4261, %v4149
    %v4263 = vadd.f32 %v4262, %v4157
    %v4264 = vadd.f32 %v4263, %v4165
    %v4265 = vadd.f32 %v4264, %v4173
    %v4266 = vadd.f32 %v4265, %v4181
    %v4267 = vadd.f32 %v4266, %v4189
    %v4268 = vadd.f32 %v4267, %v4197
    %v4269 = vadd.f32 %v4268, %v4205
    %v4270 = vadd.f32 %v4086, %v4094
    %v4271 = vadd.f32 %v4270, %v4102
    %v4272 = vadd.f32 %v4271, %v4110
    %v4273 = vadd.f32 %v4272, %v4118
    %v4274 = vadd.f32 %v4273, %v4126
    %v4275 = vadd.f32 %v4274, %v4134
    %v4276 = vadd.f32 %v4275, %v4142
    %v4277 = vadd.f32 %v4276, %v4150
    %v4278 = vadd.f32 %v4277, %v4158
    %v4279 = vadd.f32 %v4278, %v4166
    %v4280 = vadd.f32 %v4279, %v4174
    %v4281 = vadd.f32 %v4280, %v4182
    %v4282 = vadd.f32 %v4281, %v4190
    %v4283 = vadd.f32 %v4282, %v4198
    %v4284 = vadd.f32 %v4283, %v4206
    %v4285 = vadd.f32 %v4087, %v4095
    %v4286 = vadd.f32 %v4285, %v4103
    %v4287 = vadd.f32 %v4286, %v4111
    %v4288 = vadd.f32 %v4287, %v4119
    %v4289 = vadd.f32 %v4288, %v4127
    %v4290 = vadd.f32 %v4289, %v4135
    %v4291 = vadd.f32 %v4290, %v4143
    %v4292 = vadd.f32 %v4291, %v4151
    %v4293 = vadd.f32 %v4292, %v4159
    %v4294 = vadd.f32 %v4293, %v4167
    %v4295 = vadd.f32 %v4294, %v4175
    %v4296 = vadd.f32 %v4295, %v4183
    %v4297 = vadd.f32 %v4296, %v4191
    %v4298 = vadd.f32 %v4297, %v4199
    %v4299 = vadd.f32 %v4298, %v4207
    %v4300 = vadd.f32 %v4088, %v4096
    %v4301 = vadd.f32 %v4300, %v4104
    %v4302 = vadd.f32 %v4301, %v4112
    %v4303 = vadd.f32 %v4302, %v4120
    %v4304 = vadd.f32 %v4303, %v4128
    %v4305 = vadd.f32 %v4304, %v4136
    %v4306 = vadd.f32 %v4305, %v4144
    %v4307 = vadd.f32 %v4306, %v4152
    %v4308 = vadd.f32 %v4307, %v4160
    %v4309 = vadd.f32 %v4308, %v4168
    %v4310 = vadd.f32 %v4309, %v4176
    %v4311 = vadd.f32 %v4310, %v4184
    %v4312 = vadd.f32 %v4311, %v4192
    %v4313 = vadd.f32 %v4312, %v4200
    %v4314 = vadd.f32 %v4313, %v4208
    %v4315 = vadd.f32 %v4089, %v4097
    %v4316 = vadd.f32 %v4315, %v4105
    %v4317 = vadd.f32 %v4316, %v4113
    %v4318 = vadd.f32 %v4317, %v4121
    %v4319 = vadd.f32 %v4318, %v4129
    %v4320 = vadd.f32 %v4319, %v4137
    %v4321 = vadd.f32 %v4320, %v4145
    %v4322 = vadd.f32 %v4321, %v4153
    %v4323 = vadd.f32 %v4322, %v4161
    %v4324 = vadd.f32 %v4323, %v4169
    %v4325 = vadd.f32 %v4324, %v4177
    %v4326 = vadd.f32 %v4325, %v4185
    %v4327 = vadd.f32 %v4326, %v4193
    %v4328 = vadd.f32 %v4327, %v4201
    %v4329 = vadd.f32 %v4328, %v4209
    %v4330 = vld [vmem:[#allocation13] sm:$0xff]
    %v4331 = vld [vmem:[#allocation13 + $0x8] sm:$0xff]
    %v4332 = vld [vmem:[#allocation13 + $0x10] sm:$0xff]
    %v4333 = vld [vmem:[#allocation13 + $0x18] sm:$0xff]
    %v4334 = vld [vmem:[#allocation13 + $0x20] sm:$0xff]
    %v4335 = vld [vmem:[#allocation13 + $0x28] sm:$0xff]
    %v4336 = vld [vmem:[#allocation13 + $0x30] sm:$0xff]
    %v4337 = vld [vmem:[#allocation13 + $0x38] sm:$0xff]
    %v4338 = vld [vmem:[#allocation13 + $0x40] sm:$0xff]
    %v4339 = vld [vmem:[#allocation13 + $0x48] sm:$0xff]
    %v4340 = vld [vmem:[#allocation13 + $0x50] sm:$0xff]
    %v4341 = vld [vmem:[#allocation13 + $0x58] sm:$0xff]
    %v4342 = vld [vmem:[#allocation13 + $0x60] sm:$0xff]
    %v4343 = vld [vmem:[#allocation13 + $0x68] sm:$0xff]
    %v4344 = vld [vmem:[#allocation13 + $0x70] sm:$0xff]
    %v4345 = vld [vmem:[#allocation13 + $0x78] sm:$0xff]
    %v4346 = vld [vmem:[#allocation13 + $0x80] sm:$0xff]
    %v4347 = vld [vmem:[#allocation13 + $0x88] sm:$0xff]
    %v4348 = vld [vmem:[#allocation13 + $0x90] sm:$0xff]
    %v4349 = vld [vmem:[#allocation13 + $0x98] sm:$0xff]
    %v4350 = vld [vmem:[#allocation13 + $0xa0] sm:$0xff]
    %v4351 = vld [vmem:[#allocation13 + $0xa8] sm:$0xff]
    %v4352 = vld [vmem:[#allocation13 + $0xb0] sm:$0xff]
    %v4353 = vld [vmem:[#allocation13 + $0xb8] sm:$0xff]
    %v4354 = vld [vmem:[#allocation13 + $0xc0] sm:$0xff]
    %v4355 = vld [vmem:[#allocation13 + $0xc8] sm:$0xff]
    %v4356 = vld [vmem:[#allocation13 + $0xd0] sm:$0xff]
    %v4357 = vld [vmem:[#allocation13 + $0xd8] sm:$0xff]
    %v4358 = vld [vmem:[#allocation13 + $0xe0] sm:$0xff]
    %v4359 = vld [vmem:[#allocation13 + $0xe8] sm:$0xff]
    %v4360 = vld [vmem:[#allocation13 + $0xf0] sm:$0xff]
    %v4361 = vld [vmem:[#allocation13 + $0xf8] sm:$0xff]
    %v4362 = vld [vmem:[#allocation13 + $0x100] sm:$0xff]
    %v4363 = vld [vmem:[#allocation13 + $0x108] sm:$0xff]
    %v4364 = vld [vmem:[#allocation13 + $0x110] sm:$0xff]
    %v4365 = vld [vmem:[#allocation13 + $0x118] sm:$0xff]
    %v4366 = vld [vmem:[#allocation13 + $0x120] sm:$0xff]
    %v4367 = vld [vmem:[#allocation13 + $0x128] sm:$0xff]
    %v4368 = vld [vmem:[#allocation13 + $0x130] sm:$0xff]
    %v4369 = vld [vmem:[#allocation13 + $0x138] sm:$0xff]
    %v4370 = vld [vmem:[#allocation13 + $0x140] sm:$0xff]
    %v4371 = vld [vmem:[#allocation13 + $0x148] sm:$0xff]
    %v4372 = vld [vmem:[#allocation13 + $0x150] sm:$0xff]
    %v4373 = vld [vmem:[#allocation13 + $0x158] sm:$0xff]
    %v4374 = vld [vmem:[#allocation13 + $0x160] sm:$0xff]
    %v4375 = vld [vmem:[#allocation13 + $0x168] sm:$0xff]
    %v4376 = vld [vmem:[#allocation13 + $0x170] sm:$0xff]
    %v4377 = vld [vmem:[#allocation13 + $0x178] sm:$0xff]
    %v4378 = vld [vmem:[#allocation13 + $0x180] sm:$0xff]
    %v4379 = vld [vmem:[#allocation13 + $0x188] sm:$0xff]
    %v4380 = vld [vmem:[#allocation13 + $0x190] sm:$0xff]
    %v4381 = vld [vmem:[#allocation13 + $0x198] sm:$0xff]
    %v4382 = vld [vmem:[#allocation13 + $0x1a0] sm:$0xff]
    %v4383 = vld [vmem:[#allocation13 + $0x1a8] sm:$0xff]
    %v4384 = vld [vmem:[#allocation13 + $0x1b0] sm:$0xff]
    %v4385 = vld [vmem:[#allocation13 + $0x1b8] sm:$0xff]
    %v4386 = vld [vmem:[#allocation13 + $0x1c0] sm:$0xff]
    %v4387 = vld [vmem:[#allocation13 + $0x1c8] sm:$0xff]
    %v4388 = vld [vmem:[#allocation13 + $0x1d0] sm:$0xff]
    %v4389 = vld [vmem:[#allocation13 + $0x1d8] sm:$0xff]
    %v4390 = vld [vmem:[#allocation13 + $0x1e0] sm:$0xff]
    %v4391 = vld [vmem:[#allocation13 + $0x1e8] sm:$0xff]
    %v4392 = vld [vmem:[#allocation13 + $0x1f0] sm:$0xff]
    %v4393 = vld [vmem:[#allocation13 + $0x1f8] sm:$0xff]
    %v4394 = vld [vmem:[#allocation15] sm:$0x1]
    %v4396 = vlaneseq
    %v4397 = vshrl.u32 %v4396, 7
    %v4398 = vsub.s32 0, %v4397
    %v4399 = vrot.slane %v4394, %v4398
    %4401 = vmatprep.subr.mxu0 0.0
    %4402 = vmatpush1.msra.mxu0 %v4330
    %4403 = vmatprep.subr.mxu0 0.0
    %4404 = vmatpush1.msra.mxu0 %v4331
    %4405 = vmatprep.subr.mxu0 0.0
    %4406 = vmatpush1.msra.mxu0 %v4332
    %4407 = vmatprep.subr.mxu0 0.0
    %4408 = vmatpush1.msra.mxu0 %v4333
    %4409 = vmatprep.subr.mxu0 0.0
    %4410 = vmatpush1.msra.mxu0 %v4334
    %4411 = vmatprep.subr.mxu0 0.0
    %4412 = vmatpush1.msra.mxu0 %v4335
    %4413 = vmatprep.subr.mxu0 0.0
    %4414 = vmatpush1.msra.mxu0 %v4336
    %4415 = vmatprep.subr.mxu0 0.0
    %4416 = vmatpush1.msra.mxu0 %v4337
    %4417 = vmatprep.subr.mxu0 0.0
    %4418 = vmatpush1.msra.mxu0 %v4338
    %4419 = vmatprep.subr.mxu0 0.0
    %4420 = vmatpush1.msra.mxu0 %v4339
    %4421 = vmatprep.subr.mxu0 0.0
    %4422 = vmatpush1.msra.mxu0 %v4340
    %4423 = vmatprep.subr.mxu0 0.0
    %4424 = vmatpush1.msra.mxu0 %v4341
    %4425 = vmatprep.subr.mxu0 0.0
    %4426 = vmatpush1.msra.mxu0 %v4342
    %4427 = vmatprep.subr.mxu0 0.0
    %4428 = vmatpush1.msra.mxu0 %v4343
    %4429 = vmatprep.subr.mxu0 0.0
    %4430 = vmatpush1.msra.mxu0 %v4344
    %4431 = vmatprep.subr.mxu0 0.0
    %4432 = vmatpush1.msra.mxu0 %v4345
    %4433 = vmatprep.subr.mxu0 0.0
    %4434 = vmatpush1.msra.mxu0 %v4346
    %4435 = vmatprep.subr.mxu0 0.0
    %4436 = vmatpush1.msra.mxu0 %v4347
    %4437 = vmatprep.subr.mxu0 0.0
    %4438 = vmatpush1.msra.mxu0 %v4348
    %4439 = vmatprep.subr.mxu0 0.0
    %4440 = vmatpush1.msra.mxu0 %v4349
    %4441 = vmatprep.subr.mxu0 0.0
    %4442 = vmatpush1.msra.mxu0 %v4350
    %4443 = vmatprep.subr.mxu0 0.0
    %4444 = vmatpush1.msra.mxu0 %v4351
    %4445 = vmatprep.subr.mxu0 0.0
    %4446 = vmatpush1.msra.mxu0 %v4352
    %4447 = vmatprep.subr.mxu0 0.0
    %4448 = vmatpush1.msra.mxu0 %v4353
    %4449 = vmatprep.subr.mxu0 0.0
    %4450 = vmatpush1.msra.mxu0 %v4354
    %4451 = vmatprep.subr.mxu0 0.0
    %4452 = vmatpush1.msra.mxu0 %v4355
    %4453 = vmatprep.subr.mxu0 0.0
    %4454 = vmatpush1.msra.mxu0 %v4356
    %4455 = vmatprep.subr.mxu0 0.0
    %4456 = vmatpush1.msra.mxu0 %v4357
    %4457 = vmatprep.subr.mxu0 0.0
    %4458 = vmatpush1.msra.mxu0 %v4358
    %4459 = vmatprep.subr.mxu0 0.0
    %4460 = vmatpush1.msra.mxu0 %v4359
    %4461 = vmatprep.subr.mxu0 0.0
    %4462 = vmatpush1.msra.mxu0 %v4360
    %4463 = vmatprep.subr.mxu0 0.0
    %4464 = vmatpush1.msra.mxu0 %v4361
    %4465 = vmatprep.mubr.f32.mxu0 %v4239
    %4466 = vmatmul.mubr.f32.gmra.mrb[0].mxu0 %v4224
    %v4467 = vpop.f32.mrb[0].mxu0
    %v4468 = vadd.f32 %v4399, %v4467
    %v4469 = vpop.f32.mrb[0].mxu0
    %4470 = vmatprep.mubr.f32.mxu0 %v4299
    %4471 = vmatmul.mubr.f32.gmra.mrb[0].mxu0 %v4284
    %v4472 = vpop.f32.mrb[0].mxu0
    %v4473 = vadd.f32 %v4399, %v4472
    %v4474 = vpop.f32.mrb[0].mxu0
    %4475 = vdwg.mxu0
    %4476 = vmatprep.subr.mxu0 0.0
    %4477 = vmatpush1.msra.mxu0 %v4362
    %4478 = vmatprep.subr.mxu0 0.0
    %4479 = vmatpush1.msra.mxu0 %v4363
    %4480 = vmatprep.subr.mxu0 0.0
    %4481 = vmatpush1.msra.mxu0 %v4364
    %4482 = vmatprep.subr.mxu0 0.0
    %4483 = vmatpush1.msra.mxu0 %v4365
    %4484 = vmatprep.subr.mxu0 0.0
    %4485 = vmatpush1.msra.mxu0 %v4366
    %4486 = vmatprep.subr.mxu0 0.0
    %4487 = vmatpush1.msra.mxu0 %v4367
    %4488 = vmatprep.subr.mxu0 0.0
    %4489 = vmatpush1.msra.mxu0 %v4368
    %4490 = vmatprep.subr.mxu0 0.0
    %4491 = vmatpush1.msra.mxu0 %v4369
    %4492 = vmatprep.subr.mxu0 0.0
    %4493 = vmatpush1.msra.mxu0 %v4370
    %4494 = vmatprep.subr.mxu0 0.0
    %4495 = vmatpush1.msra.mxu0 %v4371
    %4496 = vmatprep.subr.mxu0 0.0
    %4497 = vmatpush1.msra.mxu0 %v4372
    %4498 = vmatprep.subr.mxu0 0.0
    %4499 = vmatpush1.msra.mxu0 %v4373
    %4500 = vmatprep.subr.mxu0 0.0
    %4501 = vmatpush1.msra.mxu0 %v4374
    %4502 = vmatprep.subr.mxu0 0.0
    %4503 = vmatpush1.msra.mxu0 %v4375
    %4504 = vmatprep.subr.mxu0 0.0
    %4505 = vmatpush1.msra.mxu0 %v4376
    %4506 = vmatprep.subr.mxu0 0.0
    %4507 = vmatpush1.msra.mxu0 %v4377
    %4508 = vmatprep.subr.mxu0 0.0
    %4509 = vmatpush1.msra.mxu0 %v4378
    %4510 = vmatprep.subr.mxu0 0.0
    %4511 = vmatpush1.msra.mxu0 %v4379
    %4512 = vmatprep.subr.mxu0 0.0
    %4513 = vmatpush1.msra.mxu0 %v4380
    %4514 = vmatprep.subr.mxu0 0.0
    %4515 = vmatpush1.msra.mxu0 %v4381
    %4516 = vmatprep.subr.mxu0 0.0
    %4517 = vmatpush1.msra.mxu0 %v4382
    %4518 = vmatprep.subr.mxu0 0.0
    %4519 = vmatpush1.msra.mxu0 %v4383
    %4520 = vmatprep.subr.mxu0 0.0
    %4521 = vmatpush1.msra.mxu0 %v4384
    %4522 = vmatprep.subr.mxu0 0.0
    %4523 = vmatpush1.msra.mxu0 %v4385
    %4524 = vmatprep.subr.mxu0 0.0
    %4525 = vmatpush1.msra.mxu0 %v4386
    %4526 = vmatprep.subr.mxu0 0.0
    %4527 = vmatpush1.msra.mxu0 %v4387
    %4528 = vmatprep.subr.mxu0 0.0
    %4529 = vmatpush1.msra.mxu0 %v4388
    %4530 = vmatprep.subr.mxu0 0.0
    %4531 = vmatpush1.msra.mxu0 %v4389
    %4532 = vmatprep.subr.mxu0 0.0
    %4533 = vmatpush1.msra.mxu0 %v4390
    %4534 = vmatprep.subr.mxu0 0.0
    %4535 = vmatpush1.msra.mxu0 %v4391
    %4536 = vmatprep.subr.mxu0 0.0
    %4537 = vmatpush1.msra.mxu0 %v4392
    %4538 = vmatprep.subr.mxu0 0.0
    %4539 = vmatpush1.msra.mxu0 %v4393
    %4540 = vmatprep.mubr.f32.mxu0 %v4269
    %4541 = vmatmul.mubr.f32.gmra.mrb[0].mxu0 %v4254
    %v4542 = vpop.f32.mrb[0].mxu0
    %v4543 = vadd.f32 %v4468, %v4542
    %v4544 = vpop.f32.mrb[0].mxu0
    %4545 = vmatprep.mubr.f32.mxu0 %v4329
    %4546 = vmatmul.mubr.f32.gmra.mrb[0].mxu0 %v4314
    %v4547 = vpop.f32.mrb[0].mxu0
    %v4548 = vadd.f32 %v4473, %v4547
    %v4549 = vpop.f32.mrb[0].mxu0
    %4550 = vdwg.mxu0
    %4551 = vst [vmem:[#allocation16] sm:$0xff] %v4543
    %4552 = vst [vmem:[#allocation16 + $0x8] sm:$0xff] %v4548
    // Predicated region
    $region58: #{tpu_custom_call.1} parent=1 // pred_check
      _
    $region59: #{tpu_custom_call.1} parent=1 // pred_check_branch
      %4554 = sbr.rel (0) target = $region61
    $region60: #{tpu_custom_call.1} parent=1 // pred_region
      %s4556 = ssub.s32 256, 256
      %4557 = vsyncadd [#allocation6], %s4556
      %s4558 = sshll.u32 [#allocation16], 4
      %s4559 = int_to_ptr.vmem [resolvable:$true] %s4558
      %4564 = dma.vmem_to_hbm [thread:$0]  %s4559, 256, %s7, [#allocation6], 128, 128, 8
    $region61: #{tpu_custom_call.1} parent=1 // pred_fallthru
      _
    // Predicated region
    $region62: #{tpu_custom_call.1} parent=1 // pred_check
      _
    $region63: #{tpu_custom_call.1} parent=1 // pred_check_branch
      %4566 = sbr.rel (0) target = $region65
    $region64: #{tpu_custom_call.1} parent=1 // pred_region
      %4567 = dma.done [#allocation6], 256
    $region65: #{tpu_custom_call.1} parent=1 // pred_fallthru
      _
    %4568 = vsyncpa [#allocation5], 1
    %4569 = vsyncpa [#allocation8], 1
    %4570 = vsyncpa [#allocation11], 1
    %4571 = vsyncpa [#allocation14], 1
    %4572 = vsyncpa [#allocation6], 1

</llo_original>
